<compile_context>
chip_gen: v6e
topology: v6e:2x2x1
jax: 0.10.0
libtpu: 0.0.40
codegen_flags: <defaults>
</compile_context>

<pallas_src>
import jax
import jax.numpy as jnp
import numpy as np
from jax.experimental import pallas as pl
from jax.experimental.pallas import tpu as pltpu


# ----------------------------------------------------------------------------
# Fused kernel: (1,7)+(7,1) convs -> phase-space 3x3 conv + BN + ReLU,
# for one (batch, channel-group-of-4) block.  PixelShuffle is implicit: the
# kernel emits the sub-pixel phase maps; the wrapper interleaves them.
# ----------------------------------------------------------------------------
def _lrdu_fused_kernel(xp_ref, ones_ref, wfull_ref, m3_ref, sc_ref, off_ref,
                       o_ref, z_ref):
    # xp_ref   : (1, 1, 4, Lx)   flat zero-padded inputs, Lx=(H+7)*Wp, Wp=W+6
    # ones_ref : (1, Lx)         1.0 at data positions, 0.0 at padding
    # wfull_ref: (1, 4, F2, 56)  fused (1,7)o(7,1) weights + bias-indicator cols
    # m3_ref   : (1, QT, 9*QT)   phase-space 3x3 mixing matrices, QT = 4*F2
    # sc_ref   : (1, QT, 1)      folded BN scale  (per phase row)
    # off_ref  : (1, QT, 1)      folded BN offset (per phase row)
    # o_ref    : (1, 1, QT, SF)  phase-space output, SF = H*Wp
    # z_ref    : (QT, (H+4)*Wp)  scratch: phase maps framed by zero halos
    f32 = jnp.float32
    CG = xp_ref.shape[2]                       # 4 channels per group
    QT, SF = o_ref.shape[2], o_ref.shape[3]    # 4*F2, H*Wp
    F2 = QT // CG
    Lx = xp_ref.shape[3]
    Wp = (Lx - SF) // 7                        # padded row stride (W + 6)
    XB = 3 * Wp + 3                            # frame base in the x buffer
    ZB = 2 * Wp                                # frame base in the z scratch

    # Zero ONLY the halo regions of the scratch (interior fully overwritten).
    z_ref[:, :ZB] = jnp.zeros((QT, ZB), f32)
    z_ref[:, ZB + SF:] = jnp.zeros((QT, z_ref.shape[1] - ZB - SF), f32)

    # Validity-indicator rows (grid-invariant input).  They carry the (7,1)
    # conv's bias, which is truncated by its zero padding near the top/bottom
    # rows, and the unshifted row doubles as the data-position mask.
    ones_rows = [
        ones_ref[0, XB + (k2 - 3) * Wp:XB + (k2 - 3) * Wp + SF].reshape(1, SF)
        for k2 in range(7)
    ]
    ones0 = ones_rows[3]                       # 1.0 exactly at data positions

    # ---- stage 1: (1,7)+(7,1) grouped convs fused into one low-rank 7x7 conv,
    #      one MXU dot per channel; result stays in sub-pixel phase space -----
    for c in range(CG):
        rows = []
        for k2 in range(7):                    # H tap (dh = k2 - 3)
            base = XB + (k2 - 3) * Wp
            for k1 in range(7):                # W tap (dw = k1 - 3)
                s0 = base + (k1 - 3)
                rows.append(xp_ref[0, 0, c, s0:s0 + SF].reshape(1, SF))
        rows.extend(ones_rows)                 # 7 bias-indicator rows
        slab = jnp.concatenate(rows, axis=0)                      # (56, SF)
        ph = jnp.dot(wfull_ref[0, c], slab,
                     preferred_element_type=f32)                  # (F2, SF)
        # Mask junk lanes (W-pad columns) so stage 2's +/-1 column shifts see
        # the 3x3 conv's zero padding, then park in the halo'd scratch.
        z_ref[c * F2:(c + 1) * F2, ZB:ZB + SF] = ph * ones0

    # ---- stage 2: grouped 3x3 conv on the pixel-shuffled image, evaluated in
    #      phase space as one big MXU dot, then folded BN + ReLU --------------
    zrows = []
    for sh in (-1, 0, 1):
        for sw in (-1, 0, 1):
            s0 = ZB + sh * Wp + sw
            zrows.append(z_ref[:, s0:s0 + SF])
    zcat = jnp.concatenate(zrows, axis=0)                          # (9*QT, SF)
    acc = jnp.dot(m3_ref[0], zcat, preferred_element_type=f32)     # (QT, SF)
    res = jnp.maximum(acc * sc_ref[0] + off_ref[0], 0.0)
    o_ref[0, 0] = res.astype(o_ref.dtype)


# ----------------------------------------------------------------------------
# Wrapper
# ----------------------------------------------------------------------------
def lrdu_forward(x, params, factor):
    w1, b1, w2, b2, w3, b3, gamma, beta, rmean, rvar = params
    N, C, H, W = x.shape
    f = factor
    F1 = f * f // 2
    F2 = f * f
    assert C % 4 == 0, "LRDU requires in_c divisible by 4 (groups = in_c // 4)"
    G = C // 4
    QT = 4 * F2
    Wp = W + 6
    Lx = (H + 7) * Wp
    SF = H * Wp
    f32 = jnp.float32
    dt = x.dtype

    # ---- grid-invariant parameter prep (tiny, one time) ----
    w1r = w1.reshape(C, F1, 7).astype(f32)
    b1r = b1.reshape(C, F1).astype(f32)
    w2r = w2.reshape(C, F2, F1, 7).astype(f32)
    b2r = b2.reshape(C, F2).astype(f32)
    # Fused (7,1)o(1,7) kernel: Wc[c,q,k2,k1] = sum_m w2[c,q,m,k2] * w1[c,m,k1]
    wc = jnp.einsum('cqmk,cmj->cqkj', w2r, w1r).reshape(C, F2, 49)
    # Bias-indicator coefficients (b1 through the (7,1) taps; b2 on the k2=3 row)
    bw = jnp.einsum('cqmk,cm->cqk', w2r, b1r)
    bw = bw.at[:, :, 3].add(b2r)
    wfull = jnp.concatenate([wc, bw], axis=-1).reshape(G, 4, F2, 56)

    # Phase-space 3x3 mixing matrices: for each spatial shift (sh, sw) in
    # {-1,0,1}^2 a (QT, QT) matrix mapping input phase rows -> output phase rows.
    T = np.zeros((9, F2, F2, 3, 3), np.float32)
    for i in range(f):
        for j in range(f):
            qo = i * f + j
            for dp in (-1, 0, 1):
                for dq in (-1, 0, 1):
                    ii, jj = i + dp, j + dq
                    s = (ii // f + 1) * 3 + (jj // f + 1)
                    qi = (ii % f) * f + (jj % f)
                    T[s, qo, qi, dp + 1, dq + 1] += 1.0
    w3g = w3.astype(f32).reshape(G, 4, 4, 3, 3)
    m3 = jnp.einsum('sopab,gcdab->gscodp', jnp.asarray(T), w3g)
    m3 = m3.reshape(G, 9, QT, QT).transpose(0, 2, 1, 3).reshape(G, QT, 9 * QT)

    # Eval-mode BN folded into per-channel scale/offset, expanded to phase rows.
    # TODO(synk): train-mode batch statistics would need a global reduction.
    eps = 1e-5
    scale = (gamma / jnp.sqrt(rvar + eps)).astype(f32)
    offset = ((b3 - rmean) * scale + beta).astype(f32)
    sc_g = jnp.repeat(scale.reshape(G, 4), F2, axis=1).reshape(G, QT, 1)
    off_g = jnp.repeat(offset.reshape(G, 4), F2, axis=1).reshape(G, QT, 1)

    # ---- flat zero-padded input + validity map (layout plumbing only) ----
    xp = jnp.pad(x.astype(f32), ((0, 0), (0, 0), (3, 4), (3, 3)))
    xp = xp.reshape(N, G, 4, Lx)
    ones_flat = jnp.pad(jnp.ones((H, W), f32), ((3, 4), (3, 3))).reshape(1, Lx)

    flops = 2 * N * G * (4 * F2 * 56 * SF + QT * 9 * QT * SF)
    bytes_accessed = 4 * (N * C * Lx + N * G * QT * SF + Lx
                          + G * (4 * F2 * 56 + QT * 9 * QT + 2 * QT))

    fused = pl.pallas_call(
        _lrdu_fused_kernel,
        out_shape=jax.ShapeDtypeStruct((N, G, QT, SF), dt),
        grid_spec=pltpu.PrefetchScalarGridSpec(
            num_scalar_prefetch=0,
            # Weight-indexed axis outermost, batch innermost: per-group blocks
            # keep the same block index for N consecutive steps -> no re-DMA.
            grid=(G, N),
            in_specs=[
                pl.BlockSpec((1, 1, 4, Lx), lambda g, n: (n, g, 0, 0)),
                pl.BlockSpec((1, Lx), lambda g, n: (0, 0)),
                pl.BlockSpec((1, 4, F2, 56), lambda g, n: (g, 0, 0, 0)),
                pl.BlockSpec((1, QT, 9 * QT), lambda g, n: (g, 0, 0)),
                pl.BlockSpec((1, QT, 1), lambda g, n: (g, 0, 0)),
                pl.BlockSpec((1, QT, 1), lambda g, n: (g, 0, 0)),
            ],
            out_specs=pl.BlockSpec((1, 1, QT, SF), lambda g, n: (n, g, 0, 0)),
            scratch_shapes=[pltpu.VMEM((QT, (H + 4) * Wp), f32)],
        ),
        compiler_params=pltpu.CompilerParams(
            dimension_semantics=("parallel", "parallel"),
            vmem_limit_bytes=32 * 1024 * 1024),
        cost_estimate=pl.CostEstimate(flops=int(flops), transcendentals=0,
                                      bytes_accessed=int(bytes_accessed)),
    )
    out = fused(xp, ones_flat, wfull, m3, sc_g, off_g)       # (N, G, QT, SF)

    # Un-flatten + pixel-shuffle interleave (pure layout plumbing).
    out = out.reshape(N, G, 4, f, f, H, Wp)[..., :W]
    return out.transpose(0, 1, 2, 5, 3, 6, 4).reshape(N, C, H * f, W * f)


# ----------------------------------------------------------------------------
# Deterministic parameter init (matches the nn.Module's parameter shapes)
# ----------------------------------------------------------------------------
def lrdu_init_params(C, factor, key):
    f = factor
    F1 = f * f // 2
    F2 = f * f
    ks = jax.random.split(key, 6)
    w1 = 0.2 * jax.random.normal(ks[0], (F1 * C, 1, 1, 7), jnp.float32)
    b1 = 0.1 * jax.random.normal(ks[1], (F1 * C,), jnp.float32)
    w2 = 0.2 * jax.random.normal(ks[2], (F2 * C, F1, 7, 1), jnp.float32)
    b2 = 0.1 * jax.random.normal(ks[3], (F2 * C,), jnp.float32)
    w3 = 0.2 * jax.random.normal(ks[4], (C, 4, 3, 3), jnp.float32)
    b3 = 0.1 * jax.random.normal(ks[5], (C,), jnp.float32)
    gamma = 1.0 + 0.05 * jnp.arange(C, dtype=jnp.float32)
    beta = 0.02 * jnp.arange(C, dtype=jnp.float32)
    rmean = 0.01 * jnp.arange(C, dtype=jnp.float32)
    rvar = 1.0 + 0.1 * jnp.arange(C, dtype=jnp.float32)
    return (w1, b1, w2, b2, w3, b3, gamma, beta, rmean, rvar)


# ----------------------------------------------------------------------------
# Pure-JAX reference (lax.conv) for the correctness check
# ----------------------------------------------------------------------------
def lrdu_reference(x, params, factor):
    w1, b1, w2, b2, w3, b3, gamma, beta, rmean, rvar = params
    N, C, H, W = x.shape
    f = factor
    dn = ("NCHW", "OIHW", "NCHW")
    y = jax.lax.conv_general_dilated(x, w1, (1, 1), [(0, 0), (3, 3)],
                                     dimension_numbers=dn,
                                     feature_group_count=C)
    y = y + b1[None, :, None, None]
    y = jax.lax.conv_general_dilated(y, w2, (1, 1), [(3, 3), (0, 0)],
                                     dimension_numbers=dn,
                                     feature_group_count=C)
    y = y + b2[None, :, None, None]
    y = y.reshape(N, C, f, f, H, W).transpose(0, 1, 4, 2, 5, 3)
    y = y.reshape(N, C, H * f, W * f)
    y = jax.lax.conv_general_dilated(y, w3, (1, 1), [(1, 1), (1, 1)],
                                     dimension_numbers=dn,
                                     feature_group_count=C // 4)
    y = y + b3[None, :, None, None]
    eps = 1e-5
    y = gamma[None, :, None, None] * (y - rmean[None, :, None, None]) \
        / jnp.sqrt(rvar + eps)[None, :, None, None] + beta[None, :, None, None]
    return jnp.maximum(y, 0.0)


if __name__ == "__main__":
    N, C, H, W = 2, 8, 16, 16      # in_c = 8 (divisible by 4), factor = 2
    factor = 2

    key = jax.random.PRNGKey(0)
    kx, kp = jax.random.split(key)
    x = jax.random.normal(kx, (N, C, H, W), jnp.float32)
    params = lrdu_init_params(C, factor, kp)

    out = jax.block_until_ready(lrdu_forward(x, params, factor))
    ref = jax.block_until_ready(lrdu_reference(x, params, factor))
    # The conv contractions now run on the MXU; under default (bf16-pass)
    # matmul precision the error vs. the f32 reference is ~1e-3 relative, so
    # compare with a small safety margin.
    np.testing.assert_allclose(np.asarray(out), np.asarray(ref),
                               rtol=2e-2, atol=2e-2)
    print("KERNEL_OK")
</pallas_src>

<mosaic_0001>
module attributes {stable_mosaic.version = 11 : i64} {
  func.func @_lrdu_fused_kernel(%arg0: i32, %arg1: i32, %arg2: memref<1x1x4x506xf32, #tpu.memory_space<vmem>>, %arg3: memref<1x506xf32, #tpu.memory_space<vmem>>, %arg4: memref<1x4x4x56xf32, #tpu.memory_space<vmem>>, %arg5: memref<1x16x144xf32, #tpu.memory_space<vmem>>, %arg6: memref<1x16x1xf32, #tpu.memory_space<vmem>>, %arg7: memref<1x16x1xf32, #tpu.memory_space<vmem>>, %arg8: memref<1x1x16x352xf32, #tpu.memory_space<vmem>>, %arg9: memref<16x440xf32, #tpu.memory_space<vmem>>) attributes {dimension_semantics = [#tpu.dimension_semantics<parallel>, #tpu.dimension_semantics<parallel>], iteration_bounds = array<i64: 2, 2>, scalar_prefetch = 0 : i64, scratch_operands = 1 : i64, tpu.core_type = #tpu.core_type<tc>, window_params = [{transform_indices = @transform_0, window_bounds = array<i64: 1, 1, 4, 506>}, {pipeline_mode = #tpu.pipeline_mode<synchronous>, transform_indices = @transform_1, window_bounds = array<i64: 1, 506>}, {transform_indices = @transform_2, window_bounds = array<i64: 1, 4, 4, 56>}, {transform_indices = @transform_3, window_bounds = array<i64: 1, 16, 144>}, {transform_indices = @transform_4, window_bounds = array<i64: 1, 16, 1>}, {transform_indices = @transform_5, window_bounds = array<i64: 1, 16, 1>}, {transform_indices = @transform_6, window_bounds = array<i64: 1, 1, 16, 352>}]} {
    %cst = arith.constant 0.000000e+00 : f32
    %0 = vector.broadcast %cst : f32 to vector<16x44xf32>
    %c0 = arith.constant 0 : index
    %c0_0 = arith.constant 0 : index
    %1 = vector.load %arg9[%c0, %c0_0] : memref<16x440xf32, #tpu.memory_space<vmem>>, vector<16x44xf32>
    tpu.vector_store %arg9[%c0, %c0_0], %0 {strides = array<i32>} : memref<16x440xf32, #tpu.memory_space<vmem>>, vector<16x44xf32>,
    %cst_1 = arith.constant 0.000000e+00 : f32
    %2 = vector.broadcast %cst_1 : f32 to vector<16x44xf32>
    %c0_2 = arith.constant 0 : index
    %c396 = arith.constant 396 : index
    %3 = vector.load %arg9[%c0_2, %c396] : memref<16x440xf32, #tpu.memory_space<vmem>>, vector<16x44xf32>
    tpu.vector_store %arg9[%c0_2, %c396], %2 {strides = array<i32>} : memref<16x440xf32, #tpu.memory_space<vmem>>, vector<16x44xf32>,
    %c0_3 = arith.constant 0 : index
    %c3 = arith.constant 3 : index
    %4 = vector.load %arg3[%c0_3, %c3] : memref<1x506xf32, #tpu.memory_space<vmem>>, vector<1x352xf32>
    %5 = vector.shape_cast %4 : vector<1x352xf32> to vector<352xf32>
    %6 = vector.shape_cast %5 : vector<352xf32> to vector<1x352xf32>
    %c0_4 = arith.constant 0 : index
    %c25 = arith.constant 25 : index
    %7 = vector.load %arg3[%c0_4, %c25] : memref<1x506xf32, #tpu.memory_space<vmem>>, vector<1x352xf32>
    %8 = vector.shape_cast %7 : vector<1x352xf32> to vector<352xf32>
    %9 = vector.shape_cast %8 : vector<352xf32> to vector<1x352xf32>
    %c0_5 = arith.constant 0 : index
    %c47 = arith.constant 47 : index
    %10 = vector.load %arg3[%c0_5, %c47] : memref<1x506xf32, #tpu.memory_space<vmem>>, vector<1x352xf32>
    %11 = vector.shape_cast %10 : vector<1x352xf32> to vector<352xf32>
    %12 = vector.shape_cast %11 : vector<352xf32> to vector<1x352xf32>
    %c0_6 = arith.constant 0 : index
    %c69 = arith.constant 69 : index
    %13 = vector.load %arg3[%c0_6, %c69] : memref<1x506xf32, #tpu.memory_space<vmem>>, vector<1x352xf32>
    %14 = vector.shape_cast %13 : vector<1x352xf32> to vector<352xf32>
    %15 = vector.shape_cast %14 : vector<352xf32> to vector<1x352xf32>
    %c0_7 = arith.constant 0 : index
    %c91 = arith.constant 91 : index
    %16 = vector.load %arg3[%c0_7, %c91] : memref<1x506xf32, #tpu.memory_space<vmem>>, vector<1x352xf32>
    %17 = vector.shape_cast %16 : vector<1x352xf32> to vector<352xf32>
    %18 = vector.shape_cast %17 : vector<352xf32> to vector<1x352xf32>
    %c0_8 = arith.constant 0 : index
    %c113 = arith.constant 113 : index
    %19 = vector.load %arg3[%c0_8, %c113] : memref<1x506xf32, #tpu.memory_space<vmem>>, vector<1x352xf32>
    %20 = vector.shape_cast %19 : vector<1x352xf32> to vector<352xf32>
    %21 = vector.shape_cast %20 : vector<352xf32> to vector<1x352xf32>
    %c0_9 = arith.constant 0 : index
    %c135 = arith.constant 135 : index
    %22 = vector.load %arg3[%c0_9, %c135] : memref<1x506xf32, #tpu.memory_space<vmem>>, vector<1x352xf32>
    %23 = vector.shape_cast %22 : vector<1x352xf32> to vector<352xf32>
    %24 = vector.shape_cast %23 : vector<352xf32> to vector<1x352xf32>
    %c0_10 = arith.constant 0 : index
    %c0_11 = arith.constant 0 : index
    %c0_12 = arith.constant 0 : index
    %c0_13 = arith.constant 0 : index
    %25 = vector.load %arg2[%c0_10, %c0_11, %c0_12, %c0_13] : memref<1x1x4x506xf32, #tpu.memory_space<vmem>>, vector<1x1x1x352xf32>
    %26 = vector.shape_cast %25 : vector<1x1x1x352xf32> to vector<352xf32>
    %27 = vector.shape_cast %26 : vector<352xf32> to vector<1x352xf32>
    %c0_14 = arith.constant 0 : index
    %c0_15 = arith.constant 0 : index
    %c0_16 = arith.constant 0 : index
    %c1 = arith.constant 1 : index
    %28 = vector.load %arg2[%c0_14, %c0_15, %c0_16, %c1] : memref<1x1x4x506xf32, #tpu.memory_space<vmem>>, vector<1x1x1x352xf32>
    %29 = vector.shape_cast %28 : vector<1x1x1x352xf32> to vector<352xf32>
    %30 = vector.shape_cast %29 : vector<352xf32> to vector<1x352xf32>
    %c0_17 = arith.constant 0 : index
    %c0_18 = arith.constant 0 : index
    %c0_19 = arith.constant 0 : index
    %c2 = arith.constant 2 : index
    %31 = vector.load %arg2[%c0_17, %c0_18, %c0_19, %c2] : memref<1x1x4x506xf32, #tpu.memory_space<vmem>>, vector<1x1x1x352xf32>
    %32 = vector.shape_cast %31 : vector<1x1x1x352xf32> to vector<352xf32>
    %33 = vector.shape_cast %32 : vector<352xf32> to vector<1x352xf32>
    %c0_20 = arith.constant 0 : index
    %c0_21 = arith.constant 0 : index
    %c0_22 = arith.constant 0 : index
    %c3_23 = arith.constant 3 : index
    %34 = vector.load %arg2[%c0_20, %c0_21, %c0_22, %c3_23] : memref<1x1x4x506xf32, #tpu.memory_space<vmem>>, vector<1x1x1x352xf32>
    %35 = vector.shape_cast %34 : vector<1x1x1x352xf32> to vector<352xf32>
    %36 = vector.shape_cast %35 : vector<352xf32> to vector<1x352xf32>
    %c0_24 = arith.constant 0 : index
    %c0_25 = arith.constant 0 : index
    %c0_26 = arith.constant 0 : index
    %c4 = arith.constant 4 : index
    %37 = vector.load %arg2[%c0_24, %c0_25, %c0_26, %c4] : memref<1x1x4x506xf32, #tpu.memory_space<vmem>>, vector<1x1x1x352xf32>
    %38 = vector.shape_cast %37 : vector<1x1x1x352xf32> to vector<352xf32>
    %39 = vector.shape_cast %38 : vector<352xf32> to vector<1x352xf32>
    %c0_27 = arith.constant 0 : index
    %c0_28 = arith.constant 0 : index
    %c0_29 = arith.constant 0 : index
    %c5 = arith.constant 5 : index
    %40 = vector.load %arg2[%c0_27, %c0_28, %c0_29, %c5] : memref<1x1x4x506xf32, #tpu.memory_space<vmem>>, vector<1x1x1x352xf32>
    %41 = vector.shape_cast %40 : vector<1x1x1x352xf32> to vector<352xf32>
    %42 = vector.shape_cast %41 : vector<352xf32> to vector<1x352xf32>
    %c0_30 = arith.constant 0 : index
    %c0_31 = arith.constant 0 : index
    %c0_32 = arith.constant 0 : index
    %c6 = arith.constant 6 : index
    %43 = vector.load %arg2[%c0_30, %c0_31, %c0_32, %c6] : memref<1x1x4x506xf32, #tpu.memory_space<vmem>>, vector<1x1x1x352xf32>
    %44 = vector.shape_cast %43 : vector<1x1x1x352xf32> to vector<352xf32>
    %45 = vector.shape_cast %44 : vector<352xf32> to vector<1x352xf32>
    %c0_33 = arith.constant 0 : index
    %c0_34 = arith.constant 0 : index
    %c0_35 = arith.constant 0 : index
    %c22 = arith.constant 22 : index
    %46 = vector.load %arg2[%c0_33, %c0_34, %c0_35, %c22] : memref<1x1x4x506xf32, #tpu.memory_space<vmem>>, vector<1x1x1x352xf32>
    %47 = vector.shape_cast %46 : vector<1x1x1x352xf32> to vector<352xf32>
    %48 = vector.shape_cast %47 : vector<352xf32> to vector<1x352xf32>
    %c0_36 = arith.constant 0 : index
    %c0_37 = arith.constant 0 : index
    %c0_38 = arith.constant 0 : index
    %c23 = arith.constant 23 : index
    %49 = vector.load %arg2[%c0_36, %c0_37, %c0_38, %c23] : memref<1x1x4x506xf32, #tpu.memory_space<vmem>>, vector<1x1x1x352xf32>
    %50 = vector.shape_cast %49 : vector<1x1x1x352xf32> to vector<352xf32>
    %51 = vector.shape_cast %50 : vector<352xf32> to vector<1x352xf32>
    %c0_39 = arith.constant 0 : index
    %c0_40 = arith.constant 0 : index
    %c0_41 = arith.constant 0 : index
    %c24 = arith.constant 24 : index
    %52 = vector.load %arg2[%c0_39, %c0_40, %c0_41, %c24] : memref<1x1x4x506xf32, #tpu.memory_space<vmem>>, vector<1x1x1x352xf32>
    %53 = vector.shape_cast %52 : vector<1x1x1x352xf32> to vector<352xf32>
    %54 = vector.shape_cast %53 : vector<352xf32> to vector<1x352xf32>
    %c0_42 = arith.constant 0 : index
    %c0_43 = arith.constant 0 : index
    %c0_44 = arith.constant 0 : index
    %c25_45 = arith.constant 25 : index
    %55 = vector.load %arg2[%c0_42, %c0_43, %c0_44, %c25_45] : memref<1x1x4x506xf32, #tpu.memory_space<vmem>>, vector<1x1x1x352xf32>
    %56 = vector.shape_cast %55 : vector<1x1x1x352xf32> to vector<352xf32>
    %57 = vector.shape_cast %56 : vector<352xf32> to vector<1x352xf32>
    %c0_46 = arith.constant 0 : index
    %c0_47 = arith.constant 0 : index
    %c0_48 = arith.constant 0 : index
    %c26 = arith.constant 26 : index
    %58 = vector.load %arg2[%c0_46, %c0_47, %c0_48, %c26] : memref<1x1x4x506xf32, #tpu.memory_space<vmem>>, vector<1x1x1x352xf32>
    %59 = vector.shape_cast %58 : vector<1x1x1x352xf32> to vector<352xf32>
    %60 = vector.shape_cast %59 : vector<352xf32> to vector<1x352xf32>
    %c0_49 = arith.constant 0 : index
    %c0_50 = arith.constant 0 : index
    %c0_51 = arith.constant 0 : index
    %c27 = arith.constant 27 : index
    %61 = vector.load %arg2[%c0_49, %c0_50, %c0_51, %c27] : memref<1x1x4x506xf32, #tpu.memory_space<vmem>>, vector<1x1x1x352xf32>
    %62 = vector.shape_cast %61 : vector<1x1x1x352xf32> to vector<352xf32>
    %63 = vector.shape_cast %62 : vector<352xf32> to vector<1x352xf32>
    %c0_52 = arith.constant 0 : index
    %c0_53 = arith.constant 0 : index
    %c0_54 = arith.constant 0 : index
    %c28 = arith.constant 28 : index
    %64 = vector.load %arg2[%c0_52, %c0_53, %c0_54, %c28] : memref<1x1x4x506xf32, #tpu.memory_space<vmem>>, vector<1x1x1x352xf32>
    %65 = vector.shape_cast %64 : vector<1x1x1x352xf32> to vector<352xf32>
    %66 = vector.shape_cast %65 : vector<352xf32> to vector<1x352xf32>
    %c0_55 = arith.constant 0 : index
    %c0_56 = arith.constant 0 : index
    %c0_57 = arith.constant 0 : index
    %c44 = arith.constant 44 : index
    %67 = vector.load %arg2[%c0_55, %c0_56, %c0_57, %c44] : memref<1x1x4x506xf32, #tpu.memory_space<vmem>>, vector<1x1x1x352xf32>
    %68 = vector.shape_cast %67 : vector<1x1x1x352xf32> to vector<352xf32>
    %69 = vector.shape_cast %68 : vector<352xf32> to vector<1x352xf32>
    %c0_58 = arith.constant 0 : index
    %c0_59 = arith.constant 0 : index
    %c0_60 = arith.constant 0 : index
    %c45 = arith.constant 45 : index
    %70 = vector.load %arg2[%c0_58, %c0_59, %c0_60, %c45] : memref<1x1x4x506xf32, #tpu.memory_space<vmem>>, vector<1x1x1x352xf32>
    %71 = vector.shape_cast %70 : vector<1x1x1x352xf32> to vector<352xf32>
    %72 = vector.shape_cast %71 : vector<352xf32> to vector<1x352xf32>
    %c0_61 = arith.constant 0 : index
    %c0_62 = arith.constant 0 : index
    %c0_63 = arith.constant 0 : index
    %c46 = arith.constant 46 : index
    %73 = vector.load %arg2[%c0_61, %c0_62, %c0_63, %c46] : memref<1x1x4x506xf32, #tpu.memory_space<vmem>>, vector<1x1x1x352xf32>
    %74 = vector.shape_cast %73 : vector<1x1x1x352xf32> to vector<352xf32>
    %75 = vector.shape_cast %74 : vector<352xf32> to vector<1x352xf32>
    %c0_64 = arith.constant 0 : index
    %c0_65 = arith.constant 0 : index
    %c0_66 = arith.constant 0 : index
    %c47_67 = arith.constant 47 : index
    %76 = vector.load %arg2[%c0_64, %c0_65, %c0_66, %c47_67] : memref<1x1x4x506xf32, #tpu.memory_space<vmem>>, vector<1x1x1x352xf32>
    %77 = vector.shape_cast %76 : vector<1x1x1x352xf32> to vector<352xf32>
    %78 = vector.shape_cast %77 : vector<352xf32> to vector<1x352xf32>
    %c0_68 = arith.constant 0 : index
    %c0_69 = arith.constant 0 : index
    %c0_70 = arith.constant 0 : index
    %c48 = arith.constant 48 : index
    %79 = vector.load %arg2[%c0_68, %c0_69, %c0_70, %c48] : memref<1x1x4x506xf32, #tpu.memory_space<vmem>>, vector<1x1x1x352xf32>
    %80 = vector.shape_cast %79 : vector<1x1x1x352xf32> to vector<352xf32>
    %81 = vector.shape_cast %80 : vector<352xf32> to vector<1x352xf32>
    %c0_71 = arith.constant 0 : index
    %c0_72 = arith.constant 0 : index
    %c0_73 = arith.constant 0 : index
    %c49 = arith.constant 49 : index
    %82 = vector.load %arg2[%c0_71, %c0_72, %c0_73, %c49] : memref<1x1x4x506xf32, #tpu.memory_space<vmem>>, vector<1x1x1x352xf32>
    %83 = vector.shape_cast %82 : vector<1x1x1x352xf32> to vector<352xf32>
    %84 = vector.shape_cast %83 : vector<352xf32> to vector<1x352xf32>
    %c0_74 = arith.constant 0 : index
    %c0_75 = arith.constant 0 : index
    %c0_76 = arith.constant 0 : index
    %c50 = arith.constant 50 : index
    %85 = vector.load %arg2[%c0_74, %c0_75, %c0_76, %c50] : memref<1x1x4x506xf32, #tpu.memory_space<vmem>>, vector<1x1x1x352xf32>
    %86 = vector.shape_cast %85 : vector<1x1x1x352xf32> to vector<352xf32>
    %87 = vector.shape_cast %86 : vector<352xf32> to vector<1x352xf32>
    %c0_77 = arith.constant 0 : index
    %c0_78 = arith.constant 0 : index
    %c0_79 = arith.constant 0 : index
    %c66 = arith.constant 66 : index
    %88 = vector.load %arg2[%c0_77, %c0_78, %c0_79, %c66] : memref<1x1x4x506xf32, #tpu.memory_space<vmem>>, vector<1x1x1x352xf32>
    %89 = vector.shape_cast %88 : vector<1x1x1x352xf32> to vector<352xf32>
    %90 = vector.shape_cast %89 : vector<352xf32> to vector<1x352xf32>
    %c0_80 = arith.constant 0 : index
    %c0_81 = arith.constant 0 : index
    %c0_82 = arith.constant 0 : index
    %c67 = arith.constant 67 : index
    %91 = vector.load %arg2[%c0_80, %c0_81, %c0_82, %c67] : memref<1x1x4x506xf32, #tpu.memory_space<vmem>>, vector<1x1x1x352xf32>
    %92 = vector.shape_cast %91 : vector<1x1x1x352xf32> to vector<352xf32>
    %93 = vector.shape_cast %92 : vector<352xf32> to vector<1x352xf32>
    %c0_83 = arith.constant 0 : index
    %c0_84 = arith.constant 0 : index
    %c0_85 = arith.constant 0 : index
    %c68 = arith.constant 68 : index
    %94 = vector.load %arg2[%c0_83, %c0_84, %c0_85, %c68] : memref<1x1x4x506xf32, #tpu.memory_space<vmem>>, vector<1x1x1x352xf32>
    %95 = vector.shape_cast %94 : vector<1x1x1x352xf32> to vector<352xf32>
    %96 = vector.shape_cast %95 : vector<352xf32> to vector<1x352xf32>
    %c0_86 = arith.constant 0 : index
    %c0_87 = arith.constant 0 : index
    %c0_88 = arith.constant 0 : index
    %c69_89 = arith.constant 69 : index
    %97 = vector.load %arg2[%c0_86, %c0_87, %c0_88, %c69_89] : memref<1x1x4x506xf32, #tpu.memory_space<vmem>>, vector<1x1x1x352xf32>
    %98 = vector.shape_cast %97 : vector<1x1x1x352xf32> to vector<352xf32>
    %99 = vector.shape_cast %98 : vector<352xf32> to vector<1x352xf32>
    %c0_90 = arith.constant 0 : index
    %c0_91 = arith.constant 0 : index
    %c0_92 = arith.constant 0 : index
    %c70 = arith.constant 70 : index
    %100 = vector.load %arg2[%c0_90, %c0_91, %c0_92, %c70] : memref<1x1x4x506xf32, #tpu.memory_space<vmem>>, vector<1x1x1x352xf32>
    %101 = vector.shape_cast %100 : vector<1x1x1x352xf32> to vector<352xf32>
    %102 = vector.shape_cast %101 : vector<352xf32> to vector<1x352xf32>
    %c0_93 = arith.constant 0 : index
    %c0_94 = arith.constant 0 : index
    %c0_95 = arith.constant 0 : index
    %c71 = arith.constant 71 : index
    %103 = vector.load %arg2[%c0_93, %c0_94, %c0_95, %c71] : memref<1x1x4x506xf32, #tpu.memory_space<vmem>>, vector<1x1x1x352xf32>
    %104 = vector.shape_cast %103 : vector<1x1x1x352xf32> to vector<352xf32>
    %105 = vector.shape_cast %104 : vector<352xf32> to vector<1x352xf32>
    %c0_96 = arith.constant 0 : index
    %c0_97 = arith.constant 0 : index
    %c0_98 = arith.constant 0 : index
    %c72 = arith.constant 72 : index
    %106 = vector.load %arg2[%c0_96, %c0_97, %c0_98, %c72] : memref<1x1x4x506xf32, #tpu.memory_space<vmem>>, vector<1x1x1x352xf32>
    %107 = vector.shape_cast %106 : vector<1x1x1x352xf32> to vector<352xf32>
    %108 = vector.shape_cast %107 : vector<352xf32> to vector<1x352xf32>
    %c0_99 = arith.constant 0 : index
    %c0_100 = arith.constant 0 : index
    %c0_101 = arith.constant 0 : index
    %c88 = arith.constant 88 : index
    %109 = vector.load %arg2[%c0_99, %c0_100, %c0_101, %c88] : memref<1x1x4x506xf32, #tpu.memory_space<vmem>>, vector<1x1x1x352xf32>
    %110 = vector.shape_cast %109 : vector<1x1x1x352xf32> to vector<352xf32>
    %111 = vector.shape_cast %110 : vector<352xf32> to vector<1x352xf32>
    %c0_102 = arith.constant 0 : index
    %c0_103 = arith.constant 0 : index
    %c0_104 = arith.constant 0 : index
    %c89 = arith.constant 89 : index
    %112 = vector.load %arg2[%c0_102, %c0_103, %c0_104, %c89] : memref<1x1x4x506xf32, #tpu.memory_space<vmem>>, vector<1x1x1x352xf32>
    %113 = vector.shape_cast %112 : vector<1x1x1x352xf32> to vector<352xf32>
    %114 = vector.shape_cast %113 : vector<352xf32> to vector<1x352xf32>
    %c0_105 = arith.constant 0 : index
    %c0_106 = arith.constant 0 : index
    %c0_107 = arith.constant 0 : index
    %c90 = arith.constant 90 : index
    %115 = vector.load %arg2[%c0_105, %c0_106, %c0_107, %c90] : memref<1x1x4x506xf32, #tpu.memory_space<vmem>>, vector<1x1x1x352xf32>
    %116 = vector.shape_cast %115 : vector<1x1x1x352xf32> to vector<352xf32>
    %117 = vector.shape_cast %116 : vector<352xf32> to vector<1x352xf32>
    %c0_108 = arith.constant 0 : index
    %c0_109 = arith.constant 0 : index
    %c0_110 = arith.constant 0 : index
    %c91_111 = arith.constant 91 : index
    %118 = vector.load %arg2[%c0_108, %c0_109, %c0_110, %c91_111] : memref<1x1x4x506xf32, #tpu.memory_space<vmem>>, vector<1x1x1x352xf32>
    %119 = vector.shape_cast %118 : vector<1x1x1x352xf32> to vector<352xf32>
    %120 = vector.shape_cast %119 : vector<352xf32> to vector<1x352xf32>
    %c0_112 = arith.constant 0 : index
    %c0_113 = arith.constant 0 : index
    %c0_114 = arith.constant 0 : index
    %c92 = arith.constant 92 : index
    %121 = vector.load %arg2[%c0_112, %c0_113, %c0_114, %c92] : memref<1x1x4x506xf32, #tpu.memory_space<vmem>>, vector<1x1x1x352xf32>
    %122 = vector.shape_cast %121 : vector<1x1x1x352xf32> to vector<352xf32>
    %123 = vector.shape_cast %122 : vector<352xf32> to vector<1x352xf32>
    %c0_115 = arith.constant 0 : index
    %c0_116 = arith.constant 0 : index
    %c0_117 = arith.constant 0 : index
    %c93 = arith.constant 93 : index
    %124 = vector.load %arg2[%c0_115, %c0_116, %c0_117, %c93] : memref<1x1x4x506xf32, #tpu.memory_space<vmem>>, vector<1x1x1x352xf32>
    %125 = vector.shape_cast %124 : vector<1x1x1x352xf32> to vector<352xf32>
    %126 = vector.shape_cast %125 : vector<352xf32> to vector<1x352xf32>
    %c0_118 = arith.constant 0 : index
    %c0_119 = arith.constant 0 : index
    %c0_120 = arith.constant 0 : index
    %c94 = arith.constant 94 : index
    %127 = vector.load %arg2[%c0_118, %c0_119, %c0_120, %c94] : memref<1x1x4x506xf32, #tpu.memory_space<vmem>>, vector<1x1x1x352xf32>
    %128 = vector.shape_cast %127 : vector<1x1x1x352xf32> to vector<352xf32>
    %129 = vector.shape_cast %128 : vector<352xf32> to vector<1x352xf32>
    %c0_121 = arith.constant 0 : index
    %c0_122 = arith.constant 0 : index
    %c0_123 = arith.constant 0 : index
    %c110 = arith.constant 110 : index
    %130 = vector.load %arg2[%c0_121, %c0_122, %c0_123, %c110] : memref<1x1x4x506xf32, #tpu.memory_space<vmem>>, vector<1x1x1x352xf32>
    %131 = vector.shape_cast %130 : vector<1x1x1x352xf32> to vector<352xf32>
    %132 = vector.shape_cast %131 : vector<352xf32> to vector<1x352xf32>
    %c0_124 = arith.constant 0 : index
    %c0_125 = arith.constant 0 : index
    %c0_126 = arith.constant 0 : index
    %c111 = arith.constant 111 : index
    %133 = vector.load %arg2[%c0_124, %c0_125, %c0_126, %c111] : memref<1x1x4x506xf32, #tpu.memory_space<vmem>>, vector<1x1x1x352xf32>
    %134 = vector.shape_cast %133 : vector<1x1x1x352xf32> to vector<352xf32>
    %135 = vector.shape_cast %134 : vector<352xf32> to vector<1x352xf32>
    %c0_127 = arith.constant 0 : index
    %c0_128 = arith.constant 0 : index
    %c0_129 = arith.constant 0 : index
    %c112 = arith.constant 112 : index
    %136 = vector.load %arg2[%c0_127, %c0_128, %c0_129, %c112] : memref<1x1x4x506xf32, #tpu.memory_space<vmem>>, vector<1x1x1x352xf32>
    %137 = vector.shape_cast %136 : vector<1x1x1x352xf32> to vector<352xf32>
    %138 = vector.shape_cast %137 : vector<352xf32> to vector<1x352xf32>
    %c0_130 = arith.constant 0 : index
    %c0_131 = arith.constant 0 : index
    %c0_132 = arith.constant 0 : index
    %c113_133 = arith.constant 113 : index
    %139 = vector.load %arg2[%c0_130, %c0_131, %c0_132, %c113_133] : memref<1x1x4x506xf32, #tpu.memory_space<vmem>>, vector<1x1x1x352xf32>
    %140 = vector.shape_cast %139 : vector<1x1x1x352xf32> to vector<352xf32>
    %141 = vector.shape_cast %140 : vector<352xf32> to vector<1x352xf32>
    %c0_134 = arith.constant 0 : index
    %c0_135 = arith.constant 0 : index
    %c0_136 = arith.constant 0 : index
    %c114 = arith.constant 114 : index
    %142 = vector.load %arg2[%c0_134, %c0_135, %c0_136, %c114] : memref<1x1x4x506xf32, #tpu.memory_space<vmem>>, vector<1x1x1x352xf32>
    %143 = vector.shape_cast %142 : vector<1x1x1x352xf32> to vector<352xf32>
    %144 = vector.shape_cast %143 : vector<352xf32> to vector<1x352xf32>
    %c0_137 = arith.constant 0 : index
    %c0_138 = arith.constant 0 : index
    %c0_139 = arith.constant 0 : index
    %c115 = arith.constant 115 : index
    %145 = vector.load %arg2[%c0_137, %c0_138, %c0_139, %c115] : memref<1x1x4x506xf32, #tpu.memory_space<vmem>>, vector<1x1x1x352xf32>
    %146 = vector.shape_cast %145 : vector<1x1x1x352xf32> to vector<352xf32>
    %147 = vector.shape_cast %146 : vector<352xf32> to vector<1x352xf32>
    %c0_140 = arith.constant 0 : index
    %c0_141 = arith.constant 0 : index
    %c0_142 = arith.constant 0 : index
    %c116 = arith.constant 116 : index
    %148 = vector.load %arg2[%c0_140, %c0_141, %c0_142, %c116] : memref<1x1x4x506xf32, #tpu.memory_space<vmem>>, vector<1x1x1x352xf32>
    %149 = vector.shape_cast %148 : vector<1x1x1x352xf32> to vector<352xf32>
    %150 = vector.shape_cast %149 : vector<352xf32> to vector<1x352xf32>
    %c0_143 = arith.constant 0 : index
    %c0_144 = arith.constant 0 : index
    %c0_145 = arith.constant 0 : index
    %c132 = arith.constant 132 : index
    %151 = vector.load %arg2[%c0_143, %c0_144, %c0_145, %c132] : memref<1x1x4x506xf32, #tpu.memory_space<vmem>>, vector<1x1x1x352xf32>
    %152 = vector.shape_cast %151 : vector<1x1x1x352xf32> to vector<352xf32>
    %153 = vector.shape_cast %152 : vector<352xf32> to vector<1x352xf32>
    %c0_146 = arith.constant 0 : index
    %c0_147 = arith.constant 0 : index
    %c0_148 = arith.constant 0 : index
    %c133 = arith.constant 133 : index
    %154 = vector.load %arg2[%c0_146, %c0_147, %c0_148, %c133] : memref<1x1x4x506xf32, #tpu.memory_space<vmem>>, vector<1x1x1x352xf32>
    %155 = vector.shape_cast %154 : vector<1x1x1x352xf32> to vector<352xf32>
    %156 = vector.shape_cast %155 : vector<352xf32> to vector<1x352xf32>
    %c0_149 = arith.constant 0 : index
    %c0_150 = arith.constant 0 : index
    %c0_151 = arith.constant 0 : index
    %c134 = arith.constant 134 : index
    %157 = vector.load %arg2[%c0_149, %c0_150, %c0_151, %c134] : memref<1x1x4x506xf32, #tpu.memory_space<vmem>>, vector<1x1x1x352xf32>
    %158 = vector.shape_cast %157 : vector<1x1x1x352xf32> to vector<352xf32>
    %159 = vector.shape_cast %158 : vector<352xf32> to vector<1x352xf32>
    %c0_152 = arith.constant 0 : index
    %c0_153 = arith.constant 0 : index
    %c0_154 = arith.constant 0 : index
    %c135_155 = arith.constant 135 : index
    %160 = vector.load %arg2[%c0_152, %c0_153, %c0_154, %c135_155] : memref<1x1x4x506xf32, #tpu.memory_space<vmem>>, vector<1x1x1x352xf32>
    %161 = vector.shape_cast %160 : vector<1x1x1x352xf32> to vector<352xf32>
    %162 = vector.shape_cast %161 : vector<352xf32> to vector<1x352xf32>
    %c0_156 = arith.constant 0 : index
    %c0_157 = arith.constant 0 : index
    %c0_158 = arith.constant 0 : index
    %c136 = arith.constant 136 : index
    %163 = vector.load %arg2[%c0_156, %c0_157, %c0_158, %c136] : memref<1x1x4x506xf32, #tpu.memory_space<vmem>>, vector<1x1x1x352xf32>
    %164 = vector.shape_cast %163 : vector<1x1x1x352xf32> to vector<352xf32>
    %165 = vector.shape_cast %164 : vector<352xf32> to vector<1x352xf32>
    %c0_159 = arith.constant 0 : index
    %c0_160 = arith.constant 0 : index
    %c0_161 = arith.constant 0 : index
    %c137 = arith.constant 137 : index
    %166 = vector.load %arg2[%c0_159, %c0_160, %c0_161, %c137] : memref<1x1x4x506xf32, #tpu.memory_space<vmem>>, vector<1x1x1x352xf32>
    %167 = vector.shape_cast %166 : vector<1x1x1x352xf32> to vector<352xf32>
    %168 = vector.shape_cast %167 : vector<352xf32> to vector<1x352xf32>
    %c0_162 = arith.constant 0 : index
    %c0_163 = arith.constant 0 : index
    %c0_164 = arith.constant 0 : index
    %c138 = arith.constant 138 : index
    %169 = vector.load %arg2[%c0_162, %c0_163, %c0_164, %c138] : memref<1x1x4x506xf32, #tpu.memory_space<vmem>>, vector<1x1x1x352xf32>
    %170 = vector.shape_cast %169 : vector<1x1x1x352xf32> to vector<352xf32>
    %171 = vector.shape_cast %170 : vector<352xf32> to vector<1x352xf32>
    %172 = tpu.concatenate %27, %30, %33, %36, %39, %42, %45, %48, %51, %54, %57, %60, %63, %66, %69, %72 in 0 : vector<1x352xf32>, vector<1x352xf32>, vector<1x352xf32>, vector<1x352xf32>, vector<1x352xf32>, vector<1x352xf32>, vector<1x352xf32>, vector<1x352xf32>, vector<1x352xf32>, vector<1x352xf32>, vector<1x352xf32>, vector<1x352xf32>, vector<1x352xf32>, vector<1x352xf32>, vector<1x352xf32>, vector<1x352xf32> -> vector<16x352xf32>
    %173 = tpu.concatenate %75, %78, %81, %84, %87, %90, %93, %96, %99, %102, %105, %108, %111, %114, %117, %120 in 0 : vector<1x352xf32>, vector<1x352xf32>, vector<1x352xf32>, vector<1x352xf32>, vector<1x352xf32>, vector<1x352xf32>, vector<1x352xf32>, vector<1x352xf32>, vector<1x352xf32>, vector<1x352xf32>, vector<1x352xf32>, vector<1x352xf32>, vector<1x352xf32>, vector<1x352xf32>, vector<1x352xf32>, vector<1x352xf32> -> vector<16x352xf32>
    %174 = tpu.concatenate %123, %126, %129, %132, %135, %138, %141, %144, %147, %150, %153, %156, %159, %162, %165, %168 in 0 : vector<1x352xf32>, vector<1x352xf32>, vector<1x352xf32>, vector<1x352xf32>, vector<1x352xf32>, vector<1x352xf32>, vector<1x352xf32>, vector<1x352xf32>, vector<1x352xf32>, vector<1x352xf32>, vector<1x352xf32>, vector<1x352xf32>, vector<1x352xf32>, vector<1x352xf32>, vector<1x352xf32>, vector<1x352xf32> -> vector<16x352xf32>
    %175 = tpu.concatenate %171, %6, %9, %12, %15, %18, %21, %24 in 0 : vector<1x352xf32>, vector<1x352xf32>, vector<1x352xf32>, vector<1x352xf32>, vector<1x352xf32>, vector<1x352xf32>, vector<1x352xf32>, vector<1x352xf32> -> vector<8x352xf32>
    %176 = tpu.concatenate %172, %173, %174, %175 in 0 : vector<16x352xf32>, vector<16x352xf32>, vector<16x352xf32>, vector<8x352xf32> -> vector<56x352xf32>
    %c0_165 = arith.constant 0 : index
    %c0_166 = arith.constant 0 : index
    %c0_167 = arith.constant 0 : index
    %c0_168 = arith.constant 0 : index
    %177 = vector.load %arg4[%c0_165, %c0_166, %c0_167, %c0_168] : memref<1x4x4x56xf32, #tpu.memory_space<vmem>>, vector<1x1x4x56xf32>
    %178 = vector.shape_cast %177 : vector<1x1x4x56xf32> to vector<4x56xf32>
    %cst_169 = arith.constant dense<0.000000e+00> : vector<4x352xf32>
    %179 = tpu.matmul %178, %176, %cst_169 {dimension_numbers = #tpu.dot_dimension_numbers<[1], [0], [0], [1], [0, 0, 1, 1], [], []>} : vector<4x56xf32>, vector<56x352xf32>, vector<4x352xf32> -> vector<4x352xf32>
    %180 = vector.broadcast %15 : vector<1x352xf32> to vector<4x352xf32>
    %181 = arith.mulf %179, %180 : vector<4x352xf32>
    %c0_170 = arith.constant 0 : index
    %c44_171 = arith.constant 44 : index
    %182 = vector.load %arg9[%c0_170, %c44_171] : memref<16x440xf32, #tpu.memory_space<vmem>>, vector<4x352xf32>
    tpu.vector_store %arg9[%c0_170, %c44_171], %181 {strides = array<i32>} : memref<16x440xf32, #tpu.memory_space<vmem>>, vector<4x352xf32>,
    %c0_172 = arith.constant 0 : index
    %c0_173 = arith.constant 0 : index
    %c1_174 = arith.constant 1 : index
    %c0_175 = arith.constant 0 : index
    %183 = vector.load %arg2[%c0_172, %c0_173, %c1_174, %c0_175] : memref<1x1x4x506xf32, #tpu.memory_space<vmem>>, vector<1x1x1x352xf32>
    %184 = vector.shape_cast %183 : vector<1x1x1x352xf32> to vector<352xf32>
    %185 = vector.shape_cast %184 : vector<352xf32> to vector<1x352xf32>
    %c0_176 = arith.constant 0 : index
    %c0_177 = arith.constant 0 : index
    %c1_178 = arith.constant 1 : index
    %c1_179 = arith.constant 1 : index
    %186 = vector.load %arg2[%c0_176, %c0_177, %c1_178, %c1_179] : memref<1x1x4x506xf32, #tpu.memory_space<vmem>>, vector<1x1x1x352xf32>
    %187 = vector.shape_cast %186 : vector<1x1x1x352xf32> to vector<352xf32>
    %188 = vector.shape_cast %187 : vector<352xf32> to vector<1x352xf32>
    %c0_180 = arith.constant 0 : index
    %c0_181 = arith.constant 0 : index
    %c1_182 = arith.constant 1 : index
    %c2_183 = arith.constant 2 : index
    %189 = vector.load %arg2[%c0_180, %c0_181, %c1_182, %c2_183] : memref<1x1x4x506xf32, #tpu.memory_space<vmem>>, vector<1x1x1x352xf32>
    %190 = vector.shape_cast %189 : vector<1x1x1x352xf32> to vector<352xf32>
    %191 = vector.shape_cast %190 : vector<352xf32> to vector<1x352xf32>
    %c0_184 = arith.constant 0 : index
    %c0_185 = arith.constant 0 : index
    %c1_186 = arith.constant 1 : index
    %c3_187 = arith.constant 3 : index
    %192 = vector.load %arg2[%c0_184, %c0_185, %c1_186, %c3_187] : memref<1x1x4x506xf32, #tpu.memory_space<vmem>>, vector<1x1x1x352xf32>
    %193 = vector.shape_cast %192 : vector<1x1x1x352xf32> to vector<352xf32>
    %194 = vector.shape_cast %193 : vector<352xf32> to vector<1x352xf32>
    %c0_188 = arith.constant 0 : index
    %c0_189 = arith.constant 0 : index
    %c1_190 = arith.constant 1 : index
    %c4_191 = arith.constant 4 : index
    %195 = vector.load %arg2[%c0_188, %c0_189, %c1_190, %c4_191] : memref<1x1x4x506xf32, #tpu.memory_space<vmem>>, vector<1x1x1x352xf32>
    %196 = vector.shape_cast %195 : vector<1x1x1x352xf32> to vector<352xf32>
    %197 = vector.shape_cast %196 : vector<352xf32> to vector<1x352xf32>
    %c0_192 = arith.constant 0 : index
    %c0_193 = arith.constant 0 : index
    %c1_194 = arith.constant 1 : index
    %c5_195 = arith.constant 5 : index
    %198 = vector.load %arg2[%c0_192, %c0_193, %c1_194, %c5_195] : memref<1x1x4x506xf32, #tpu.memory_space<vmem>>, vector<1x1x1x352xf32>
    %199 = vector.shape_cast %198 : vector<1x1x1x352xf32> to vector<352xf32>
    %200 = vector.shape_cast %199 : vector<352xf32> to vector<1x352xf32>
    %c0_196 = arith.constant 0 : index
    %c0_197 = arith.constant 0 : index
    %c1_198 = arith.constant 1 : index
    %c6_199 = arith.constant 6 : index
    %201 = vector.load %arg2[%c0_196, %c0_197, %c1_198, %c6_199] : memref<1x1x4x506xf32, #tpu.memory_space<vmem>>, vector<1x1x1x352xf32>
    %202 = vector.shape_cast %201 : vector<1x1x1x352xf32> to vector<352xf32>
    %203 = vector.shape_cast %202 : vector<352xf32> to vector<1x352xf32>
    %c0_200 = arith.constant 0 : index
    %c0_201 = arith.constant 0 : index
    %c1_202 = arith.constant 1 : index
    %c22_203 = arith.constant 22 : index
    %204 = vector.load %arg2[%c0_200, %c0_201, %c1_202, %c22_203] : memref<1x1x4x506xf32, #tpu.memory_space<vmem>>, vector<1x1x1x352xf32>
    %205 = vector.shape_cast %204 : vector<1x1x1x352xf32> to vector<352xf32>
    %206 = vector.shape_cast %205 : vector<352xf32> to vector<1x352xf32>
    %c0_204 = arith.constant 0 : index
    %c0_205 = arith.constant 0 : index
    %c1_206 = arith.constant 1 : index
    %c23_207 = arith.constant 23 : index
    %207 = vector.load %arg2[%c0_204, %c0_205, %c1_206, %c23_207] : memref<1x1x4x506xf32, #tpu.memory_space<vmem>>, vector<1x1x1x352xf32>
    %208 = vector.shape_cast %207 : vector<1x1x1x352xf32> to vector<352xf32>
    %209 = vector.shape_cast %208 : vector<352xf32> to vector<1x352xf32>
    %c0_208 = arith.constant 0 : index
    %c0_209 = arith.constant 0 : index
    %c1_210 = arith.constant 1 : index
    %c24_211 = arith.constant 24 : index
    %210 = vector.load %arg2[%c0_208, %c0_209, %c1_210, %c24_211] : memref<1x1x4x506xf32, #tpu.memory_space<vmem>>, vector<1x1x1x352xf32>
    %211 = vector.shape_cast %210 : vector<1x1x1x352xf32> to vector<352xf32>
    %212 = vector.shape_cast %211 : vector<352xf32> to vector<1x352xf32>
    %c0_212 = arith.constant 0 : index
    %c0_213 = arith.constant 0 : index
    %c1_214 = arith.constant 1 : index
    %c25_215 = arith.constant 25 : index
    %213 = vector.load %arg2[%c0_212, %c0_213, %c1_214, %c25_215] : memref<1x1x4x506xf32, #tpu.memory_space<vmem>>, vector<1x1x1x352xf32>
    %214 = vector.shape_cast %213 : vector<1x1x1x352xf32> to vector<352xf32>
    %215 = vector.shape_cast %214 : vector<352xf32> to vector<1x352xf32>
    %c0_216 = arith.constant 0 : index
    %c0_217 = arith.constant 0 : index
    %c1_218 = arith.constant 1 : index
    %c26_219 = arith.constant 26 : index
    %216 = vector.load %arg2[%c0_216, %c0_217, %c1_218, %c26_219] : memref<1x1x4x506xf32, #tpu.memory_space<vmem>>, vector<1x1x1x352xf32>
    %217 = vector.shape_cast %216 : vector<1x1x1x352xf32> to vector<352xf32>
    %218 = vector.shape_cast %217 : vector<352xf32> to vector<1x352xf32>
    %c0_220 = arith.constant 0 : index
    %c0_221 = arith.constant 0 : index
    %c1_222 = arith.constant 1 : index
    %c27_223 = arith.constant 27 : index
    %219 = vector.load %arg2[%c0_220, %c0_221, %c1_222, %c27_223] : memref<1x1x4x506xf32, #tpu.memory_space<vmem>>, vector<1x1x1x352xf32>
    %220 = vector.shape_cast %219 : vector<1x1x1x352xf32> to vector<352xf32>
    %221 = vector.shape_cast %220 : vector<352xf32> to vector<1x352xf32>
    %c0_224 = arith.constant 0 : index
    %c0_225 = arith.constant 0 : index
    %c1_226 = arith.constant 1 : index
    %c28_227 = arith.constant 28 : index
    %222 = vector.load %arg2[%c0_224, %c0_225, %c1_226, %c28_227] : memref<1x1x4x506xf32, #tpu.memory_space<vmem>>, vector<1x1x1x352xf32>
    %223 = vector.shape_cast %222 : vector<1x1x1x352xf32> to vector<352xf32>
    %224 = vector.shape_cast %223 : vector<352xf32> to vector<1x352xf32>
    %c0_228 = arith.constant 0 : index
    %c0_229 = arith.constant 0 : index
    %c1_230 = arith.constant 1 : index
    %c44_231 = arith.constant 44 : index
    %225 = vector.load %arg2[%c0_228, %c0_229, %c1_230, %c44_231] : memref<1x1x4x506xf32, #tpu.memory_space<vmem>>, vector<1x1x1x352xf32>
    %226 = vector.shape_cast %225 : vector<1x1x1x352xf32> to vector<352xf32>
    %227 = vector.shape_cast %226 : vector<352xf32> to vector<1x352xf32>
    %c0_232 = arith.constant 0 : index
    %c0_233 = arith.constant 0 : index
    %c1_234 = arith.constant 1 : index
    %c45_235 = arith.constant 45 : index
    %228 = vector.load %arg2[%c0_232, %c0_233, %c1_234, %c45_235] : memref<1x1x4x506xf32, #tpu.memory_space<vmem>>, vector<1x1x1x352xf32>
    %229 = vector.shape_cast %228 : vector<1x1x1x352xf32> to vector<352xf32>
    %230 = vector.shape_cast %229 : vector<352xf32> to vector<1x352xf32>
    %c0_236 = arith.constant 0 : index
    %c0_237 = arith.constant 0 : index
    %c1_238 = arith.constant 1 : index
    %c46_239 = arith.constant 46 : index
    %231 = vector.load %arg2[%c0_236, %c0_237, %c1_238, %c46_239] : memref<1x1x4x506xf32, #tpu.memory_space<vmem>>, vector<1x1x1x352xf32>
    %232 = vector.shape_cast %231 : vector<1x1x1x352xf32> to vector<352xf32>
    %233 = vector.shape_cast %232 : vector<352xf32> to vector<1x352xf32>
    %c0_240 = arith.constant 0 : index
    %c0_241 = arith.constant 0 : index
    %c1_242 = arith.constant 1 : index
    %c47_243 = arith.constant 47 : index
    %234 = vector.load %arg2[%c0_240, %c0_241, %c1_242, %c47_243] : memref<1x1x4x506xf32, #tpu.memory_space<vmem>>, vector<1x1x1x352xf32>
    %235 = vector.shape_cast %234 : vector<1x1x1x352xf32> to vector<352xf32>
    %236 = vector.shape_cast %235 : vector<352xf32> to vector<1x352xf32>
    %c0_244 = arith.constant 0 : index
    %c0_245 = arith.constant 0 : index
    %c1_246 = arith.constant 1 : index
    %c48_247 = arith.constant 48 : index
    %237 = vector.load %arg2[%c0_244, %c0_245, %c1_246, %c48_247] : memref<1x1x4x506xf32, #tpu.memory_space<vmem>>, vector<1x1x1x352xf32>
    %238 = vector.shape_cast %237 : vector<1x1x1x352xf32> to vector<352xf32>
    %239 = vector.shape_cast %238 : vector<352xf32> to vector<1x352xf32>
    %c0_248 = arith.constant 0 : index
    %c0_249 = arith.constant 0 : index
    %c1_250 = arith.constant 1 : index
    %c49_251 = arith.constant 49 : index
    %240 = vector.load %arg2[%c0_248, %c0_249, %c1_250, %c49_251] : memref<1x1x4x506xf32, #tpu.memory_space<vmem>>, vector<1x1x1x352xf32>
    %241 = vector.shape_cast %240 : vector<1x1x1x352xf32> to vector<352xf32>
    %242 = vector.shape_cast %241 : vector<352xf32> to vector<1x352xf32>
    %c0_252 = arith.constant 0 : index
    %c0_253 = arith.constant 0 : index
    %c1_254 = arith.constant 1 : index
    %c50_255 = arith.constant 50 : index
    %243 = vector.load %arg2[%c0_252, %c0_253, %c1_254, %c50_255] : memref<1x1x4x506xf32, #tpu.memory_space<vmem>>, vector<1x1x1x352xf32>
    %244 = vector.shape_cast %243 : vector<1x1x1x352xf32> to vector<352xf32>
    %245 = vector.shape_cast %244 : vector<352xf32> to vector<1x352xf32>
    %c0_256 = arith.constant 0 : index
    %c0_257 = arith.constant 0 : index
    %c1_258 = arith.constant 1 : index
    %c66_259 = arith.constant 66 : index
    %246 = vector.load %arg2[%c0_256, %c0_257, %c1_258, %c66_259] : memref<1x1x4x506xf32, #tpu.memory_space<vmem>>, vector<1x1x1x352xf32>
    %247 = vector.shape_cast %246 : vector<1x1x1x352xf32> to vector<352xf32>
    %248 = vector.shape_cast %247 : vector<352xf32> to vector<1x352xf32>
    %c0_260 = arith.constant 0 : index
    %c0_261 = arith.constant 0 : index
    %c1_262 = arith.constant 1 : index
    %c67_263 = arith.constant 67 : index
    %249 = vector.load %arg2[%c0_260, %c0_261, %c1_262, %c67_263] : memref<1x1x4x506xf32, #tpu.memory_space<vmem>>, vector<1x1x1x352xf32>
    %250 = vector.shape_cast %249 : vector<1x1x1x352xf32> to vector<352xf32>
    %251 = vector.shape_cast %250 : vector<352xf32> to vector<1x352xf32>
    %c0_264 = arith.constant 0 : index
    %c0_265 = arith.constant 0 : index
    %c1_266 = arith.constant 1 : index
    %c68_267 = arith.constant 68 : index
    %252 = vector.load %arg2[%c0_264, %c0_265, %c1_266, %c68_267] : memref<1x1x4x506xf32, #tpu.memory_space<vmem>>, vector<1x1x1x352xf32>
    %253 = vector.shape_cast %252 : vector<1x1x1x352xf32> to vector<352xf32>
    %254 = vector.shape_cast %253 : vector<352xf32> to vector<1x352xf32>
    %c0_268 = arith.constant 0 : index
    %c0_269 = arith.constant 0 : index
    %c1_270 = arith.constant 1 : index
    %c69_271 = arith.constant 69 : index
    %255 = vector.load %arg2[%c0_268, %c0_269, %c1_270, %c69_271] : memref<1x1x4x506xf32, #tpu.memory_space<vmem>>, vector<1x1x1x352xf32>
    %256 = vector.shape_cast %255 : vector<1x1x1x352xf32> to vector<352xf32>
    %257 = vector.shape_cast %256 : vector<352xf32> to vector<1x352xf32>
    %c0_272 = arith.constant 0 : index
    %c0_273 = arith.constant 0 : index
    %c1_274 = arith.constant 1 : index
    %c70_275 = arith.constant 70 : index
    %258 = vector.load %arg2[%c0_272, %c0_273, %c1_274, %c70_275] : memref<1x1x4x506xf32, #tpu.memory_space<vmem>>, vector<1x1x1x352xf32>
    %259 = vector.shape_cast %258 : vector<1x1x1x352xf32> to vector<352xf32>
    %260 = vector.shape_cast %259 : vector<352xf32> to vector<1x352xf32>
    %c0_276 = arith.constant 0 : index
    %c0_277 = arith.constant 0 : index
    %c1_278 = arith.constant 1 : index
    %c71_279 = arith.constant 71 : index
    %261 = vector.load %arg2[%c0_276, %c0_277, %c1_278, %c71_279] : memref<1x1x4x506xf32, #tpu.memory_space<vmem>>, vector<1x1x1x352xf32>
    %262 = vector.shape_cast %261 : vector<1x1x1x352xf32> to vector<352xf32>
    %263 = vector.shape_cast %262 : vector<352xf32> to vector<1x352xf32>
    %c0_280 = arith.constant 0 : index
    %c0_281 = arith.constant 0 : index
    %c1_282 = arith.constant 1 : index
    %c72_283 = arith.constant 72 : index
    %264 = vector.load %arg2[%c0_280, %c0_281, %c1_282, %c72_283] : memref<1x1x4x506xf32, #tpu.memory_space<vmem>>, vector<1x1x1x352xf32>
    %265 = vector.shape_cast %264 : vector<1x1x1x352xf32> to vector<352xf32>
    %266 = vector.shape_cast %265 : vector<352xf32> to vector<1x352xf32>
    %c0_284 = arith.constant 0 : index
    %c0_285 = arith.constant 0 : index
    %c1_286 = arith.constant 1 : index
    %c88_287 = arith.constant 88 : index
    %267 = vector.load %arg2[%c0_284, %c0_285, %c1_286, %c88_287] : memref<1x1x4x506xf32, #tpu.memory_space<vmem>>, vector<1x1x1x352xf32>
    %268 = vector.shape_cast %267 : vector<1x1x1x352xf32> to vector<352xf32>
    %269 = vector.shape_cast %268 : vector<352xf32> to vector<1x352xf32>
    %c0_288 = arith.constant 0 : index
    %c0_289 = arith.constant 0 : index
    %c1_290 = arith.constant 1 : index
    %c89_291 = arith.constant 89 : index
    %270 = vector.load %arg2[%c0_288, %c0_289, %c1_290, %c89_291] : memref<1x1x4x506xf32, #tpu.memory_space<vmem>>, vector<1x1x1x352xf32>
    %271 = vector.shape_cast %270 : vector<1x1x1x352xf32> to vector<352xf32>
    %272 = vector.shape_cast %271 : vector<352xf32> to vector<1x352xf32>
    %c0_292 = arith.constant 0 : index
    %c0_293 = arith.constant 0 : index
    %c1_294 = arith.constant 1 : index
    %c90_295 = arith.constant 90 : index
    %273 = vector.load %arg2[%c0_292, %c0_293, %c1_294, %c90_295] : memref<1x1x4x506xf32, #tpu.memory_space<vmem>>, vector<1x1x1x352xf32>
    %274 = vector.shape_cast %273 : vector<1x1x1x352xf32> to vector<352xf32>
    %275 = vector.shape_cast %274 : vector<352xf32> to vector<1x352xf32>
    %c0_296 = arith.constant 0 : index
    %c0_297 = arith.constant 0 : index
    %c1_298 = arith.constant 1 : index
    %c91_299 = arith.constant 91 : index
    %276 = vector.load %arg2[%c0_296, %c0_297, %c1_298, %c91_299] : memref<1x1x4x506xf32, #tpu.memory_space<vmem>>, vector<1x1x1x352xf32>
    %277 = vector.shape_cast %276 : vector<1x1x1x352xf32> to vector<352xf32>
    %278 = vector.shape_cast %277 : vector<352xf32> to vector<1x352xf32>
    %c0_300 = arith.constant 0 : index
    %c0_301 = arith.constant 0 : index
    %c1_302 = arith.constant 1 : index
    %c92_303 = arith.constant 92 : index
    %279 = vector.load %arg2[%c0_300, %c0_301, %c1_302, %c92_303] : memref<1x1x4x506xf32, #tpu.memory_space<vmem>>, vector<1x1x1x352xf32>
    %280 = vector.shape_cast %279 : vector<1x1x1x352xf32> to vector<352xf32>
    %281 = vector.shape_cast %280 : vector<352xf32> to vector<1x352xf32>
    %c0_304 = arith.constant 0 : index
    %c0_305 = arith.constant 0 : index
    %c1_306 = arith.constant 1 : index
    %c93_307 = arith.constant 93 : index
    %282 = vector.load %arg2[%c0_304, %c0_305, %c1_306, %c93_307] : memref<1x1x4x506xf32, #tpu.memory_space<vmem>>, vector<1x1x1x352xf32>
    %283 = vector.shape_cast %282 : vector<1x1x1x352xf32> to vector<352xf32>
    %284 = vector.shape_cast %283 : vector<352xf32> to vector<1x352xf32>
    %c0_308 = arith.constant 0 : index
    %c0_309 = arith.constant 0 : index
    %c1_310 = arith.constant 1 : index
    %c94_311 = arith.constant 94 : index
    %285 = vector.load %arg2[%c0_308, %c0_309, %c1_310, %c94_311] : memref<1x1x4x506xf32, #tpu.memory_space<vmem>>, vector<1x1x1x352xf32>
    %286 = vector.shape_cast %285 : vector<1x1x1x352xf32> to vector<352xf32>
    %287 = vector.shape_cast %286 : vector<352xf32> to vector<1x352xf32>
    %c0_312 = arith.constant 0 : index
    %c0_313 = arith.constant 0 : index
    %c1_314 = arith.constant 1 : index
    %c110_315 = arith.constant 110 : index
    %288 = vector.load %arg2[%c0_312, %c0_313, %c1_314, %c110_315] : memref<1x1x4x506xf32, #tpu.memory_space<vmem>>, vector<1x1x1x352xf32>
    %289 = vector.shape_cast %288 : vector<1x1x1x352xf32> to vector<352xf32>
    %290 = vector.shape_cast %289 : vector<352xf32> to vector<1x352xf32>
    %c0_316 = arith.constant 0 : index
    %c0_317 = arith.constant 0 : index
    %c1_318 = arith.constant 1 : index
    %c111_319 = arith.constant 111 : index
    %291 = vector.load %arg2[%c0_316, %c0_317, %c1_318, %c111_319] : memref<1x1x4x506xf32, #tpu.memory_space<vmem>>, vector<1x1x1x352xf32>
    %292 = vector.shape_cast %291 : vector<1x1x1x352xf32> to vector<352xf32>
    %293 = vector.shape_cast %292 : vector<352xf32> to vector<1x352xf32>
    %c0_320 = arith.constant 0 : index
    %c0_321 = arith.constant 0 : index
    %c1_322 = arith.constant 1 : index
    %c112_323 = arith.constant 112 : index
    %294 = vector.load %arg2[%c0_320, %c0_321, %c1_322, %c112_323] : memref<1x1x4x506xf32, #tpu.memory_space<vmem>>, vector<1x1x1x352xf32>
    %295 = vector.shape_cast %294 : vector<1x1x1x352xf32> to vector<352xf32>
    %296 = vector.shape_cast %295 : vector<352xf32> to vector<1x352xf32>
    %c0_324 = arith.constant 0 : index
    %c0_325 = arith.constant 0 : index
    %c1_326 = arith.constant 1 : index
    %c113_327 = arith.constant 113 : index
    %297 = vector.load %arg2[%c0_324, %c0_325, %c1_326, %c113_327] : memref<1x1x4x506xf32, #tpu.memory_space<vmem>>, vector<1x1x1x352xf32>
    %298 = vector.shape_cast %297 : vector<1x1x1x352xf32> to vector<352xf32>
    %299 = vector.shape_cast %298 : vector<352xf32> to vector<1x352xf32>
    %c0_328 = arith.constant 0 : index
    %c0_329 = arith.constant 0 : index
    %c1_330 = arith.constant 1 : index
    %c114_331 = arith.constant 114 : index
    %300 = vector.load %arg2[%c0_328, %c0_329, %c1_330, %c114_331] : memref<1x1x4x506xf32, #tpu.memory_space<vmem>>, vector<1x1x1x352xf32>
    %301 = vector.shape_cast %300 : vector<1x1x1x352xf32> to vector<352xf32>
    %302 = vector.shape_cast %301 : vector<352xf32> to vector<1x352xf32>
    %c0_332 = arith.constant 0 : index
    %c0_333 = arith.constant 0 : index
    %c1_334 = arith.constant 1 : index
    %c115_335 = arith.constant 115 : index
    %303 = vector.load %arg2[%c0_332, %c0_333, %c1_334, %c115_335] : memref<1x1x4x506xf32, #tpu.memory_space<vmem>>, vector<1x1x1x352xf32>
    %304 = vector.shape_cast %303 : vector<1x1x1x352xf32> to vector<352xf32>
    %305 = vector.shape_cast %304 : vector<352xf32> to vector<1x352xf32>
    %c0_336 = arith.constant 0 : index
    %c0_337 = arith.constant 0 : index
    %c1_338 = arith.constant 1 : index
    %c116_339 = arith.constant 116 : index
    %306 = vector.load %arg2[%c0_336, %c0_337, %c1_338, %c116_339] : memref<1x1x4x506xf32, #tpu.memory_space<vmem>>, vector<1x1x1x352xf32>
    %307 = vector.shape_cast %306 : vector<1x1x1x352xf32> to vector<352xf32>
    %308 = vector.shape_cast %307 : vector<352xf32> to vector<1x352xf32>
    %c0_340 = arith.constant 0 : index
    %c0_341 = arith.constant 0 : index
    %c1_342 = arith.constant 1 : index
    %c132_343 = arith.constant 132 : index
    %309 = vector.load %arg2[%c0_340, %c0_341, %c1_342, %c132_343] : memref<1x1x4x506xf32, #tpu.memory_space<vmem>>, vector<1x1x1x352xf32>
    %310 = vector.shape_cast %309 : vector<1x1x1x352xf32> to vector<352xf32>
    %311 = vector.shape_cast %310 : vector<352xf32> to vector<1x352xf32>
    %c0_344 = arith.constant 0 : index
    %c0_345 = arith.constant 0 : index
    %c1_346 = arith.constant 1 : index
    %c133_347 = arith.constant 133 : index
    %312 = vector.load %arg2[%c0_344, %c0_345, %c1_346, %c133_347] : memref<1x1x4x506xf32, #tpu.memory_space<vmem>>, vector<1x1x1x352xf32>
    %313 = vector.shape_cast %312 : vector<1x1x1x352xf32> to vector<352xf32>
    %314 = vector.shape_cast %313 : vector<352xf32> to vector<1x352xf32>
    %c0_348 = arith.constant 0 : index
    %c0_349 = arith.constant 0 : index
    %c1_350 = arith.constant 1 : index
    %c134_351 = arith.constant 134 : index
    %315 = vector.load %arg2[%c0_348, %c0_349, %c1_350, %c134_351] : memref<1x1x4x506xf32, #tpu.memory_space<vmem>>, vector<1x1x1x352xf32>
    %316 = vector.shape_cast %315 : vector<1x1x1x352xf32> to vector<352xf32>
    %317 = vector.shape_cast %316 : vector<352xf32> to vector<1x352xf32>
    %c0_352 = arith.constant 0 : index
    %c0_353 = arith.constant 0 : index
    %c1_354 = arith.constant 1 : index
    %c135_355 = arith.constant 135 : index
    %318 = vector.load %arg2[%c0_352, %c0_353, %c1_354, %c135_355] : memref<1x1x4x506xf32, #tpu.memory_space<vmem>>, vector<1x1x1x352xf32>
    %319 = vector.shape_cast %318 : vector<1x1x1x352xf32> to vector<352xf32>
    %320 = vector.shape_cast %319 : vector<352xf32> to vector<1x352xf32>
    %c0_356 = arith.constant 0 : index
    %c0_357 = arith.constant 0 : index
    %c1_358 = arith.constant 1 : index
    %c136_359 = arith.constant 136 : index
    %321 = vector.load %arg2[%c0_356, %c0_357, %c1_358, %c136_359] : memref<1x1x4x506xf32, #tpu.memory_space<vmem>>, vector<1x1x1x352xf32>
    %322 = vector.shape_cast %321 : vector<1x1x1x352xf32> to vector<352xf32>
    %323 = vector.shape_cast %322 : vector<352xf32> to vector<1x352xf32>
    %c0_360 = arith.constant 0 : index
    %c0_361 = arith.constant 0 : index
    %c1_362 = arith.constant 1 : index
    %c137_363 = arith.constant 137 : index
    %324 = vector.load %arg2[%c0_360, %c0_361, %c1_362, %c137_363] : memref<1x1x4x506xf32, #tpu.memory_space<vmem>>, vector<1x1x1x352xf32>
    %325 = vector.shape_cast %324 : vector<1x1x1x352xf32> to vector<352xf32>
    %326 = vector.shape_cast %325 : vector<352xf32> to vector<1x352xf32>
    %c0_364 = arith.constant 0 : index
    %c0_365 = arith.constant 0 : index
    %c1_366 = arith.constant 1 : index
    %c138_367 = arith.constant 138 : index
    %327 = vector.load %arg2[%c0_364, %c0_365, %c1_366, %c138_367] : memref<1x1x4x506xf32, #tpu.memory_space<vmem>>, vector<1x1x1x352xf32>
    %328 = vector.shape_cast %327 : vector<1x1x1x352xf32> to vector<352xf32>
    %329 = vector.shape_cast %328 : vector<352xf32> to vector<1x352xf32>
    %330 = tpu.concatenate %185, %188, %191, %194, %197, %200, %203, %206, %209, %212, %215, %218, %221, %224, %227, %230 in 0 : vector<1x352xf32>, vector<1x352xf32>, vector<1x352xf32>, vector<1x352xf32>, vector<1x352xf32>, vector<1x352xf32>, vector<1x352xf32>, vector<1x352xf32>, vector<1x352xf32>, vector<1x352xf32>, vector<1x352xf32>, vector<1x352xf32>, vector<1x352xf32>, vector<1x352xf32>, vector<1x352xf32>, vector<1x352xf32> -> vector<16x352xf32>
    %331 = tpu.concatenate %233, %236, %239, %242, %245, %248, %251, %254, %257, %260, %263, %266, %269, %272, %275, %278 in 0 : vector<1x352xf32>, vector<1x352xf32>, vector<1x352xf32>, vector<1x352xf32>, vector<1x352xf32>, vector<1x352xf32>, vector<1x352xf32>, vector<1x352xf32>, vector<1x352xf32>, vector<1x352xf32>, vector<1x352xf32>, vector<1x352xf32>, vector<1x352xf32>, vector<1x352xf32>, vector<1x352xf32>, vector<1x352xf32> -> vector<16x352xf32>
    %332 = tpu.concatenate %281, %284, %287, %290, %293, %296, %299, %302, %305, %308, %311, %314, %317, %320, %323, %326 in 0 : vector<1x352xf32>, vector<1x352xf32>, vector<1x352xf32>, vector<1x352xf32>, vector<1x352xf32>, vector<1x352xf32>, vector<1x352xf32>, vector<1x352xf32>, vector<1x352xf32>, vector<1x352xf32>, vector<1x352xf32>, vector<1x352xf32>, vector<1x352xf32>, vector<1x352xf32>, vector<1x352xf32>, vector<1x352xf32> -> vector<16x352xf32>
    %333 = tpu.concatenate %329, %6, %9, %12, %15, %18, %21, %24 in 0 : vector<1x352xf32>, vector<1x352xf32>, vector<1x352xf32>, vector<1x352xf32>, vector<1x352xf32>, vector<1x352xf32>, vector<1x352xf32>, vector<1x352xf32> -> vector<8x352xf32>
    %334 = tpu.concatenate %330, %331, %332, %333 in 0 : vector<16x352xf32>, vector<16x352xf32>, vector<16x352xf32>, vector<8x352xf32> -> vector<56x352xf32>
    %c0_368 = arith.constant 0 : index
    %c1_369 = arith.constant 1 : index
    %c0_370 = arith.constant 0 : index
    %c0_371 = arith.constant 0 : index
    %335 = vector.load %arg4[%c0_368, %c1_369, %c0_370, %c0_371] : memref<1x4x4x56xf32, #tpu.memory_space<vmem>>, vector<1x1x4x56xf32>
    %336 = vector.shape_cast %335 : vector<1x1x4x56xf32> to vector<4x56xf32>
    %cst_372 = arith.constant dense<0.000000e+00> : vector<4x352xf32>
    %337 = tpu.matmul %336, %334, %cst_372 {dimension_numbers = #tpu.dot_dimension_numbers<[1], [0], [0], [1], [0, 0, 1, 1], [], []>} : vector<4x56xf32>, vector<56x352xf32>, vector<4x352xf32> -> vector<4x352xf32>
    %338 = vector.broadcast %15 : vector<1x352xf32> to vector<4x352xf32>
    %339 = arith.mulf %337, %338 : vector<4x352xf32>
    %c4_373 = arith.constant 4 : index
    %c44_374 = arith.constant 44 : index
    %340 = vector.load %arg9[%c4_373, %c44_374] : memref<16x440xf32, #tpu.memory_space<vmem>>, vector<4x352xf32>
    tpu.vector_store %arg9[%c4_373, %c44_374], %339 {strides = array<i32>} : memref<16x440xf32, #tpu.memory_space<vmem>>, vector<4x352xf32>,
    %c0_375 = arith.constant 0 : index
    %c0_376 = arith.constant 0 : index
    %c2_377 = arith.constant 2 : index
    %c0_378 = arith.constant 0 : index
    %341 = vector.load %arg2[%c0_375, %c0_376, %c2_377, %c0_378] : memref<1x1x4x506xf32, #tpu.memory_space<vmem>>, vector<1x1x1x352xf32>
    %342 = vector.shape_cast %341 : vector<1x1x1x352xf32> to vector<352xf32>
    %343 = vector.shape_cast %342 : vector<352xf32> to vector<1x352xf32>
    %c0_379 = arith.constant 0 : index
    %c0_380 = arith.constant 0 : index
    %c2_381 = arith.constant 2 : index
    %c1_382 = arith.constant 1 : index
    %344 = vector.load %arg2[%c0_379, %c0_380, %c2_381, %c1_382] : memref<1x1x4x506xf32, #tpu.memory_space<vmem>>, vector<1x1x1x352xf32>
    %345 = vector.shape_cast %344 : vector<1x1x1x352xf32> to vector<352xf32>
    %346 = vector.shape_cast %345 : vector<352xf32> to vector<1x352xf32>
    %c0_383 = arith.constant 0 : index
    %c0_384 = arith.constant 0 : index
    %c2_385 = arith.constant 2 : index
    %c2_386 = arith.constant 2 : index
    %347 = vector.load %arg2[%c0_383, %c0_384, %c2_385, %c2_386] : memref<1x1x4x506xf32, #tpu.memory_space<vmem>>, vector<1x1x1x352xf32>
    %348 = vector.shape_cast %347 : vector<1x1x1x352xf32> to vector<352xf32>
    %349 = vector.shape_cast %348 : vector<352xf32> to vector<1x352xf32>
    %c0_387 = arith.constant 0 : index
    %c0_388 = arith.constant 0 : index
    %c2_389 = arith.constant 2 : index
    %c3_390 = arith.constant 3 : index
    %350 = vector.load %arg2[%c0_387, %c0_388, %c2_389, %c3_390] : memref<1x1x4x506xf32, #tpu.memory_space<vmem>>, vector<1x1x1x352xf32>
    %351 = vector.shape_cast %350 : vector<1x1x1x352xf32> to vector<352xf32>
    %352 = vector.shape_cast %351 : vector<352xf32> to vector<1x352xf32>
    %c0_391 = arith.constant 0 : index
    %c0_392 = arith.constant 0 : index
    %c2_393 = arith.constant 2 : index
    %c4_394 = arith.constant 4 : index
    %353 = vector.load %arg2[%c0_391, %c0_392, %c2_393, %c4_394] : memref<1x1x4x506xf32, #tpu.memory_space<vmem>>, vector<1x1x1x352xf32>
    %354 = vector.shape_cast %353 : vector<1x1x1x352xf32> to vector<352xf32>
    %355 = vector.shape_cast %354 : vector<352xf32> to vector<1x352xf32>
    %c0_395 = arith.constant 0 : index
    %c0_396 = arith.constant 0 : index
    %c2_397 = arith.constant 2 : index
    %c5_398 = arith.constant 5 : index
    %356 = vector.load %arg2[%c0_395, %c0_396, %c2_397, %c5_398] : memref<1x1x4x506xf32, #tpu.memory_space<vmem>>, vector<1x1x1x352xf32>
    %357 = vector.shape_cast %356 : vector<1x1x1x352xf32> to vector<352xf32>
    %358 = vector.shape_cast %357 : vector<352xf32> to vector<1x352xf32>
    %c0_399 = arith.constant 0 : index
    %c0_400 = arith.constant 0 : index
    %c2_401 = arith.constant 2 : index
    %c6_402 = arith.constant 6 : index
    %359 = vector.load %arg2[%c0_399, %c0_400, %c2_401, %c6_402] : memref<1x1x4x506xf32, #tpu.memory_space<vmem>>, vector<1x1x1x352xf32>
    %360 = vector.shape_cast %359 : vector<1x1x1x352xf32> to vector<352xf32>
    %361 = vector.shape_cast %360 : vector<352xf32> to vector<1x352xf32>
    %c0_403 = arith.constant 0 : index
    %c0_404 = arith.constant 0 : index
    %c2_405 = arith.constant 2 : index
    %c22_406 = arith.constant 22 : index
    %362 = vector.load %arg2[%c0_403, %c0_404, %c2_405, %c22_406] : memref<1x1x4x506xf32, #tpu.memory_space<vmem>>, vector<1x1x1x352xf32>
    %363 = vector.shape_cast %362 : vector<1x1x1x352xf32> to vector<352xf32>
    %364 = vector.shape_cast %363 : vector<352xf32> to vector<1x352xf32>
    %c0_407 = arith.constant 0 : index
    %c0_408 = arith.constant 0 : index
    %c2_409 = arith.constant 2 : index
    %c23_410 = arith.constant 23 : index
    %365 = vector.load %arg2[%c0_407, %c0_408, %c2_409, %c23_410] : memref<1x1x4x506xf32, #tpu.memory_space<vmem>>, vector<1x1x1x352xf32>
    %366 = vector.shape_cast %365 : vector<1x1x1x352xf32> to vector<352xf32>
    %367 = vector.shape_cast %366 : vector<352xf32> to vector<1x352xf32>
    %c0_411 = arith.constant 0 : index
    %c0_412 = arith.constant 0 : index
    %c2_413 = arith.constant 2 : index
    %c24_414 = arith.constant 24 : index
    %368 = vector.load %arg2[%c0_411, %c0_412, %c2_413, %c24_414] : memref<1x1x4x506xf32, #tpu.memory_space<vmem>>, vector<1x1x1x352xf32>
    %369 = vector.shape_cast %368 : vector<1x1x1x352xf32> to vector<352xf32>
    %370 = vector.shape_cast %369 : vector<352xf32> to vector<1x352xf32>
    %c0_415 = arith.constant 0 : index
    %c0_416 = arith.constant 0 : index
    %c2_417 = arith.constant 2 : index
    %c25_418 = arith.constant 25 : index
    %371 = vector.load %arg2[%c0_415, %c0_416, %c2_417, %c25_418] : memref<1x1x4x506xf32, #tpu.memory_space<vmem>>, vector<1x1x1x352xf32>
    %372 = vector.shape_cast %371 : vector<1x1x1x352xf32> to vector<352xf32>
    %373 = vector.shape_cast %372 : vector<352xf32> to vector<1x352xf32>
    %c0_419 = arith.constant 0 : index
    %c0_420 = arith.constant 0 : index
    %c2_421 = arith.constant 2 : index
    %c26_422 = arith.constant 26 : index
    %374 = vector.load %arg2[%c0_419, %c0_420, %c2_421, %c26_422] : memref<1x1x4x506xf32, #tpu.memory_space<vmem>>, vector<1x1x1x352xf32>
    %375 = vector.shape_cast %374 : vector<1x1x1x352xf32> to vector<352xf32>
    %376 = vector.shape_cast %375 : vector<352xf32> to vector<1x352xf32>
    %c0_423 = arith.constant 0 : index
    %c0_424 = arith.constant 0 : index
    %c2_425 = arith.constant 2 : index
    %c27_426 = arith.constant 27 : index
    %377 = vector.load %arg2[%c0_423, %c0_424, %c2_425, %c27_426] : memref<1x1x4x506xf32, #tpu.memory_space<vmem>>, vector<1x1x1x352xf32>
    %378 = vector.shape_cast %377 : vector<1x1x1x352xf32> to vector<352xf32>
    %379 = vector.shape_cast %378 : vector<352xf32> to vector<1x352xf32>
    %c0_427 = arith.constant 0 : index
    %c0_428 = arith.constant 0 : index
    %c2_429 = arith.constant 2 : index
    %c28_430 = arith.constant 28 : index
    %380 = vector.load %arg2[%c0_427, %c0_428, %c2_429, %c28_430] : memref<1x1x4x506xf32, #tpu.memory_space<vmem>>, vector<1x1x1x352xf32>
    %381 = vector.shape_cast %380 : vector<1x1x1x352xf32> to vector<352xf32>
    %382 = vector.shape_cast %381 : vector<352xf32> to vector<1x352xf32>
    %c0_431 = arith.constant 0 : index
    %c0_432 = arith.constant 0 : index
    %c2_433 = arith.constant 2 : index
    %c44_434 = arith.constant 44 : index
    %383 = vector.load %arg2[%c0_431, %c0_432, %c2_433, %c44_434] : memref<1x1x4x506xf32, #tpu.memory_space<vmem>>, vector<1x1x1x352xf32>
    %384 = vector.shape_cast %383 : vector<1x1x1x352xf32> to vector<352xf32>
    %385 = vector.shape_cast %384 : vector<352xf32> to vector<1x352xf32>
    %c0_435 = arith.constant 0 : index
    %c0_436 = arith.constant 0 : index
    %c2_437 = arith.constant 2 : index
    %c45_438 = arith.constant 45 : index
    %386 = vector.load %arg2[%c0_435, %c0_436, %c2_437, %c45_438] : memref<1x1x4x506xf32, #tpu.memory_space<vmem>>, vector<1x1x1x352xf32>
    %387 = vector.shape_cast %386 : vector<1x1x1x352xf32> to vector<352xf32>
    %388 = vector.shape_cast %387 : vector<352xf32> to vector<1x352xf32>
    %c0_439 = arith.constant 0 : index
    %c0_440 = arith.constant 0 : index
    %c2_441 = arith.constant 2 : index
    %c46_442 = arith.constant 46 : index
    %389 = vector.load %arg2[%c0_439, %c0_440, %c2_441, %c46_442] : memref<1x1x4x506xf32, #tpu.memory_space<vmem>>, vector<1x1x1x352xf32>
    %390 = vector.shape_cast %389 : vector<1x1x1x352xf32> to vector<352xf32>
    %391 = vector.shape_cast %390 : vector<352xf32> to vector<1x352xf32>
    %c0_443 = arith.constant 0 : index
    %c0_444 = arith.constant 0 : index
    %c2_445 = arith.constant 2 : index
    %c47_446 = arith.constant 47 : index
    %392 = vector.load %arg2[%c0_443, %c0_444, %c2_445, %c47_446] : memref<1x1x4x506xf32, #tpu.memory_space<vmem>>, vector<1x1x1x352xf32>
    %393 = vector.shape_cast %392 : vector<1x1x1x352xf32> to vector<352xf32>
    %394 = vector.shape_cast %393 : vector<352xf32> to vector<1x352xf32>
    %c0_447 = arith.constant 0 : index
    %c0_448 = arith.constant 0 : index
    %c2_449 = arith.constant 2 : index
    %c48_450 = arith.constant 48 : index
    %395 = vector.load %arg2[%c0_447, %c0_448, %c2_449, %c48_450] : memref<1x1x4x506xf32, #tpu.memory_space<vmem>>, vector<1x1x1x352xf32>
    %396 = vector.shape_cast %395 : vector<1x1x1x352xf32> to vector<352xf32>
    %397 = vector.shape_cast %396 : vector<352xf32> to vector<1x352xf32>
    %c0_451 = arith.constant 0 : index
    %c0_452 = arith.constant 0 : index
    %c2_453 = arith.constant 2 : index
    %c49_454 = arith.constant 49 : index
    %398 = vector.load %arg2[%c0_451, %c0_452, %c2_453, %c49_454] : memref<1x1x4x506xf32, #tpu.memory_space<vmem>>, vector<1x1x1x352xf32>
    %399 = vector.shape_cast %398 : vector<1x1x1x352xf32> to vector<352xf32>
    %400 = vector.shape_cast %399 : vector<352xf32> to vector<1x352xf32>
    %c0_455 = arith.constant 0 : index
    %c0_456 = arith.constant 0 : index
    %c2_457 = arith.constant 2 : index
    %c50_458 = arith.constant 50 : index
    %401 = vector.load %arg2[%c0_455, %c0_456, %c2_457, %c50_458] : memref<1x1x4x506xf32, #tpu.memory_space<vmem>>, vector<1x1x1x352xf32>
    %402 = vector.shape_cast %401 : vector<1x1x1x352xf32> to vector<352xf32>
    %403 = vector.shape_cast %402 : vector<352xf32> to vector<1x352xf32>
    %c0_459 = arith.constant 0 : index
    %c0_460 = arith.constant 0 : index
    %c2_461 = arith.constant 2 : index
    %c66_462 = arith.constant 66 : index
    %404 = vector.load %arg2[%c0_459, %c0_460, %c2_461, %c66_462] : memref<1x1x4x506xf32, #tpu.memory_space<vmem>>, vector<1x1x1x352xf32>
    %405 = vector.shape_cast %404 : vector<1x1x1x352xf32> to vector<352xf32>
    %406 = vector.shape_cast %405 : vector<352xf32> to vector<1x352xf32>
    %c0_463 = arith.constant 0 : index
    %c0_464 = arith.constant 0 : index
    %c2_465 = arith.constant 2 : index
    %c67_466 = arith.constant 67 : index
    %407 = vector.load %arg2[%c0_463, %c0_464, %c2_465, %c67_466] : memref<1x1x4x506xf32, #tpu.memory_space<vmem>>, vector<1x1x1x352xf32>
    %408 = vector.shape_cast %407 : vector<1x1x1x352xf32> to vector<352xf32>
    %409 = vector.shape_cast %408 : vector<352xf32> to vector<1x352xf32>
    %c0_467 = arith.constant 0 : index
    %c0_468 = arith.constant 0 : index
    %c2_469 = arith.constant 2 : index
    %c68_470 = arith.constant 68 : index
    %410 = vector.load %arg2[%c0_467, %c0_468, %c2_469, %c68_470] : memref<1x1x4x506xf32, #tpu.memory_space<vmem>>, vector<1x1x1x352xf32>
    %411 = vector.shape_cast %410 : vector<1x1x1x352xf32> to vector<352xf32>
    %412 = vector.shape_cast %411 : vector<352xf32> to vector<1x352xf32>
    %c0_471 = arith.constant 0 : index
    %c0_472 = arith.constant 0 : index
    %c2_473 = arith.constant 2 : index
    %c69_474 = arith.constant 69 : index
    %413 = vector.load %arg2[%c0_471, %c0_472, %c2_473, %c69_474] : memref<1x1x4x506xf32, #tpu.memory_space<vmem>>, vector<1x1x1x352xf32>
    %414 = vector.shape_cast %413 : vector<1x1x1x352xf32> to vector<352xf32>
    %415 = vector.shape_cast %414 : vector<352xf32> to vector<1x352xf32>
    %c0_475 = arith.constant 0 : index
    %c0_476 = arith.constant 0 : index
    %c2_477 = arith.constant 2 : index
    %c70_478 = arith.constant 70 : index
    %416 = vector.load %arg2[%c0_475, %c0_476, %c2_477, %c70_478] : memref<1x1x4x506xf32, #tpu.memory_space<vmem>>, vector<1x1x1x352xf32>
    %417 = vector.shape_cast %416 : vector<1x1x1x352xf32> to vector<352xf32>
    %418 = vector.shape_cast %417 : vector<352xf32> to vector<1x352xf32>
    %c0_479 = arith.constant 0 : index
    %c0_480 = arith.constant 0 : index
    %c2_481 = arith.constant 2 : index
    %c71_482 = arith.constant 71 : index
    %419 = vector.load %arg2[%c0_479, %c0_480, %c2_481, %c71_482] : memref<1x1x4x506xf32, #tpu.memory_space<vmem>>, vector<1x1x1x352xf32>
    %420 = vector.shape_cast %419 : vector<1x1x1x352xf32> to vector<352xf32>
    %421 = vector.shape_cast %420 : vector<352xf32> to vector<1x352xf32>
    %c0_483 = arith.constant 0 : index
    %c0_484 = arith.constant 0 : index
    %c2_485 = arith.constant 2 : index
    %c72_486 = arith.constant 72 : index
    %422 = vector.load %arg2[%c0_483, %c0_484, %c2_485, %c72_486] : memref<1x1x4x506xf32, #tpu.memory_space<vmem>>, vector<1x1x1x352xf32>
    %423 = vector.shape_cast %422 : vector<1x1x1x352xf32> to vector<352xf32>
    %424 = vector.shape_cast %423 : vector<352xf32> to vector<1x352xf32>
    %c0_487 = arith.constant 0 : index
    %c0_488 = arith.constant 0 : index
    %c2_489 = arith.constant 2 : index
    %c88_490 = arith.constant 88 : index
    %425 = vector.load %arg2[%c0_487, %c0_488, %c2_489, %c88_490] : memref<1x1x4x506xf32, #tpu.memory_space<vmem>>, vector<1x1x1x352xf32>
    %426 = vector.shape_cast %425 : vector<1x1x1x352xf32> to vector<352xf32>
    %427 = vector.shape_cast %426 : vector<352xf32> to vector<1x352xf32>
    %c0_491 = arith.constant 0 : index
    %c0_492 = arith.constant 0 : index
    %c2_493 = arith.constant 2 : index
    %c89_494 = arith.constant 89 : index
    %428 = vector.load %arg2[%c0_491, %c0_492, %c2_493, %c89_494] : memref<1x1x4x506xf32, #tpu.memory_space<vmem>>, vector<1x1x1x352xf32>
    %429 = vector.shape_cast %428 : vector<1x1x1x352xf32> to vector<352xf32>
    %430 = vector.shape_cast %429 : vector<352xf32> to vector<1x352xf32>
    %c0_495 = arith.constant 0 : index
    %c0_496 = arith.constant 0 : index
    %c2_497 = arith.constant 2 : index
    %c90_498 = arith.constant 90 : index
    %431 = vector.load %arg2[%c0_495, %c0_496, %c2_497, %c90_498] : memref<1x1x4x506xf32, #tpu.memory_space<vmem>>, vector<1x1x1x352xf32>
    %432 = vector.shape_cast %431 : vector<1x1x1x352xf32> to vector<352xf32>
    %433 = vector.shape_cast %432 : vector<352xf32> to vector<1x352xf32>
    %c0_499 = arith.constant 0 : index
    %c0_500 = arith.constant 0 : index
    %c2_501 = arith.constant 2 : index
    %c91_502 = arith.constant 91 : index
    %434 = vector.load %arg2[%c0_499, %c0_500, %c2_501, %c91_502] : memref<1x1x4x506xf32, #tpu.memory_space<vmem>>, vector<1x1x1x352xf32>
    %435 = vector.shape_cast %434 : vector<1x1x1x352xf32> to vector<352xf32>
    %436 = vector.shape_cast %435 : vector<352xf32> to vector<1x352xf32>
    %c0_503 = arith.constant 0 : index
    %c0_504 = arith.constant 0 : index
    %c2_505 = arith.constant 2 : index
    %c92_506 = arith.constant 92 : index
    %437 = vector.load %arg2[%c0_503, %c0_504, %c2_505, %c92_506] : memref<1x1x4x506xf32, #tpu.memory_space<vmem>>, vector<1x1x1x352xf32>
    %438 = vector.shape_cast %437 : vector<1x1x1x352xf32> to vector<352xf32>
    %439 = vector.shape_cast %438 : vector<352xf32> to vector<1x352xf32>
    %c0_507 = arith.constant 0 : index
    %c0_508 = arith.constant 0 : index
    %c2_509 = arith.constant 2 : index
    %c93_510 = arith.constant 93 : index
    %440 = vector.load %arg2[%c0_507, %c0_508, %c2_509, %c93_510] : memref<1x1x4x506xf32, #tpu.memory_space<vmem>>, vector<1x1x1x352xf32>
    %441 = vector.shape_cast %440 : vector<1x1x1x352xf32> to vector<352xf32>
    %442 = vector.shape_cast %441 : vector<352xf32> to vector<1x352xf32>
    %c0_511 = arith.constant 0 : index
    %c0_512 = arith.constant 0 : index
    %c2_513 = arith.constant 2 : index
    %c94_514 = arith.constant 94 : index
    %443 = vector.load %arg2[%c0_511, %c0_512, %c2_513, %c94_514] : memref<1x1x4x506xf32, #tpu.memory_space<vmem>>, vector<1x1x1x352xf32>
    %444 = vector.shape_cast %443 : vector<1x1x1x352xf32> to vector<352xf32>
    %445 = vector.shape_cast %444 : vector<352xf32> to vector<1x352xf32>
    %c0_515 = arith.constant 0 : index
    %c0_516 = arith.constant 0 : index
    %c2_517 = arith.constant 2 : index
    %c110_518 = arith.constant 110 : index
    %446 = vector.load %arg2[%c0_515, %c0_516, %c2_517, %c110_518] : memref<1x1x4x506xf32, #tpu.memory_space<vmem>>, vector<1x1x1x352xf32>
    %447 = vector.shape_cast %446 : vector<1x1x1x352xf32> to vector<352xf32>
    %448 = vector.shape_cast %447 : vector<352xf32> to vector<1x352xf32>
    %c0_519 = arith.constant 0 : index
    %c0_520 = arith.constant 0 : index
    %c2_521 = arith.constant 2 : index
    %c111_522 = arith.constant 111 : index
    %449 = vector.load %arg2[%c0_519, %c0_520, %c2_521, %c111_522] : memref<1x1x4x506xf32, #tpu.memory_space<vmem>>, vector<1x1x1x352xf32>
    %450 = vector.shape_cast %449 : vector<1x1x1x352xf32> to vector<352xf32>
    %451 = vector.shape_cast %450 : vector<352xf32> to vector<1x352xf32>
    %c0_523 = arith.constant 0 : index
    %c0_524 = arith.constant 0 : index
    %c2_525 = arith.constant 2 : index
    %c112_526 = arith.constant 112 : index
    %452 = vector.load %arg2[%c0_523, %c0_524, %c2_525, %c112_526] : memref<1x1x4x506xf32, #tpu.memory_space<vmem>>, vector<1x1x1x352xf32>
    %453 = vector.shape_cast %452 : vector<1x1x1x352xf32> to vector<352xf32>
    %454 = vector.shape_cast %453 : vector<352xf32> to vector<1x352xf32>
    %c0_527 = arith.constant 0 : index
    %c0_528 = arith.constant 0 : index
    %c2_529 = arith.constant 2 : index
    %c113_530 = arith.constant 113 : index
    %455 = vector.load %arg2[%c0_527, %c0_528, %c2_529, %c113_530] : memref<1x1x4x506xf32, #tpu.memory_space<vmem>>, vector<1x1x1x352xf32>
    %456 = vector.shape_cast %455 : vector<1x1x1x352xf32> to vector<352xf32>
    %457 = vector.shape_cast %456 : vector<352xf32> to vector<1x352xf32>
    %c0_531 = arith.constant 0 : index
    %c0_532 = arith.constant 0 : index
    %c2_533 = arith.constant 2 : index
    %c114_534 = arith.constant 114 : index
    %458 = vector.load %arg2[%c0_531, %c0_532, %c2_533, %c114_534] : memref<1x1x4x506xf32, #tpu.memory_space<vmem>>, vector<1x1x1x352xf32>
    %459 = vector.shape_cast %458 : vector<1x1x1x352xf32> to vector<352xf32>
    %460 = vector.shape_cast %459 : vector<352xf32> to vector<1x352xf32>
    %c0_535 = arith.constant 0 : index
    %c0_536 = arith.constant 0 : index
    %c2_537 = arith.constant 2 : index
    %c115_538 = arith.constant 115 : index
    %461 = vector.load %arg2[%c0_535, %c0_536, %c2_537, %c115_538] : memref<1x1x4x506xf32, #tpu.memory_space<vmem>>, vector<1x1x1x352xf32>
    %462 = vector.shape_cast %461 : vector<1x1x1x352xf32> to vector<352xf32>
    %463 = vector.shape_cast %462 : vector<352xf32> to vector<1x352xf32>
    %c0_539 = arith.constant 0 : index
    %c0_540 = arith.constant 0 : index
    %c2_541 = arith.constant 2 : index
    %c116_542 = arith.constant 116 : index
    %464 = vector.load %arg2[%c0_539, %c0_540, %c2_541, %c116_542] : memref<1x1x4x506xf32, #tpu.memory_space<vmem>>, vector<1x1x1x352xf32>
    %465 = vector.shape_cast %464 : vector<1x1x1x352xf32> to vector<352xf32>
    %466 = vector.shape_cast %465 : vector<352xf32> to vector<1x352xf32>
    %c0_543 = arith.constant 0 : index
    %c0_544 = arith.constant 0 : index
    %c2_545 = arith.constant 2 : index
    %c132_546 = arith.constant 132 : index
    %467 = vector.load %arg2[%c0_543, %c0_544, %c2_545, %c132_546] : memref<1x1x4x506xf32, #tpu.memory_space<vmem>>, vector<1x1x1x352xf32>
    %468 = vector.shape_cast %467 : vector<1x1x1x352xf32> to vector<352xf32>
    %469 = vector.shape_cast %468 : vector<352xf32> to vector<1x352xf32>
    %c0_547 = arith.constant 0 : index
    %c0_548 = arith.constant 0 : index
    %c2_549 = arith.constant 2 : index
    %c133_550 = arith.constant 133 : index
    %470 = vector.load %arg2[%c0_547, %c0_548, %c2_549, %c133_550] : memref<1x1x4x506xf32, #tpu.memory_space<vmem>>, vector<1x1x1x352xf32>
    %471 = vector.shape_cast %470 : vector<1x1x1x352xf32> to vector<352xf32>
    %472 = vector.shape_cast %471 : vector<352xf32> to vector<1x352xf32>
    %c0_551 = arith.constant 0 : index
    %c0_552 = arith.constant 0 : index
    %c2_553 = arith.constant 2 : index
    %c134_554 = arith.constant 134 : index
    %473 = vector.load %arg2[%c0_551, %c0_552, %c2_553, %c134_554] : memref<1x1x4x506xf32, #tpu.memory_space<vmem>>, vector<1x1x1x352xf32>
    %474 = vector.shape_cast %473 : vector<1x1x1x352xf32> to vector<352xf32>
    %475 = vector.shape_cast %474 : vector<352xf32> to vector<1x352xf32>
    %c0_555 = arith.constant 0 : index
    %c0_556 = arith.constant 0 : index
    %c2_557 = arith.constant 2 : index
    %c135_558 = arith.constant 135 : index
    %476 = vector.load %arg2[%c0_555, %c0_556, %c2_557, %c135_558] : memref<1x1x4x506xf32, #tpu.memory_space<vmem>>, vector<1x1x1x352xf32>
    %477 = vector.shape_cast %476 : vector<1x1x1x352xf32> to vector<352xf32>
    %478 = vector.shape_cast %477 : vector<352xf32> to vector<1x352xf32>
    %c0_559 = arith.constant 0 : index
    %c0_560 = arith.constant 0 : index
    %c2_561 = arith.constant 2 : index
    %c136_562 = arith.constant 136 : index
    %479 = vector.load %arg2[%c0_559, %c0_560, %c2_561, %c136_562] : memref<1x1x4x506xf32, #tpu.memory_space<vmem>>, vector<1x1x1x352xf32>
    %480 = vector.shape_cast %479 : vector<1x1x1x352xf32> to vector<352xf32>
    %481 = vector.shape_cast %480 : vector<352xf32> to vector<1x352xf32>
    %c0_563 = arith.constant 0 : index
    %c0_564 = arith.constant 0 : index
    %c2_565 = arith.constant 2 : index
    %c137_566 = arith.constant 137 : index
    %482 = vector.load %arg2[%c0_563, %c0_564, %c2_565, %c137_566] : memref<1x1x4x506xf32, #tpu.memory_space<vmem>>, vector<1x1x1x352xf32>
    %483 = vector.shape_cast %482 : vector<1x1x1x352xf32> to vector<352xf32>
    %484 = vector.shape_cast %483 : vector<352xf32> to vector<1x352xf32>
    %c0_567 = arith.constant 0 : index
    %c0_568 = arith.constant 0 : index
    %c2_569 = arith.constant 2 : index
    %c138_570 = arith.constant 138 : index
    %485 = vector.load %arg2[%c0_567, %c0_568, %c2_569, %c138_570] : memref<1x1x4x506xf32, #tpu.memory_space<vmem>>, vector<1x1x1x352xf32>
    %486 = vector.shape_cast %485 : vector<1x1x1x352xf32> to vector<352xf32>
    %487 = vector.shape_cast %486 : vector<352xf32> to vector<1x352xf32>
    %488 = tpu.concatenate %343, %346, %349, %352, %355, %358, %361, %364, %367, %370, %373, %376, %379, %382, %385, %388 in 0 : vector<1x352xf32>, vector<1x352xf32>, vector<1x352xf32>, vector<1x352xf32>, vector<1x352xf32>, vector<1x352xf32>, vector<1x352xf32>, vector<1x352xf32>, vector<1x352xf32>, vector<1x352xf32>, vector<1x352xf32>, vector<1x352xf32>, vector<1x352xf32>, vector<1x352xf32>, vector<1x352xf32>, vector<1x352xf32> -> vector<16x352xf32>
    %489 = tpu.concatenate %391, %394, %397, %400, %403, %406, %409, %412, %415, %418, %421, %424, %427, %430, %433, %436 in 0 : vector<1x352xf32>, vector<1x352xf32>, vector<1x352xf32>, vector<1x352xf32>, vector<1x352xf32>, vector<1x352xf32>, vector<1x352xf32>, vector<1x352xf32>, vector<1x352xf32>, vector<1x352xf32>, vector<1x352xf32>, vector<1x352xf32>, vector<1x352xf32>, vector<1x352xf32>, vector<1x352xf32>, vector<1x352xf32> -> vector<16x352xf32>
    %490 = tpu.concatenate %439, %442, %445, %448, %451, %454, %457, %460, %463, %466, %469, %472, %475, %478, %481, %484 in 0 : vector<1x352xf32>, vector<1x352xf32>, vector<1x352xf32>, vector<1x352xf32>, vector<1x352xf32>, vector<1x352xf32>, vector<1x352xf32>, vector<1x352xf32>, vector<1x352xf32>, vector<1x352xf32>, vector<1x352xf32>, vector<1x352xf32>, vector<1x352xf32>, vector<1x352xf32>, vector<1x352xf32>, vector<1x352xf32> -> vector<16x352xf32>
    %491 = tpu.concatenate %487, %6, %9, %12, %15, %18, %21, %24 in 0 : vector<1x352xf32>, vector<1x352xf32>, vector<1x352xf32>, vector<1x352xf32>, vector<1x352xf32>, vector<1x352xf32>, vector<1x352xf32>, vector<1x352xf32> -> vector<8x352xf32>
    %492 = tpu.concatenate %488, %489, %490, %491 in 0 : vector<16x352xf32>, vector<16x352xf32>, vector<16x352xf32>, vector<8x352xf32> -> vector<56x352xf32>
    %c0_571 = arith.constant 0 : index
    %c2_572 = arith.constant 2 : index
    %c0_573 = arith.constant 0 : index
    %c0_574 = arith.constant 0 : index
    %493 = vector.load %arg4[%c0_571, %c2_572, %c0_573, %c0_574] : memref<1x4x4x56xf32, #tpu.memory_space<vmem>>, vector<1x1x4x56xf32>
    %494 = vector.shape_cast %493 : vector<1x1x4x56xf32> to vector<4x56xf32>
    %cst_575 = arith.constant dense<0.000000e+00> : vector<4x352xf32>
    %495 = tpu.matmul %494, %492, %cst_575 {dimension_numbers = #tpu.dot_dimension_numbers<[1], [0], [0], [1], [0, 0, 1, 1], [], []>} : vector<4x56xf32>, vector<56x352xf32>, vector<4x352xf32> -> vector<4x352xf32>
    %496 = vector.broadcast %15 : vector<1x352xf32> to vector<4x352xf32>
    %497 = arith.mulf %495, %496 : vector<4x352xf32>
    %c8 = arith.constant 8 : index
    %c44_576 = arith.constant 44 : index
    %498 = vector.load %arg9[%c8, %c44_576] : memref<16x440xf32, #tpu.memory_space<vmem>>, vector<4x352xf32>
    tpu.vector_store %arg9[%c8, %c44_576], %497 {strides = array<i32>} : memref<16x440xf32, #tpu.memory_space<vmem>>, vector<4x352xf32>,
    %c0_577 = arith.constant 0 : index
    %c0_578 = arith.constant 0 : index
    %c3_579 = arith.constant 3 : index
    %c0_580 = arith.constant 0 : index
    %499 = vector.load %arg2[%c0_577, %c0_578, %c3_579, %c0_580] : memref<1x1x4x506xf32, #tpu.memory_space<vmem>>, vector<1x1x1x352xf32>
    %500 = vector.shape_cast %499 : vector<1x1x1x352xf32> to vector<352xf32>
    %501 = vector.shape_cast %500 : vector<352xf32> to vector<1x352xf32>
    %c0_581 = arith.constant 0 : index
    %c0_582 = arith.constant 0 : index
    %c3_583 = arith.constant 3 : index
    %c1_584 = arith.constant 1 : index
    %502 = vector.load %arg2[%c0_581, %c0_582, %c3_583, %c1_584] : memref<1x1x4x506xf32, #tpu.memory_space<vmem>>, vector<1x1x1x352xf32>
    %503 = vector.shape_cast %502 : vector<1x1x1x352xf32> to vector<352xf32>
    %504 = vector.shape_cast %503 : vector<352xf32> to vector<1x352xf32>
    %c0_585 = arith.constant 0 : index
    %c0_586 = arith.constant 0 : index
    %c3_587 = arith.constant 3 : index
    %c2_588 = arith.constant 2 : index
    %505 = vector.load %arg2[%c0_585, %c0_586, %c3_587, %c2_588] : memref<1x1x4x506xf32, #tpu.memory_space<vmem>>, vector<1x1x1x352xf32>
    %506 = vector.shape_cast %505 : vector<1x1x1x352xf32> to vector<352xf32>
    %507 = vector.shape_cast %506 : vector<352xf32> to vector<1x352xf32>
    %c0_589 = arith.constant 0 : index
    %c0_590 = arith.constant 0 : index
    %c3_591 = arith.constant 3 : index
    %c3_592 = arith.constant 3 : index
    %508 = vector.load %arg2[%c0_589, %c0_590, %c3_591, %c3_592] : memref<1x1x4x506xf32, #tpu.memory_space<vmem>>, vector<1x1x1x352xf32>
    %509 = vector.shape_cast %508 : vector<1x1x1x352xf32> to vector<352xf32>
    %510 = vector.shape_cast %509 : vector<352xf32> to vector<1x352xf32>
    %c0_593 = arith.constant 0 : index
    %c0_594 = arith.constant 0 : index
    %c3_595 = arith.constant 3 : index
    %c4_596 = arith.constant 4 : index
    %511 = vector.load %arg2[%c0_593, %c0_594, %c3_595, %c4_596] : memref<1x1x4x506xf32, #tpu.memory_space<vmem>>, vector<1x1x1x352xf32>
    %512 = vector.shape_cast %511 : vector<1x1x1x352xf32> to vector<352xf32>
    %513 = vector.shape_cast %512 : vector<352xf32> to vector<1x352xf32>
    %c0_597 = arith.constant 0 : index
    %c0_598 = arith.constant 0 : index
    %c3_599 = arith.constant 3 : index
    %c5_600 = arith.constant 5 : index
    %514 = vector.load %arg2[%c0_597, %c0_598, %c3_599, %c5_600] : memref<1x1x4x506xf32, #tpu.memory_space<vmem>>, vector<1x1x1x352xf32>
    %515 = vector.shape_cast %514 : vector<1x1x1x352xf32> to vector<352xf32>
    %516 = vector.shape_cast %515 : vector<352xf32> to vector<1x352xf32>
    %c0_601 = arith.constant 0 : index
    %c0_602 = arith.constant 0 : index
    %c3_603 = arith.constant 3 : index
    %c6_604 = arith.constant 6 : index
    %517 = vector.load %arg2[%c0_601, %c0_602, %c3_603, %c6_604] : memref<1x1x4x506xf32, #tpu.memory_space<vmem>>, vector<1x1x1x352xf32>
    %518 = vector.shape_cast %517 : vector<1x1x1x352xf32> to vector<352xf32>
    %519 = vector.shape_cast %518 : vector<352xf32> to vector<1x352xf32>
    %c0_605 = arith.constant 0 : index
    %c0_606 = arith.constant 0 : index
    %c3_607 = arith.constant 3 : index
    %c22_608 = arith.constant 22 : index
    %520 = vector.load %arg2[%c0_605, %c0_606, %c3_607, %c22_608] : memref<1x1x4x506xf32, #tpu.memory_space<vmem>>, vector<1x1x1x352xf32>
    %521 = vector.shape_cast %520 : vector<1x1x1x352xf32> to vector<352xf32>
    %522 = vector.shape_cast %521 : vector<352xf32> to vector<1x352xf32>
    %c0_609 = arith.constant 0 : index
    %c0_610 = arith.constant 0 : index
    %c3_611 = arith.constant 3 : index
    %c23_612 = arith.constant 23 : index
    %523 = vector.load %arg2[%c0_609, %c0_610, %c3_611, %c23_612] : memref<1x1x4x506xf32, #tpu.memory_space<vmem>>, vector<1x1x1x352xf32>
    %524 = vector.shape_cast %523 : vector<1x1x1x352xf32> to vector<352xf32>
    %525 = vector.shape_cast %524 : vector<352xf32> to vector<1x352xf32>
    %c0_613 = arith.constant 0 : index
    %c0_614 = arith.constant 0 : index
    %c3_615 = arith.constant 3 : index
    %c24_616 = arith.constant 24 : index
    %526 = vector.load %arg2[%c0_613, %c0_614, %c3_615, %c24_616] : memref<1x1x4x506xf32, #tpu.memory_space<vmem>>, vector<1x1x1x352xf32>
    %527 = vector.shape_cast %526 : vector<1x1x1x352xf32> to vector<352xf32>
    %528 = vector.shape_cast %527 : vector<352xf32> to vector<1x352xf32>
    %c0_617 = arith.constant 0 : index
    %c0_618 = arith.constant 0 : index
    %c3_619 = arith.constant 3 : index
    %c25_620 = arith.constant 25 : index
    %529 = vector.load %arg2[%c0_617, %c0_618, %c3_619, %c25_620] : memref<1x1x4x506xf32, #tpu.memory_space<vmem>>, vector<1x1x1x352xf32>
    %530 = vector.shape_cast %529 : vector<1x1x1x352xf32> to vector<352xf32>
    %531 = vector.shape_cast %530 : vector<352xf32> to vector<1x352xf32>
    %c0_621 = arith.constant 0 : index
    %c0_622 = arith.constant 0 : index
    %c3_623 = arith.constant 3 : index
    %c26_624 = arith.constant 26 : index
    %532 = vector.load %arg2[%c0_621, %c0_622, %c3_623, %c26_624] : memref<1x1x4x506xf32, #tpu.memory_space<vmem>>, vector<1x1x1x352xf32>
    %533 = vector.shape_cast %532 : vector<1x1x1x352xf32> to vector<352xf32>
    %534 = vector.shape_cast %533 : vector<352xf32> to vector<1x352xf32>
    %c0_625 = arith.constant 0 : index
    %c0_626 = arith.constant 0 : index
    %c3_627 = arith.constant 3 : index
    %c27_628 = arith.constant 27 : index
    %535 = vector.load %arg2[%c0_625, %c0_626, %c3_627, %c27_628] : memref<1x1x4x506xf32, #tpu.memory_space<vmem>>, vector<1x1x1x352xf32>
    %536 = vector.shape_cast %535 : vector<1x1x1x352xf32> to vector<352xf32>
    %537 = vector.shape_cast %536 : vector<352xf32> to vector<1x352xf32>
    %c0_629 = arith.constant 0 : index
    %c0_630 = arith.constant 0 : index
    %c3_631 = arith.constant 3 : index
    %c28_632 = arith.constant 28 : index
    %538 = vector.load %arg2[%c0_629, %c0_630, %c3_631, %c28_632] : memref<1x1x4x506xf32, #tpu.memory_space<vmem>>, vector<1x1x1x352xf32>
    %539 = vector.shape_cast %538 : vector<1x1x1x352xf32> to vector<352xf32>
    %540 = vector.shape_cast %539 : vector<352xf32> to vector<1x352xf32>
    %c0_633 = arith.constant 0 : index
    %c0_634 = arith.constant 0 : index
    %c3_635 = arith.constant 3 : index
    %c44_636 = arith.constant 44 : index
    %541 = vector.load %arg2[%c0_633, %c0_634, %c3_635, %c44_636] : memref<1x1x4x506xf32, #tpu.memory_space<vmem>>, vector<1x1x1x352xf32>
    %542 = vector.shape_cast %541 : vector<1x1x1x352xf32> to vector<352xf32>
    %543 = vector.shape_cast %542 : vector<352xf32> to vector<1x352xf32>
    %c0_637 = arith.constant 0 : index
    %c0_638 = arith.constant 0 : index
    %c3_639 = arith.constant 3 : index
    %c45_640 = arith.constant 45 : index
    %544 = vector.load %arg2[%c0_637, %c0_638, %c3_639, %c45_640] : memref<1x1x4x506xf32, #tpu.memory_space<vmem>>, vector<1x1x1x352xf32>
    %545 = vector.shape_cast %544 : vector<1x1x1x352xf32> to vector<352xf32>
    %546 = vector.shape_cast %545 : vector<352xf32> to vector<1x352xf32>
    %c0_641 = arith.constant 0 : index
    %c0_642 = arith.constant 0 : index
    %c3_643 = arith.constant 3 : index
    %c46_644 = arith.constant 46 : index
    %547 = vector.load %arg2[%c0_641, %c0_642, %c3_643, %c46_644] : memref<1x1x4x506xf32, #tpu.memory_space<vmem>>, vector<1x1x1x352xf32>
    %548 = vector.shape_cast %547 : vector<1x1x1x352xf32> to vector<352xf32>
    %549 = vector.shape_cast %548 : vector<352xf32> to vector<1x352xf32>
    %c0_645 = arith.constant 0 : index
    %c0_646 = arith.constant 0 : index
    %c3_647 = arith.constant 3 : index
    %c47_648 = arith.constant 47 : index
    %550 = vector.load %arg2[%c0_645, %c0_646, %c3_647, %c47_648] : memref<1x1x4x506xf32, #tpu.memory_space<vmem>>, vector<1x1x1x352xf32>
    %551 = vector.shape_cast %550 : vector<1x1x1x352xf32> to vector<352xf32>
    %552 = vector.shape_cast %551 : vector<352xf32> to vector<1x352xf32>
    %c0_649 = arith.constant 0 : index
    %c0_650 = arith.constant 0 : index
    %c3_651 = arith.constant 3 : index
    %c48_652 = arith.constant 48 : index
    %553 = vector.load %arg2[%c0_649, %c0_650, %c3_651, %c48_652] : memref<1x1x4x506xf32, #tpu.memory_space<vmem>>, vector<1x1x1x352xf32>
    %554 = vector.shape_cast %553 : vector<1x1x1x352xf32> to vector<352xf32>
    %555 = vector.shape_cast %554 : vector<352xf32> to vector<1x352xf32>
    %c0_653 = arith.constant 0 : index
    %c0_654 = arith.constant 0 : index
    %c3_655 = arith.constant 3 : index
    %c49_656 = arith.constant 49 : index
    %556 = vector.load %arg2[%c0_653, %c0_654, %c3_655, %c49_656] : memref<1x1x4x506xf32, #tpu.memory_space<vmem>>, vector<1x1x1x352xf32>
    %557 = vector.shape_cast %556 : vector<1x1x1x352xf32> to vector<352xf32>
    %558 = vector.shape_cast %557 : vector<352xf32> to vector<1x352xf32>
    %c0_657 = arith.constant 0 : index
    %c0_658 = arith.constant 0 : index
    %c3_659 = arith.constant 3 : index
    %c50_660 = arith.constant 50 : index
    %559 = vector.load %arg2[%c0_657, %c0_658, %c3_659, %c50_660] : memref<1x1x4x506xf32, #tpu.memory_space<vmem>>, vector<1x1x1x352xf32>
    %560 = vector.shape_cast %559 : vector<1x1x1x352xf32> to vector<352xf32>
    %561 = vector.shape_cast %560 : vector<352xf32> to vector<1x352xf32>
    %c0_661 = arith.constant 0 : index
    %c0_662 = arith.constant 0 : index
    %c3_663 = arith.constant 3 : index
    %c66_664 = arith.constant 66 : index
    %562 = vector.load %arg2[%c0_661, %c0_662, %c3_663, %c66_664] : memref<1x1x4x506xf32, #tpu.memory_space<vmem>>, vector<1x1x1x352xf32>
    %563 = vector.shape_cast %562 : vector<1x1x1x352xf32> to vector<352xf32>
    %564 = vector.shape_cast %563 : vector<352xf32> to vector<1x352xf32>
    %c0_665 = arith.constant 0 : index
    %c0_666 = arith.constant 0 : index
    %c3_667 = arith.constant 3 : index
    %c67_668 = arith.constant 67 : index
    %565 = vector.load %arg2[%c0_665, %c0_666, %c3_667, %c67_668] : memref<1x1x4x506xf32, #tpu.memory_space<vmem>>, vector<1x1x1x352xf32>
    %566 = vector.shape_cast %565 : vector<1x1x1x352xf32> to vector<352xf32>
    %567 = vector.shape_cast %566 : vector<352xf32> to vector<1x352xf32>
    %c0_669 = arith.constant 0 : index
    %c0_670 = arith.constant 0 : index
    %c3_671 = arith.constant 3 : index
    %c68_672 = arith.constant 68 : index
    %568 = vector.load %arg2[%c0_669, %c0_670, %c3_671, %c68_672] : memref<1x1x4x506xf32, #tpu.memory_space<vmem>>, vector<1x1x1x352xf32>
    %569 = vector.shape_cast %568 : vector<1x1x1x352xf32> to vector<352xf32>
    %570 = vector.shape_cast %569 : vector<352xf32> to vector<1x352xf32>
    %c0_673 = arith.constant 0 : index
    %c0_674 = arith.constant 0 : index
    %c3_675 = arith.constant 3 : index
    %c69_676 = arith.constant 69 : index
    %571 = vector.load %arg2[%c0_673, %c0_674, %c3_675, %c69_676] : memref<1x1x4x506xf32, #tpu.memory_space<vmem>>, vector<1x1x1x352xf32>
    %572 = vector.shape_cast %571 : vector<1x1x1x352xf32> to vector<352xf32>
    %573 = vector.shape_cast %572 : vector<352xf32> to vector<1x352xf32>
    %c0_677 = arith.constant 0 : index
    %c0_678 = arith.constant 0 : index
    %c3_679 = arith.constant 3 : index
    %c70_680 = arith.constant 70 : index
    %574 = vector.load %arg2[%c0_677, %c0_678, %c3_679, %c70_680] : memref<1x1x4x506xf32, #tpu.memory_space<vmem>>, vector<1x1x1x352xf32>
    %575 = vector.shape_cast %574 : vector<1x1x1x352xf32> to vector<352xf32>
    %576 = vector.shape_cast %575 : vector<352xf32> to vector<1x352xf32>
    %c0_681 = arith.constant 0 : index
    %c0_682 = arith.constant 0 : index
    %c3_683 = arith.constant 3 : index
    %c71_684 = arith.constant 71 : index
    %577 = vector.load %arg2[%c0_681, %c0_682, %c3_683, %c71_684] : memref<1x1x4x506xf32, #tpu.memory_space<vmem>>, vector<1x1x1x352xf32>
    %578 = vector.shape_cast %577 : vector<1x1x1x352xf32> to vector<352xf32>
    %579 = vector.shape_cast %578 : vector<352xf32> to vector<1x352xf32>
    %c0_685 = arith.constant 0 : index
    %c0_686 = arith.constant 0 : index
    %c3_687 = arith.constant 3 : index
    %c72_688 = arith.constant 72 : index
    %580 = vector.load %arg2[%c0_685, %c0_686, %c3_687, %c72_688] : memref<1x1x4x506xf32, #tpu.memory_space<vmem>>, vector<1x1x1x352xf32>
    %581 = vector.shape_cast %580 : vector<1x1x1x352xf32> to vector<352xf32>
    %582 = vector.shape_cast %581 : vector<352xf32> to vector<1x352xf32>
    %c0_689 = arith.constant 0 : index
    %c0_690 = arith.constant 0 : index
    %c3_691 = arith.constant 3 : index
    %c88_692 = arith.constant 88 : index
    %583 = vector.load %arg2[%c0_689, %c0_690, %c3_691, %c88_692] : memref<1x1x4x506xf32, #tpu.memory_space<vmem>>, vector<1x1x1x352xf32>
    %584 = vector.shape_cast %583 : vector<1x1x1x352xf32> to vector<352xf32>
    %585 = vector.shape_cast %584 : vector<352xf32> to vector<1x352xf32>
    %c0_693 = arith.constant 0 : index
    %c0_694 = arith.constant 0 : index
    %c3_695 = arith.constant 3 : index
    %c89_696 = arith.constant 89 : index
    %586 = vector.load %arg2[%c0_693, %c0_694, %c3_695, %c89_696] : memref<1x1x4x506xf32, #tpu.memory_space<vmem>>, vector<1x1x1x352xf32>
    %587 = vector.shape_cast %586 : vector<1x1x1x352xf32> to vector<352xf32>
    %588 = vector.shape_cast %587 : vector<352xf32> to vector<1x352xf32>
    %c0_697 = arith.constant 0 : index
    %c0_698 = arith.constant 0 : index
    %c3_699 = arith.constant 3 : index
    %c90_700 = arith.constant 90 : index
    %589 = vector.load %arg2[%c0_697, %c0_698, %c3_699, %c90_700] : memref<1x1x4x506xf32, #tpu.memory_space<vmem>>, vector<1x1x1x352xf32>
    %590 = vector.shape_cast %589 : vector<1x1x1x352xf32> to vector<352xf32>
    %591 = vector.shape_cast %590 : vector<352xf32> to vector<1x352xf32>
    %c0_701 = arith.constant 0 : index
    %c0_702 = arith.constant 0 : index
    %c3_703 = arith.constant 3 : index
    %c91_704 = arith.constant 91 : index
    %592 = vector.load %arg2[%c0_701, %c0_702, %c3_703, %c91_704] : memref<1x1x4x506xf32, #tpu.memory_space<vmem>>, vector<1x1x1x352xf32>
    %593 = vector.shape_cast %592 : vector<1x1x1x352xf32> to vector<352xf32>
    %594 = vector.shape_cast %593 : vector<352xf32> to vector<1x352xf32>
    %c0_705 = arith.constant 0 : index
    %c0_706 = arith.constant 0 : index
    %c3_707 = arith.constant 3 : index
    %c92_708 = arith.constant 92 : index
    %595 = vector.load %arg2[%c0_705, %c0_706, %c3_707, %c92_708] : memref<1x1x4x506xf32, #tpu.memory_space<vmem>>, vector<1x1x1x352xf32>
    %596 = vector.shape_cast %595 : vector<1x1x1x352xf32> to vector<352xf32>
    %597 = vector.shape_cast %596 : vector<352xf32> to vector<1x352xf32>
    %c0_709 = arith.constant 0 : index
    %c0_710 = arith.constant 0 : index
    %c3_711 = arith.constant 3 : index
    %c93_712 = arith.constant 93 : index
    %598 = vector.load %arg2[%c0_709, %c0_710, %c3_711, %c93_712] : memref<1x1x4x506xf32, #tpu.memory_space<vmem>>, vector<1x1x1x352xf32>
    %599 = vector.shape_cast %598 : vector<1x1x1x352xf32> to vector<352xf32>
    %600 = vector.shape_cast %599 : vector<352xf32> to vector<1x352xf32>
    %c0_713 = arith.constant 0 : index
    %c0_714 = arith.constant 0 : index
    %c3_715 = arith.constant 3 : index
    %c94_716 = arith.constant 94 : index
    %601 = vector.load %arg2[%c0_713, %c0_714, %c3_715, %c94_716] : memref<1x1x4x506xf32, #tpu.memory_space<vmem>>, vector<1x1x1x352xf32>
    %602 = vector.shape_cast %601 : vector<1x1x1x352xf32> to vector<352xf32>
    %603 = vector.shape_cast %602 : vector<352xf32> to vector<1x352xf32>
    %c0_717 = arith.constant 0 : index
    %c0_718 = arith.constant 0 : index
    %c3_719 = arith.constant 3 : index
    %c110_720 = arith.constant 110 : index
    %604 = vector.load %arg2[%c0_717, %c0_718, %c3_719, %c110_720] : memref<1x1x4x506xf32, #tpu.memory_space<vmem>>, vector<1x1x1x352xf32>
    %605 = vector.shape_cast %604 : vector<1x1x1x352xf32> to vector<352xf32>
    %606 = vector.shape_cast %605 : vector<352xf32> to vector<1x352xf32>
    %c0_721 = arith.constant 0 : index
    %c0_722 = arith.constant 0 : index
    %c3_723 = arith.constant 3 : index
    %c111_724 = arith.constant 111 : index
    %607 = vector.load %arg2[%c0_721, %c0_722, %c3_723, %c111_724] : memref<1x1x4x506xf32, #tpu.memory_space<vmem>>, vector<1x1x1x352xf32>
    %608 = vector.shape_cast %607 : vector<1x1x1x352xf32> to vector<352xf32>
    %609 = vector.shape_cast %608 : vector<352xf32> to vector<1x352xf32>
    %c0_725 = arith.constant 0 : index
    %c0_726 = arith.constant 0 : index
    %c3_727 = arith.constant 3 : index
    %c112_728 = arith.constant 112 : index
    %610 = vector.load %arg2[%c0_725, %c0_726, %c3_727, %c112_728] : memref<1x1x4x506xf32, #tpu.memory_space<vmem>>, vector<1x1x1x352xf32>
    %611 = vector.shape_cast %610 : vector<1x1x1x352xf32> to vector<352xf32>
    %612 = vector.shape_cast %611 : vector<352xf32> to vector<1x352xf32>
    %c0_729 = arith.constant 0 : index
    %c0_730 = arith.constant 0 : index
    %c3_731 = arith.constant 3 : index
    %c113_732 = arith.constant 113 : index
    %613 = vector.load %arg2[%c0_729, %c0_730, %c3_731, %c113_732] : memref<1x1x4x506xf32, #tpu.memory_space<vmem>>, vector<1x1x1x352xf32>
    %614 = vector.shape_cast %613 : vector<1x1x1x352xf32> to vector<352xf32>
    %615 = vector.shape_cast %614 : vector<352xf32> to vector<1x352xf32>
    %c0_733 = arith.constant 0 : index
    %c0_734 = arith.constant 0 : index
    %c3_735 = arith.constant 3 : index
    %c114_736 = arith.constant 114 : index
    %616 = vector.load %arg2[%c0_733, %c0_734, %c3_735, %c114_736] : memref<1x1x4x506xf32, #tpu.memory_space<vmem>>, vector<1x1x1x352xf32>
    %617 = vector.shape_cast %616 : vector<1x1x1x352xf32> to vector<352xf32>
    %618 = vector.shape_cast %617 : vector<352xf32> to vector<1x352xf32>
    %c0_737 = arith.constant 0 : index
    %c0_738 = arith.constant 0 : index
    %c3_739 = arith.constant 3 : index
    %c115_740 = arith.constant 115 : index
    %619 = vector.load %arg2[%c0_737, %c0_738, %c3_739, %c115_740] : memref<1x1x4x506xf32, #tpu.memory_space<vmem>>, vector<1x1x1x352xf32>
    %620 = vector.shape_cast %619 : vector<1x1x1x352xf32> to vector<352xf32>
    %621 = vector.shape_cast %620 : vector<352xf32> to vector<1x352xf32>
    %c0_741 = arith.constant 0 : index
    %c0_742 = arith.constant 0 : index
    %c3_743 = arith.constant 3 : index
    %c116_744 = arith.constant 116 : index
    %622 = vector.load %arg2[%c0_741, %c0_742, %c3_743, %c116_744] : memref<1x1x4x506xf32, #tpu.memory_space<vmem>>, vector<1x1x1x352xf32>
    %623 = vector.shape_cast %622 : vector<1x1x1x352xf32> to vector<352xf32>
    %624 = vector.shape_cast %623 : vector<352xf32> to vector<1x352xf32>
    %c0_745 = arith.constant 0 : index
    %c0_746 = arith.constant 0 : index
    %c3_747 = arith.constant 3 : index
    %c132_748 = arith.constant 132 : index
    %625 = vector.load %arg2[%c0_745, %c0_746, %c3_747, %c132_748] : memref<1x1x4x506xf32, #tpu.memory_space<vmem>>, vector<1x1x1x352xf32>
    %626 = vector.shape_cast %625 : vector<1x1x1x352xf32> to vector<352xf32>
    %627 = vector.shape_cast %626 : vector<352xf32> to vector<1x352xf32>
    %c0_749 = arith.constant 0 : index
    %c0_750 = arith.constant 0 : index
    %c3_751 = arith.constant 3 : index
    %c133_752 = arith.constant 133 : index
    %628 = vector.load %arg2[%c0_749, %c0_750, %c3_751, %c133_752] : memref<1x1x4x506xf32, #tpu.memory_space<vmem>>, vector<1x1x1x352xf32>
    %629 = vector.shape_cast %628 : vector<1x1x1x352xf32> to vector<352xf32>
    %630 = vector.shape_cast %629 : vector<352xf32> to vector<1x352xf32>
    %c0_753 = arith.constant 0 : index
    %c0_754 = arith.constant 0 : index
    %c3_755 = arith.constant 3 : index
    %c134_756 = arith.constant 134 : index
    %631 = vector.load %arg2[%c0_753, %c0_754, %c3_755, %c134_756] : memref<1x1x4x506xf32, #tpu.memory_space<vmem>>, vector<1x1x1x352xf32>
    %632 = vector.shape_cast %631 : vector<1x1x1x352xf32> to vector<352xf32>
    %633 = vector.shape_cast %632 : vector<352xf32> to vector<1x352xf32>
    %c0_757 = arith.constant 0 : index
    %c0_758 = arith.constant 0 : index
    %c3_759 = arith.constant 3 : index
    %c135_760 = arith.constant 135 : index
    %634 = vector.load %arg2[%c0_757, %c0_758, %c3_759, %c135_760] : memref<1x1x4x506xf32, #tpu.memory_space<vmem>>, vector<1x1x1x352xf32>
    %635 = vector.shape_cast %634 : vector<1x1x1x352xf32> to vector<352xf32>
    %636 = vector.shape_cast %635 : vector<352xf32> to vector<1x352xf32>
    %c0_761 = arith.constant 0 : index
    %c0_762 = arith.constant 0 : index
    %c3_763 = arith.constant 3 : index
    %c136_764 = arith.constant 136 : index
    %637 = vector.load %arg2[%c0_761, %c0_762, %c3_763, %c136_764] : memref<1x1x4x506xf32, #tpu.memory_space<vmem>>, vector<1x1x1x352xf32>
    %638 = vector.shape_cast %637 : vector<1x1x1x352xf32> to vector<352xf32>
    %639 = vector.shape_cast %638 : vector<352xf32> to vector<1x352xf32>
    %c0_765 = arith.constant 0 : index
    %c0_766 = arith.constant 0 : index
    %c3_767 = arith.constant 3 : index
    %c137_768 = arith.constant 137 : index
    %640 = vector.load %arg2[%c0_765, %c0_766, %c3_767, %c137_768] : memref<1x1x4x506xf32, #tpu.memory_space<vmem>>, vector<1x1x1x352xf32>
    %641 = vector.shape_cast %640 : vector<1x1x1x352xf32> to vector<352xf32>
    %642 = vector.shape_cast %641 : vector<352xf32> to vector<1x352xf32>
    %c0_769 = arith.constant 0 : index
    %c0_770 = arith.constant 0 : index
    %c3_771 = arith.constant 3 : index
    %c138_772 = arith.constant 138 : index
    %643 = vector.load %arg2[%c0_769, %c0_770, %c3_771, %c138_772] : memref<1x1x4x506xf32, #tpu.memory_space<vmem>>, vector<1x1x1x352xf32>
    %644 = vector.shape_cast %643 : vector<1x1x1x352xf32> to vector<352xf32>
    %645 = vector.shape_cast %644 : vector<352xf32> to vector<1x352xf32>
    %646 = tpu.concatenate %501, %504, %507, %510, %513, %516, %519, %522, %525, %528, %531, %534, %537, %540, %543, %546 in 0 : vector<1x352xf32>, vector<1x352xf32>, vector<1x352xf32>, vector<1x352xf32>, vector<1x352xf32>, vector<1x352xf32>, vector<1x352xf32>, vector<1x352xf32>, vector<1x352xf32>, vector<1x352xf32>, vector<1x352xf32>, vector<1x352xf32>, vector<1x352xf32>, vector<1x352xf32>, vector<1x352xf32>, vector<1x352xf32> -> vector<16x352xf32>
    %647 = tpu.concatenate %549, %552, %555, %558, %561, %564, %567, %570, %573, %576, %579, %582, %585, %588, %591, %594 in 0 : vector<1x352xf32>, vector<1x352xf32>, vector<1x352xf32>, vector<1x352xf32>, vector<1x352xf32>, vector<1x352xf32>, vector<1x352xf32>, vector<1x352xf32>, vector<1x352xf32>, vector<1x352xf32>, vector<1x352xf32>, vector<1x352xf32>, vector<1x352xf32>, vector<1x352xf32>, vector<1x352xf32>, vector<1x352xf32> -> vector<16x352xf32>
    %648 = tpu.concatenate %597, %600, %603, %606, %609, %612, %615, %618, %621, %624, %627, %630, %633, %636, %639, %642 in 0 : vector<1x352xf32>, vector<1x352xf32>, vector<1x352xf32>, vector<1x352xf32>, vector<1x352xf32>, vector<1x352xf32>, vector<1x352xf32>, vector<1x352xf32>, vector<1x352xf32>, vector<1x352xf32>, vector<1x352xf32>, vector<1x352xf32>, vector<1x352xf32>, vector<1x352xf32>, vector<1x352xf32>, vector<1x352xf32> -> vector<16x352xf32>
    %649 = tpu.concatenate %645, %6, %9, %12, %15, %18, %21, %24 in 0 : vector<1x352xf32>, vector<1x352xf32>, vector<1x352xf32>, vector<1x352xf32>, vector<1x352xf32>, vector<1x352xf32>, vector<1x352xf32>, vector<1x352xf32> -> vector<8x352xf32>
    %650 = tpu.concatenate %646, %647, %648, %649 in 0 : vector<16x352xf32>, vector<16x352xf32>, vector<16x352xf32>, vector<8x352xf32> -> vector<56x352xf32>
    %c0_773 = arith.constant 0 : index
    %c3_774 = arith.constant 3 : index
    %c0_775 = arith.constant 0 : index
    %c0_776 = arith.constant 0 : index
    %651 = vector.load %arg4[%c0_773, %c3_774, %c0_775, %c0_776] : memref<1x4x4x56xf32, #tpu.memory_space<vmem>>, vector<1x1x4x56xf32>
    %652 = vector.shape_cast %651 : vector<1x1x4x56xf32> to vector<4x56xf32>
    %cst_777 = arith.constant dense<0.000000e+00> : vector<4x352xf32>
    %653 = tpu.matmul %652, %650, %cst_777 {dimension_numbers = #tpu.dot_dimension_numbers<[1], [0], [0], [1], [0, 0, 1, 1], [], []>} : vector<4x56xf32>, vector<56x352xf32>, vector<4x352xf32> -> vector<4x352xf32>
    %654 = vector.broadcast %15 : vector<1x352xf32> to vector<4x352xf32>
    %655 = arith.mulf %653, %654 : vector<4x352xf32>
    %c12 = arith.constant 12 : index
    %c44_778 = arith.constant 44 : index
    %656 = vector.load %arg9[%c12, %c44_778] : memref<16x440xf32, #tpu.memory_space<vmem>>, vector<4x352xf32>
    tpu.vector_store %arg9[%c12, %c44_778], %655 {strides = array<i32>} : memref<16x440xf32, #tpu.memory_space<vmem>>, vector<4x352xf32>,
    %c0_779 = arith.constant 0 : index
    %c21 = arith.constant 21 : index
    %657 = vector.load %arg9[%c0_779, %c21] : memref<16x440xf32, #tpu.memory_space<vmem>>, vector<16x352xf32>
    %c0_780 = arith.constant 0 : index
    %c22_781 = arith.constant 22 : index
    %658 = vector.load %arg9[%c0_780, %c22_781] : memref<16x440xf32, #tpu.memory_space<vmem>>, vector<16x352xf32>
    %c0_782 = arith.constant 0 : index
    %c23_783 = arith.constant 23 : index
    %659 = vector.load %arg9[%c0_782, %c23_783] : memref<16x440xf32, #tpu.memory_space<vmem>>, vector<16x352xf32>
    %c0_784 = arith.constant 0 : index
    %c43 = arith.constant 43 : index
    %660 = vector.load %arg9[%c0_784, %c43] : memref<16x440xf32, #tpu.memory_space<vmem>>, vector<16x352xf32>
    %c0_785 = arith.constant 0 : index
    %c44_786 = arith.constant 44 : index
    %661 = vector.load %arg9[%c0_785, %c44_786] : memref<16x440xf32, #tpu.memory_space<vmem>>, vector<16x352xf32>
    %c0_787 = arith.constant 0 : index
    %c45_788 = arith.constant 45 : index
    %662 = vector.load %arg9[%c0_787, %c45_788] : memref<16x440xf32, #tpu.memory_space<vmem>>, vector<16x352xf32>
    %c0_789 = arith.constant 0 : index
    %c65 = arith.constant 65 : index
    %663 = vector.load %arg9[%c0_789, %c65] : memref<16x440xf32, #tpu.memory_space<vmem>>, vector<16x352xf32>
    %c0_790 = arith.constant 0 : index
    %c66_791 = arith.constant 66 : index
    %664 = vector.load %arg9[%c0_790, %c66_791] : memref<16x440xf32, #tpu.memory_space<vmem>>, vector<16x352xf32>
    %c0_792 = arith.constant 0 : index
    %c67_793 = arith.constant 67 : index
    %665 = vector.load %arg9[%c0_792, %c67_793] : memref<16x440xf32, #tpu.memory_space<vmem>>, vector<16x352xf32>
    %666 = tpu.concatenate %657, %658, %659, %660, %661, %662, %663, %664, %665 in 0 : vector<16x352xf32>, vector<16x352xf32>, vector<16x352xf32>, vector<16x352xf32>, vector<16x352xf32>, vector<16x352xf32>, vector<16x352xf32>, vector<16x352xf32>, vector<16x352xf32> -> vector<144x352xf32>
    %c0_794 = arith.constant 0 : index
    %c0_795 = arith.constant 0 : index
    %c0_796 = arith.constant 0 : index
    %667 = vector.load %arg5[%c0_794, %c0_795, %c0_796] : memref<1x16x144xf32, #tpu.memory_space<vmem>>, vector<1x16x144xf32>
    %668 = vector.shape_cast %667 : vector<1x16x144xf32> to vector<16x144xf32>
    %cst_797 = arith.constant dense<0.000000e+00> : vector<16x352xf32>
    %669 = tpu.matmul %668, %666, %cst_797 {dimension_numbers = #tpu.dot_dimension_numbers<[1], [0], [0], [1], [0, 0, 1, 1], [], []>} : vector<16x144xf32>, vector<144x352xf32>, vector<16x352xf32> -> vector<16x352xf32>
    %c0_798 = arith.constant 0 : index
    %c0_799 = arith.constant 0 : index
    %c0_800 = arith.constant 0 : index
    %670 = vector.load %arg6[%c0_798, %c0_799, %c0_800] : memref<1x16x1xf32, #tpu.memory_space<vmem>>, vector<1x16x1xf32>
    %671 = vector.shape_cast %670 : vector<1x16x1xf32> to vector<16x1xf32>
    %672 = vector.broadcast %671 : vector<16x1xf32> to vector<16x352xf32>
    %673 = arith.mulf %669, %672 : vector<16x352xf32>
    %c0_801 = arith.constant 0 : index
    %c0_802 = arith.constant 0 : index
    %c0_803 = arith.constant 0 : index
    %674 = vector.load %arg7[%c0_801, %c0_802, %c0_803] : memref<1x16x1xf32, #tpu.memory_space<vmem>>, vector<1x16x1xf32>
    %675 = vector.shape_cast %674 : vector<1x16x1xf32> to vector<16x1xf32>
    %676 = vector.broadcast %675 : vector<16x1xf32> to vector<16x352xf32>
    %677 = arith.addf %673, %676 : vector<16x352xf32>
    %cst_804 = arith.constant 0.000000e+00 : f32
    %678 = vector.broadcast %cst_804 : f32 to vector<16x352xf32>
    %679 = arith.maximumf %677, %678 : vector<16x352xf32>
    %c0_805 = arith.constant 0 : index
    %c0_806 = arith.constant 0 : index
    %c0_807 = arith.constant 0 : index
    %c0_808 = arith.constant 0 : index
    %680 = vector.load %arg8[%c0_805, %c0_806, %c0_807, %c0_808] : memref<1x1x16x352xf32, #tpu.memory_space<vmem>>, vector<1x1x16x352xf32>
    %681 = vector.shape_cast %680 : vector<1x1x16x352xf32> to vector<16x352xf32>
    %682 = vector.shape_cast %679 : vector<16x352xf32> to vector<1x1x16x352xf32>
    tpu.vector_store %arg8[%c0_805, %c0_806, %c0_807, %c0_808], %682 {strides = array<i32>} : memref<1x1x16x352xf32, #tpu.memory_space<vmem>>, vector<1x1x16x352xf32>,
    return
  }
  func.func @transform_0(%arg0: i32, %arg1: i32) -> (i32, i32, i32, i32) {
    %c0_i32 = arith.constant 0 : i32
    %c0_i32_0 = arith.constant 0 : i32
    %c0_i32_1 = arith.constant 0 : i32
    return %arg1, %arg0, %c0_i32, %c0_i32_0 : i32, i32, i32, i32
  }
  func.func @transform_1(%arg0: i32, %arg1: i32) -> (i32, i32) {
    %c0_i32 = arith.constant 0 : i32
    %c0_i32_0 = arith.constant 0 : i32
    %c0_i32_1 = arith.constant 0 : i32
    return %c0_i32, %c0_i32_0 : i32, i32
  }
  func.func @transform_2(%arg0: i32, %arg1: i32) -> (i32, i32, i32, i32) {
    %c0_i32 = arith.constant 0 : i32
    %c0_i32_0 = arith.constant 0 : i32
    %c0_i32_1 = arith.constant 0 : i32
    %c0_i32_2 = arith.constant 0 : i32
    return %arg0, %c0_i32, %c0_i32_0, %c0_i32_1 : i32, i32, i32, i32
  }
  func.func @transform_3(%arg0: i32, %arg1: i32) -> (i32, i32, i32) {
    %c0_i32 = arith.constant 0 : i32
    %c0_i32_0 = arith.constant 0 : i32
    %c0_i32_1 = arith.constant 0 : i32
    return %arg0, %c0_i32, %c0_i32_0 : i32, i32, i32
  }
  func.func @transform_4(%arg0: i32, %arg1: i32) -> (i32, i32, i32) {
    %c0_i32 = arith.constant 0 : i32
    %c0_i32_0 = arith.constant 0 : i32
    %c0_i32_1 = arith.constant 0 : i32
    return %arg0, %c0_i32, %c0_i32_0 : i32, i32, i32
  }
  func.func @transform_5(%arg0: i32, %arg1: i32) -> (i32, i32, i32) {
    %c0_i32 = arith.constant 0 : i32
    %c0_i32_0 = arith.constant 0 : i32
    %c0_i32_1 = arith.constant 0 : i32
    return %arg0, %c0_i32, %c0_i32_0 : i32, i32, i32
  }
  func.func @transform_6(%arg0: i32, %arg1: i32) -> (i32, i32, i32, i32) {
    %c0_i32 = arith.constant 0 : i32
    %c0_i32_0 = arith.constant 0 : i32
    %c0_i32_1 = arith.constant 0 : i32
    return %arg1, %arg0, %c0_i32, %c0_i32_0 : i32, i32, i32, i32
  }
}

</mosaic_0001>

<llo_original>
// kernel: tpu_custom_call.1
$region0: #{tpu_custom_call.1}
  #allocation0 [shape = 'u32[]', space=smem, size = 0x4, offset = 0x4, fixed_abs, tag = 'smem constant byte address 0x4 - core index']
  #allocation1 [shape = 'u32[144,128]{1,0:T(1,128)}', space=vmem, size = 0x12000, scoped, tag = 'internal scratch']
  #allocation2 [shape = 'f32[16,440]{1,0:T(8,128)}', space=vmem, size = 0x8000, scoped, tag = 'scratch operand']
  %s0 = inlined_call_operand.vmem [shape: f32[2,2,4,506], index: 0, kind: input, shape index: {}]
  %s1 = inlined_call_operand.vmem [shape: f32[1,506], index: 1, kind: input, shape index: {}]
  %s2 = inlined_call_operand.hbm [shape: f32[2,4,4,56], index: 2, kind: input, shape index: {}]
  %s3 = inlined_call_operand.hbm [shape: f32[2,16,144], index: 3, kind: input, shape index: {}]
  %s4 = inlined_call_operand.vmem [shape: f32[2,16,1], index: 4, kind: input, shape index: {}]
  %s5 = inlined_call_operand.vmem [shape: f32[2,16,1], index: 5, kind: input, shape index: {}]
  %s6 = inlined_call_operand.hbm [shape: f32[2,2,16,352], index: 6, kind: output, shape index: {}]
  %s7 = sld [smem:[#allocation0]]
  $region65: #{tpu_custom_call.1} parent=0
    _
  %s9 = ssub.s32 1, %s7
  %s10 = scalar_select 0, %s9, %s7
  $region1: #{tpu_custom_call.1} parent=0
    #allocation3 [shape = 'u8[16384]{0}', space=vmem, size = 0x4000, scoped, tag = 'input window, operand 2']
    #allocation4 [shape = 's32[2]{0}', space=sflag, size = 0x8, scoped, tag = 'scoped memory for tpu_custom_call.1']
    #allocation5 [shape = 's32[2]{0}', space=sflag, size = 0x8, scoped, tag = 'scoped memory for tpu_custom_call.1']
    #allocation6 [shape = 'u8[32768]{0}', space=vmem, size = 0x8000, scoped, tag = 'input window, operand 3']
    #allocation7 [shape = 's32[2]{0}', space=sflag, size = 0x8, scoped, tag = 'scoped memory for tpu_custom_call.1']
    #allocation8 [shape = 'u8[49152]{0}', space=vmem, size = 0xc000, scoped, tag = 'output window, operand 0']
    %11 = vsyncpa [#allocation4], 0
    %s12 = scalar_lea.sflag [#allocation4], 1
    %13 = vsyncpa %s12, 0
    %14 = vsyncpa [#allocation7], 0
    %s15 = scalar_lea.sflag [#allocation7], 1
    %16 = vsyncpa %s15, 0
    %17 = vsyncpa [#allocation5], 0
    %s18 = scalar_lea.sflag [#allocation5], 1
    %19 = vsyncpa %s18, 0
    loop: start=0, step=1, limit=6
    $region2: #{tpu_custom_call.1} parent=1 // loop_pre_header
      _
    $region3: #{tpu_custom_call.1} parent=1 // loop_header
      %s21 = sphi 0, %s25
      %p22 = scmp.ge.s32.totalorder %s21, 6
      %s28 = sphi 0, %s40
      %s29 = sphi 0, %s36
      %s30 = sphi 0, %s28
      %s31 = sphi 0, %s29
      %s32 = sphi 0, %s30
      %s33 = sphi 0, %s31
      %s45 = sphi 0, %s47
      %s48 = sphi 0, %s45
      %s49 = sphi 0, %s48
      %s65 = sphi 0, %s49
      %s69 = sphi 0, %s69
      %s71 = sphi 0, %s69
      %s72 = sphi 0, %s71
      %s86 = sphi 0, %s72
      %s92 = sphi 0, %s94
      %s95 = sphi 0, %s92
      %s96 = sphi 0, %s95
      %s112 = sphi 0, %s96
      %s118 = sphi 0, %s120
      %s121 = sphi 0, %s118
      %s122 = sphi 0, %s121
      %s138 = sphi 0, %s122
      %s144 = sphi 0, %s146
      %s147 = sphi 0, %s144
      %s148 = sphi 0, %s147
      %s164 = sphi 0, %s148
      %s170 = sphi 0, %s172
      %s173 = sphi 0, %s170
      %s174 = sphi 0, %s173
      %s190 = sphi 0, %s174
      %s198 = sphi 0, %s200
      %s201 = sphi 0, %s198
      %s202 = sphi 0, %s201
      %s218 = sphi 0, %s202
    $region4: #{tpu_custom_call.1} parent=1 // loop_header_branch
      %24 = sbr.rel (%p22) target = $region8
    $region5: #{tpu_custom_call.1} parent=1 // loop_body
      %s26 = ssub.s32 %s21, 1
      %s27 = ssub.s32 %s21, 2
      %s34 = sadd.s32 1, %s29
      %p35 = scmp.ge.s32.totalorder %s34, 2
      %s36 = scalar_select %p35, 0, %s34
      %s37 = sadd.s32 1, %s28
      %s38 = scalar_select %p35, %s37, %s28
      %p39 = scmp.ge.s32.totalorder %s38, 2
      %s40 = scalar_select %p39, 0, %s38
      %s41 = ssub.s32 %s29, %s36
      %s42 = ssub.s32 %s28, %s40
      %s43 = sor.u32 %s41, %s42
      %p44 = scmp.eq.s32.totalorder %s43, 0
      %s46 = sadd.s32 %s45, 1
      %s47 = scalar_select %p44, %s45, %s46
      %p50 = pneg %p44
      %p51 = scmp.eq.s32.totalorder %s21, 3
      %p52 = por %p50, %p51
      %p53 = scmp.ne.s32.totalorder %s45, %s48
      %p54 = scmp.eq.s32.totalorder %s21, 0
      %p55 = por %p53, %p54
      %p56 = scmp.ne.s32.totalorder %s45, %s48
      %p57 = scmp.eq.s32.totalorder %s26, 3
      %p58 = por %p56, %p57
      %p59 = scmp.ne.s32.totalorder %s48, %s49
      %p60 = scmp.eq.s32.totalorder %s26, 0
      %p61 = por %p59, %p60
      %p62 = scmp.ne.s32.totalorder %s48, %s49
      %p63 = scmp.eq.s32.totalorder %s27, 3
      %p64 = por %p62, %p63
      %p66 = scmp.ne.s32.totalorder %s49, %s65
      %p67 = scmp.eq.s32.totalorder %s27, 0
      %p68 = por %p66, %p67
      %s70 = sadd.s32 %s69, 1
      %p73 = scmp.eq.s32.totalorder %s21, 3
      %p74 = scmp.ne.s32.totalorder %s69, %s71
      %p75 = scmp.eq.s32.totalorder %s21, 0
      %p76 = por %p74, %p75
      %p77 = scmp.ne.s32.totalorder %s69, %s71
      %p78 = scmp.eq.s32.totalorder %s26, 3
      %p79 = por %p77, %p78
      %p80 = scmp.ne.s32.totalorder %s71, %s72
      %p81 = scmp.eq.s32.totalorder %s26, 0
      %p82 = por %p80, %p81
      %p83 = scmp.ne.s32.totalorder %s71, %s72
      %p84 = scmp.eq.s32.totalorder %s27, 3
      %p85 = por %p83, %p84
      %p87 = scmp.ne.s32.totalorder %s72, %s86
      %p88 = scmp.eq.s32.totalorder %s27, 0
      %p89 = por %p87, %p88
      %s90 = ssub.s32 %s28, %s40
      %p91 = scmp.eq.s32.totalorder %s90, 0
      %s93 = sadd.s32 %s92, 1
      %s94 = scalar_select %p91, %s92, %s93
      %p97 = pneg %p91
      %p98 = scmp.eq.s32.totalorder %s21, 3
      %p99 = por %p97, %p98
      %p100 = scmp.ne.s32.totalorder %s92, %s95
      %p101 = scmp.eq.s32.totalorder %s21, 0
      %p102 = por %p100, %p101
      %p103 = scmp.ne.s32.totalorder %s92, %s95
      %p104 = scmp.eq.s32.totalorder %s26, 3
      %p105 = por %p103, %p104
      %p106 = scmp.ne.s32.totalorder %s95, %s96
      %p107 = scmp.eq.s32.totalorder %s26, 0
      %p108 = por %p106, %p107
      %p109 = scmp.ne.s32.totalorder %s95, %s96
      %p110 = scmp.eq.s32.totalorder %s27, 3
      %p111 = por %p109, %p110
      %p113 = scmp.ne.s32.totalorder %s96, %s112
      %p114 = scmp.eq.s32.totalorder %s27, 0
      %p115 = por %p113, %p114
      %s116 = ssub.s32 %s28, %s40
      %p117 = scmp.eq.s32.totalorder %s116, 0
      %s119 = sadd.s32 %s118, 1
      %s120 = scalar_select %p117, %s118, %s119
      %p123 = pneg %p117
      %p124 = scmp.eq.s32.totalorder %s21, 3
      %p125 = por %p123, %p124
      %p126 = scmp.ne.s32.totalorder %s118, %s121
      %p127 = scmp.eq.s32.totalorder %s21, 0
      %p128 = por %p126, %p127
      %p129 = scmp.ne.s32.totalorder %s118, %s121
      %p130 = scmp.eq.s32.totalorder %s26, 3
      %p131 = por %p129, %p130
      %p132 = scmp.ne.s32.totalorder %s121, %s122
      %p133 = scmp.eq.s32.totalorder %s26, 0
      %p134 = por %p132, %p133
      %p135 = scmp.ne.s32.totalorder %s121, %s122
      %p136 = scmp.eq.s32.totalorder %s27, 3
      %p137 = por %p135, %p136
      %p139 = scmp.ne.s32.totalorder %s122, %s138
      %p140 = scmp.eq.s32.totalorder %s27, 0
      %p141 = por %p139, %p140
      %s142 = ssub.s32 %s28, %s40
      %p143 = scmp.eq.s32.totalorder %s142, 0
      %s145 = sadd.s32 %s144, 1
      %s146 = scalar_select %p143, %s144, %s145
      %p149 = pneg %p143
      %p150 = scmp.eq.s32.totalorder %s21, 3
      %p151 = por %p149, %p150
      %p152 = scmp.ne.s32.totalorder %s144, %s147
      %p153 = scmp.eq.s32.totalorder %s21, 0
      %p154 = por %p152, %p153
      %p155 = scmp.ne.s32.totalorder %s144, %s147
      %p156 = scmp.eq.s32.totalorder %s26, 3
      %p157 = por %p155, %p156
      %p158 = scmp.ne.s32.totalorder %s147, %s148
      %p159 = scmp.eq.s32.totalorder %s26, 0
      %p160 = por %p158, %p159
      %p161 = scmp.ne.s32.totalorder %s147, %s148
      %p162 = scmp.eq.s32.totalorder %s27, 3
      %p163 = por %p161, %p162
      %p165 = scmp.ne.s32.totalorder %s148, %s164
      %p166 = scmp.eq.s32.totalorder %s27, 0
      %p167 = por %p165, %p166
      %s168 = ssub.s32 %s28, %s40
      %p169 = scmp.eq.s32.totalorder %s168, 0
      %s171 = sadd.s32 %s170, 1
      %s172 = scalar_select %p169, %s170, %s171
      %p175 = pneg %p169
      %p176 = scmp.eq.s32.totalorder %s21, 3
      %p177 = por %p175, %p176
      %p178 = scmp.ne.s32.totalorder %s170, %s173
      %p179 = scmp.eq.s32.totalorder %s21, 0
      %p180 = por %p178, %p179
      %p181 = scmp.ne.s32.totalorder %s170, %s173
      %p182 = scmp.eq.s32.totalorder %s26, 3
      %p183 = por %p181, %p182
      %p184 = scmp.ne.s32.totalorder %s173, %s174
      %p185 = scmp.eq.s32.totalorder %s26, 0
      %p186 = por %p184, %p185
      %p187 = scmp.ne.s32.totalorder %s173, %s174
      %p188 = scmp.eq.s32.totalorder %s27, 3
      %p189 = por %p187, %p188
      %p191 = scmp.ne.s32.totalorder %s174, %s190
      %p192 = scmp.eq.s32.totalorder %s27, 0
      %p193 = por %p191, %p192
      %s194 = ssub.s32 %s29, %s36
      %s195 = ssub.s32 %s28, %s40
      %s196 = sor.u32 %s194, %s195
      %p197 = scmp.eq.s32.totalorder %s196, 0
      %s199 = sadd.s32 %s198, 1
      %s200 = scalar_select %p197, %s198, %s199
      %p203 = pneg %p197
      %p204 = scmp.eq.s32.totalorder %s21, 3
      %p205 = por %p203, %p204
      %p206 = scmp.ne.s32.totalorder %s198, %s201
      %p207 = scmp.eq.s32.totalorder %s21, 0
      %p208 = por %p206, %p207
      %p209 = scmp.ne.s32.totalorder %s198, %s201
      %p210 = scmp.eq.s32.totalorder %s26, 3
      %p211 = por %p209, %p210
      %p212 = scmp.ne.s32.totalorder %s201, %s202
      %p213 = scmp.eq.s32.totalorder %s26, 0
      %p214 = por %p212, %p213
      %p215 = scmp.ne.s32.totalorder %s201, %s202
      %p216 = scmp.eq.s32.totalorder %s27, 3
      %p217 = por %p215, %p216
      %p219 = scmp.ne.s32.totalorder %s202, %s218
      %p220 = scmp.eq.s32.totalorder %s27, 0
      %p221 = por %p219, %p220
      %p222 = scmp.le.s32.totalorder 1, %s21
      %p223 = scmp.lt.s32.totalorder %s21, 5
      %p224 = pnand %p222, %p223
      %p225 = pneg %p224
      // Predicated region
      $region9: #{tpu_custom_call.1} parent=5 // pred_check
        _
      $region10: #{tpu_custom_call.1} parent=5 // pred_check_branch
        %227 = sbr.rel (%p224) target = $region12
      $region11: #{tpu_custom_call.1} parent=5 // pred_region
        %s228 = ssub.s32 %s21, 1
        // Predicated region
        $region13: #{tpu_custom_call.1} parent=11 // pred_check
          %p229 = pneg %p82
        $region14: #{tpu_custom_call.1} parent=11 // pred_check_branch
          %231 = sbr.rel (%p229) target = $region16
        $region15: #{tpu_custom_call.1} parent=11 // pred_region
          _
        $region16: #{tpu_custom_call.1} parent=11 // pred_fallthru
          _
      $region12: #{tpu_custom_call.1} parent=5 // pred_fallthru
        _
      %p232 = scmp.lt.s32.totalorder %s21, 4
      // Predicated region
      $region17: #{tpu_custom_call.1} parent=5 // pred_check
        %p233 = pneg %p232
      $region18: #{tpu_custom_call.1} parent=5 // pred_check_branch
        %235 = sbr.rel (%p233) target = $region20
      $region19: #{tpu_custom_call.1} parent=5 // pred_region
        // Predicated region
        $region21: #{tpu_custom_call.1} parent=19 // pred_check
          %p236 = pneg %p55
        $region22: #{tpu_custom_call.1} parent=19 // pred_check_branch
          %238 = sbr.rel (%p236) target = $region24
        $region23: #{tpu_custom_call.1} parent=19 // pred_region
          %p239 = scmp.lt.s32.totalorder %s29, 1
          %s240 = scalar_select %p239, %s29, 1
          %p241 = scmp.lt.s32.totalorder %s28, 1
          %s242 = scalar_select %p241, %s28, 1
          %s243 = smul.addr %s242, 4
          %s244 = smul.addr %s240, 8
          %s245 = sadd.s32 %s243, %s244
          %s246 = smul.addr %s245, 4
          %s247 = scalar_lea.vmem %s0, %s246
        $region24: #{tpu_custom_call.1} parent=19 // pred_fallthru
          _
        // Predicated region
        $region25: #{tpu_custom_call.1} parent=19 // pred_check
          %p248 = pneg %p102
        $region26: #{tpu_custom_call.1} parent=19 // pred_check_branch
          %250 = sbr.rel (%p248) target = $region28
        $region27: #{tpu_custom_call.1} parent=19 // pred_region
          %s251 = sand.u32 %s92, 1
          %s252 = scalar_lea.sflag [#allocation4], %s251
          %s253 = sand.u32 %s92, 1
          %s254 = smul.addr %s253, 16
          %s255 = scalar_lea.vmem [#allocation3], %s254
          %s257 = ssub.s32 256, 256
          %258 = vsyncadd %s252, %s257
          %s259 = smul.addr %s28, 4
          %s260 = smul.addr %s259, 64
          %s261 = scalar_lea.hbm %s2, %s260
          %s262 = sshll.u32 %s255, 4
          %s263 = int_to_ptr.vmem [resolvable:$true] %s262
          %268 = dma.hbm_to_vmem [thread:$0]  %s261, 256, %s263, %s252, 64, 64, 4
        $region28: #{tpu_custom_call.1} parent=19 // pred_fallthru
          _
        // Predicated region
        $region29: #{tpu_custom_call.1} parent=19 // pred_check
          %p269 = pneg %p128
        $region30: #{tpu_custom_call.1} parent=19 // pred_check_branch
          %271 = sbr.rel (%p269) target = $region32
        $region31: #{tpu_custom_call.1} parent=19 // pred_region
          %s272 = sand.u32 %s118, 1
          %s273 = scalar_lea.sflag [#allocation7], %s272
          %s274 = sand.u32 %s118, 1
          %s275 = smul.addr %s274, 32
          %s276 = scalar_lea.vmem [#allocation6], %s275
          %s278 = ssub.s32 512, 512
          %279 = vsyncadd %s273, %s278
          %s280 = smul.addr %s28, 4
          %s281 = smul.addr %s280, 128
          %s282 = scalar_lea.hbm %s3, %s281
          %s283 = sshll.u32 %s276, 4
          %s284 = int_to_ptr.vmem [resolvable:$true] %s283
          %289 = dma.hbm_to_vmem [thread:$0]  %s282, 512, %s284, %s273, 256, 256, 16
        $region32: #{tpu_custom_call.1} parent=19 // pred_fallthru
          _
        // Predicated region
        $region33: #{tpu_custom_call.1} parent=19 // pred_check
          %p290 = pneg %p154
        $region34: #{tpu_custom_call.1} parent=19 // pred_check_branch
          %292 = sbr.rel (%p290) target = $region36
        $region35: #{tpu_custom_call.1} parent=19 // pred_region
          %p293 = scmp.lt.s32.totalorder %s28, 1
          %s294 = scalar_select %p293, %s28, 1
          %s295 = smul.addr %s294, 2
          %s296 = smul.addr %s295, 8
          %s297 = scalar_lea.vmem %s4, %s296
        $region36: #{tpu_custom_call.1} parent=19 // pred_fallthru
          _
        // Predicated region
        $region37: #{tpu_custom_call.1} parent=19 // pred_check
          %p298 = pneg %p180
        $region38: #{tpu_custom_call.1} parent=19 // pred_check_branch
          %300 = sbr.rel (%p298) target = $region40
        $region39: #{tpu_custom_call.1} parent=19 // pred_region
          %p301 = scmp.lt.s32.totalorder %s28, 1
          %s302 = scalar_select %p301, %s28, 1
          %s303 = smul.addr %s302, 2
          %s304 = smul.addr %s303, 8
          %s305 = scalar_lea.vmem %s5, %s304
        $region40: #{tpu_custom_call.1} parent=19 // pred_fallthru
          _
      $region20: #{tpu_custom_call.1} parent=5 // pred_fallthru
        _
      %p306 = scmp.le.s32.totalorder 1, %s21
      %p307 = scmp.lt.s32.totalorder %s21, 5
      %p308 = pnand %p306, %p307
      %p309 = pneg %p308
      // Predicated region
      $region41: #{tpu_custom_call.1} parent=5 // pred_check
        _
      $region42: #{tpu_custom_call.1} parent=5 // pred_check_branch
        %311 = sbr.rel (%p308) target = $region44
      $region43: #{tpu_custom_call.1} parent=5 // pred_region
        %s312 = ssub.s32 %s21, 1
        %s313 = sand.u32 %s95, 1
        %s314 = scalar_lea.sflag [#allocation4], %s313
        %s315 = sand.u32 %s95, 1
        %s316 = smul.addr %s315, 16
        %s317 = scalar_lea.vmem [#allocation3], %s316
        // Predicated region
        $region45: #{tpu_custom_call.1} parent=43 // pred_check
          %p318 = pneg %p108
        $region46: #{tpu_custom_call.1} parent=43 // pred_check_branch
          %320 = sbr.rel (%p318) target = $region48
        $region47: #{tpu_custom_call.1} parent=43 // pred_region
          %321 = dma.done %s314, 256
        $region48: #{tpu_custom_call.1} parent=43 // pred_fallthru
          _
        %s322 = sand.u32 %s121, 1
        %s323 = scalar_lea.sflag [#allocation7], %s322
        %s324 = sand.u32 %s121, 1
        %s325 = smul.addr %s324, 32
        %s326 = scalar_lea.vmem [#allocation6], %s325
        // Predicated region
        $region49: #{tpu_custom_call.1} parent=43 // pred_check
          %p327 = pneg %p134
        $region50: #{tpu_custom_call.1} parent=43 // pred_check_branch
          %329 = sbr.rel (%p327) target = $region52
        $region51: #{tpu_custom_call.1} parent=43 // pred_region
          %330 = dma.done %s323, 512
        $region52: #{tpu_custom_call.1} parent=43 // pred_fallthru
          _
        %p331 = scmp.lt.s32.totalorder %s31, 1
        %s332 = scalar_select %p331, %s31, 1
        %p333 = scmp.lt.s32.totalorder %s30, 1
        %s334 = scalar_select %p333, %s30, 1
        %s335 = smul.addr %s334, 4
        %s336 = smul.addr %s332, 8
        %s337 = sadd.s32 %s335, %s336
        %s338 = smul.addr %s337, 4
        %s339 = scalar_lea.vmem %s0, %s338
        %p340 = pneg %p61
        %p341 = pneg %p58
        %p342 = pneg %p82
        %p343 = pneg %p79
        %s344 = sand.u32 %s95, 1
        %s345 = scalar_lea.sflag [#allocation4], %s344
        %s346 = sand.u32 %s95, 1
        %s347 = smul.addr %s346, 16
        %s348 = scalar_lea.vmem [#allocation3], %s347
        %p349 = pneg %p108
        %p350 = pneg %p105
        %s351 = sand.u32 %s121, 1
        %s352 = scalar_lea.sflag [#allocation7], %s351
        %s353 = sand.u32 %s121, 1
        %s354 = smul.addr %s353, 32
        %s355 = scalar_lea.vmem [#allocation6], %s354
        %p356 = pneg %p134
        %p357 = pneg %p131
        %p358 = scmp.lt.s32.totalorder %s30, 1
        %s359 = scalar_select %p358, %s30, 1
        %s360 = smul.addr %s359, 2
        %s361 = smul.addr %s360, 8
        %s362 = scalar_lea.vmem %s4, %s361
        %p363 = pneg %p160
        %p364 = pneg %p157
        %p365 = scmp.lt.s32.totalorder %s30, 1
        %s366 = scalar_select %p365, %s30, 1
        %s367 = smul.addr %s366, 2
        %s368 = smul.addr %s367, 8
        %s369 = scalar_lea.vmem %s5, %s368
        %p370 = pneg %p186
        %p371 = pneg %p183
        %p372 = pneg %p214
        %p373 = pneg %p211
        %s374 = sand.u32 %s201, 1
        %s375 = scalar_lea.sflag [#allocation5], %s374
        %s376 = sand.u32 %s201, 1
        %s377 = smul.addr %s376, 48
        %s378 = scalar_lea.vmem [#allocation8], %s377
        %p379 = scmp.lt.s32.totalorder %s31, 1
        %s380 = scalar_select %p379, %s31, 1
        %p381 = scmp.lt.s32.totalorder %s30, 1
        %s382 = scalar_select %p381, %s30, 1
        %s383 = smul.addr %s382, 4
        %s384 = smul.addr %s380, 8
        %s385 = sadd.s32 %s383, %s384
        %s386 = smul.addr %s385, 4
        %s387 = scalar_lea.vmem %s0, %s386
        %p388 = scmp.lt.s32.totalorder %s30, 1
        %s389 = scalar_select %p388, %s30, 1
        %s390 = smul.addr %s389, 2
        %s391 = smul.addr %s390, 8
        %s392 = scalar_lea.vmem %s4, %s391
        %p393 = scmp.lt.s32.totalorder %s30, 1
        %s394 = scalar_select %p393, %s30, 1
        %s395 = smul.addr %s394, 2
        %s396 = smul.addr %s395, 8
        %s397 = scalar_lea.vmem %s5, %s396
        %vm398 = vcmask 359424
        %399 = vst.msk [vmem:[#allocation2] sm:$0xff] %vm398, 0.0
        %400 = vst.msk [vmem:[#allocation2 + $0x20] sm:$0xff] %vm398, 0.0
        %vm401 = vcmask 457824
        %402 = vst.msk [vmem:[#allocation2 + $0x18] sm:$0xff] %vm401, 0.0
        %403 = vst.msk [vmem:[#allocation2 + $0x38] sm:$0xff] %vm401, 0.0
        %v404 = vld [vmem:[%s1] sm:$0x7]
        %v405 = vld [vmem:[%s1] sm:$0xf]
        %v406 = vld [vmem:[%s1 + $0x1] sm:$0x7]
        %v407 = vld [vmem:[%s387] ss:$4 sm:$0x7]
        %v408 = vld [vmem:[%s387] ss:$4 sm:$0xf]
        %s409 = scalar_lea.vmem %s387, 4
        %v410 = vld [vmem:[%s409] ss:$4 sm:$0x7]
        %v412 = vlaneseq
        %v413 = vshrl.u32 %v412, 7
        %v414 = vsub.s32 0, %v413
        %v415 = vrot.slane %v407, %v414
        %v416 = vlaneseq
        %v417 = vshrl.u32 %v416, 7
        %v418 = vsub.s32 1, %v417
        %v419 = vrot.slane %v407, %v418
        %v420 = vlaneseq
        %v421 = vshrl.u32 %v420, 7
        %v422 = vsub.s32 2, %v421
        %v423 = vrot.slane %v407, %v422
        %427 = vrot.lane.b32.xlu0 %v415, 127
        %v428 = vpop.permute.xlu0 %427
        %429 = vrot.lane.b32.xlu0 %v419, 127
        %v430 = vpop.permute.xlu0 %429
        %431 = vrot.lane.b32.xlu0 %v423, 127
        %v432 = vpop.permute.xlu0 %431
        %vm433 = vcmask 1039360
        %v434 = vsel %vm433, %v428, %v430
        %v435 = vsel %vm433, %v430, %v432
        %439 = vrot.lane.b32.xlu0 %v415, 126
        %v440 = vpop.permute.xlu0 %439
        %441 = vrot.lane.b32.xlu0 %v419, 126
        %v442 = vpop.permute.xlu0 %441
        %443 = vrot.lane.b32.xlu0 %v423, 126
        %v444 = vpop.permute.xlu0 %443
        %vm445 = vcmask 1031168
        %v446 = vsel %vm445, %v440, %v442
        %v447 = vsel %vm445, %v442, %v444
        %451 = vrot.lane.b32.xlu0 %v415, 125
        %v452 = vpop.permute.xlu0 %451
        %453 = vrot.lane.b32.xlu0 %v419, 125
        %v454 = vpop.permute.xlu0 %453
        %455 = vrot.lane.b32.xlu0 %v423, 125
        %v456 = vpop.permute.xlu0 %455
        %vm457 = vcmask 1022976
        %v458 = vsel %vm457, %v452, %v454
        %v459 = vsel %vm457, %v454, %v456
        %463 = vrot.lane.b32.xlu0 %v415, 124
        %v464 = vpop.permute.xlu0 %463
        %465 = vrot.lane.b32.xlu0 %v419, 124
        %v466 = vpop.permute.xlu0 %465
        %467 = vrot.lane.b32.xlu0 %v423, 124
        %v468 = vpop.permute.xlu0 %467
        %vm469 = vcmask 1014784
        %v470 = vsel %vm469, %v464, %v466
        %v471 = vsel %vm469, %v466, %v468
        %475 = vrot.lane.b32.xlu0 %v415, 123
        %v476 = vpop.permute.xlu0 %475
        %477 = vrot.lane.b32.xlu0 %v419, 123
        %v478 = vpop.permute.xlu0 %477
        %479 = vrot.lane.b32.xlu0 %v423, 123
        %v480 = vpop.permute.xlu0 %479
        %vm481 = vcmask 1006592
        %v482 = vsel %vm481, %v476, %v478
        %v483 = vsel %vm481, %v478, %v480
        %487 = vrot.lane.b32.xlu0 %v415, 122
        %v488 = vpop.permute.xlu0 %487
        %489 = vrot.lane.b32.xlu0 %v419, 122
        %v490 = vpop.permute.xlu0 %489
        %491 = vrot.lane.b32.xlu0 %v423, 122
        %v492 = vpop.permute.xlu0 %491
        %vm493 = vcmask 998400
        %v494 = vsel %vm493, %v488, %v490
        %v495 = vsel %vm493, %v490, %v492
        %499 = vrot.lane.b32.xlu0 %v415, 106
        %v500 = vpop.permute.xlu0 %499
        %501 = vrot.lane.b32.xlu0 %v419, 106
        %v502 = vpop.permute.xlu0 %501
        %503 = vrot.lane.b32.xlu0 %v423, 106
        %v504 = vpop.permute.xlu0 %503
        %vm505 = vcmask 867328
        %v506 = vsel %vm505, %v500, %v502
        %v507 = vsel %vm505, %v502, %v504
        %511 = vrot.lane.b32.xlu0 %v415, 105
        %v512 = vpop.permute.xlu0 %511
        %513 = vrot.lane.b32.xlu0 %v419, 105
        %v514 = vpop.permute.xlu0 %513
        %515 = vrot.lane.b32.xlu0 %v423, 105
        %v516 = vpop.permute.xlu0 %515
        %vm517 = vcmask 859136
        %v518 = vsel %vm517, %v512, %v514
        %v519 = vsel %vm517, %v514, %v516
        %523 = vrot.lane.b32.xlu0 %v415, 104
        %v524 = vpop.permute.xlu0 %523
        %525 = vrot.lane.b32.xlu0 %v419, 104
        %v526 = vpop.permute.xlu0 %525
        %527 = vrot.lane.b32.xlu0 %v423, 104
        %v528 = vpop.permute.xlu0 %527
        %vm529 = vcmask 850944
        %v530 = vsel %vm529, %v524, %v526
        %v531 = vsel %vm529, %v526, %v528
        %535 = vrot.lane.b32.xlu0 %v415, 103
        %v536 = vpop.permute.xlu0 %535
        %537 = vrot.lane.b32.xlu0 %v419, 103
        %v538 = vpop.permute.xlu0 %537
        %539 = vrot.lane.b32.xlu0 %v423, 103
        %v540 = vpop.permute.xlu0 %539
        %vm541 = vcmask 842752
        %v542 = vsel %vm541, %v536, %v538
        %v543 = vsel %vm541, %v538, %v540
        %547 = vrot.lane.b32.xlu0 %v415, 102
        %v548 = vpop.permute.xlu0 %547
        %549 = vrot.lane.b32.xlu0 %v419, 102
        %v550 = vpop.permute.xlu0 %549
        %551 = vrot.lane.b32.xlu0 %v423, 102
        %v552 = vpop.permute.xlu0 %551
        %vm553 = vcmask 834560
        %v554 = vsel %vm553, %v548, %v550
        %v555 = vsel %vm553, %v550, %v552
        %559 = vrot.lane.b32.xlu0 %v415, 101
        %v560 = vpop.permute.xlu0 %559
        %561 = vrot.lane.b32.xlu0 %v419, 101
        %v562 = vpop.permute.xlu0 %561
        %563 = vrot.lane.b32.xlu0 %v423, 101
        %v564 = vpop.permute.xlu0 %563
        %vm565 = vcmask 826368
        %v566 = vsel %vm565, %v560, %v562
        %v567 = vsel %vm565, %v562, %v564
        %571 = vrot.lane.b32.xlu0 %v415, 100
        %v572 = vpop.permute.xlu0 %571
        %573 = vrot.lane.b32.xlu0 %v419, 100
        %v574 = vpop.permute.xlu0 %573
        %575 = vrot.lane.b32.xlu0 %v423, 100
        %v576 = vpop.permute.xlu0 %575
        %vm577 = vcmask 818176
        %v578 = vsel %vm577, %v572, %v574
        %v579 = vsel %vm577, %v574, %v576
        %v584 = vlaneseq
        %v585 = vshrl.u32 %v584, 7
        %v586 = vsub.s32 0, %v585
        %v587 = vrot.slane %v408, %v586
        %v588 = vlaneseq
        %v589 = vshrl.u32 %v588, 7
        %v590 = vsub.s32 1, %v589
        %v591 = vrot.slane %v408, %v590
        %v592 = vlaneseq
        %v593 = vshrl.u32 %v592, 7
        %v594 = vsub.s32 2, %v593
        %v595 = vrot.slane %v408, %v594
        %v596 = vlaneseq
        %v597 = vshrl.u32 %v596, 7
        %v598 = vsub.s32 3, %v597
        %v599 = vrot.slane %v408, %v598
        %600 = vrot.lane.b32.xlu0 %v587, 84
        %v601 = vpop.permute.xlu0 %600
        %602 = vrot.lane.b32.xlu0 %v591, 84
        %v603 = vpop.permute.xlu0 %602
        %604 = vrot.lane.b32.xlu0 %v595, 84
        %v605 = vpop.permute.xlu0 %604
        %606 = vrot.lane.b32.xlu0 %v599, 84
        %v607 = vpop.permute.xlu0 %606
        %vm608 = vcmask 687104
        %v609 = vsel %vm608, %v601, %v603
        %v610 = vsel %vm608, %v603, %v605
        %v611 = vsel %vm608, %v605, %v607
        %615 = vrot.lane.b32.xlu0 %v587, 83
        %v616 = vpop.permute.xlu0 %615
        %617 = vrot.lane.b32.xlu0 %v591, 83
        %v618 = vpop.permute.xlu0 %617
        %619 = vrot.lane.b32.xlu0 %v595, 83
        %v620 = vpop.permute.xlu0 %619
        %621 = vrot.lane.b32.xlu0 %v599, 83
        %v622 = vpop.permute.xlu0 %621
        %vm623 = vcmask 678912
        %v624 = vsel %vm623, %v616, %v618
        %v625 = vsel %vm623, %v618, %v620
        %v626 = vsel %vm623, %v620, %v622
        %vm630 = vcmask 1040384
        %v631 = vsel %vm630, %v415, %v434
        %v632 = vsel %vm630, %v419, %v435
        %v633 = vsel %vm630, %v423, %v432
        %vm634 = vcmask 1041408
        %v635 = vsel %vm634, %v631, %v446
        %v636 = vsel %vm634, %v632, %v447
        %v637 = vsel %vm634, %v633, %v444
        %vm638 = vcmask 1042432
        %v639 = vsel %vm638, %v635, %v458
        %v640 = vsel %vm638, %v636, %v459
        %v641 = vsel %vm638, %v637, %v456
        %vm642 = vcmask 1043456
        %v643 = vsel %vm642, %v639, %v470
        %v644 = vsel %vm642, %v640, %v471
        %v645 = vsel %vm642, %v641, %v468
        %vm646 = vcmask 1044480
        %v647 = vsel %vm646, %v643, %v482
        %v648 = vsel %vm646, %v644, %v483
        %v649 = vsel %vm646, %v645, %v480
        %vm650 = vcmask 1045504
        %v651 = vsel %vm650, %v647, %v494
        %v652 = vsel %vm650, %v648, %v495
        %v653 = vsel %vm650, %v649, %v492
        %vm654 = vcmask 1046528
        %v655 = vsel %vm654, %v651, %v506
        %v656 = vsel %vm654, %v652, %v507
        %v657 = vsel %vm654, %v653, %v504
        %v658 = vsel %vm630, %v518, %v530
        %v659 = vsel %vm630, %v519, %v531
        %v660 = vsel %vm630, %v516, %v528
        %v661 = vsel %vm634, %v658, %v542
        %v662 = vsel %vm634, %v659, %v543
        %v663 = vsel %vm634, %v660, %v540
        %v664 = vsel %vm638, %v661, %v554
        %v665 = vsel %vm638, %v662, %v555
        %v666 = vsel %vm638, %v663, %v552
        %v667 = vsel %vm642, %v664, %v566
        %v668 = vsel %vm642, %v665, %v567
        %v669 = vsel %vm642, %v666, %v564
        %v670 = vsel %vm646, %v667, %v578
        %v671 = vsel %vm646, %v668, %v579
        %v672 = vsel %vm646, %v669, %v576
        %v673 = vsel %vm650, %v670, %v609
        %v674 = vsel %vm650, %v671, %v610
        %v675 = vsel %vm650, %v672, %v611
        %v676 = vsel %vm654, %v673, %v624
        %v677 = vsel %vm654, %v674, %v625
        %v678 = vsel %vm654, %v675, %v626
        %683 = vrot.lane.b32.xlu0 %v587, 127
        %v684 = vpop.permute.xlu0 %683
        %685 = vrot.lane.b32.xlu0 %v591, 127
        %v686 = vpop.permute.xlu0 %685
        %687 = vrot.lane.b32.xlu0 %v595, 127
        %v688 = vpop.permute.xlu0 %687
        %689 = vrot.lane.b32.xlu0 %v599, 127
        %v690 = vpop.permute.xlu0 %689
        %v691 = vsel %vm433, %v684, %v686
        %v692 = vsel %vm433, %v686, %v688
        %v693 = vsel %vm433, %v688, %v690
        %698 = vrot.lane.b32.xlu0 %v587, 126
        %v699 = vpop.permute.xlu0 %698
        %700 = vrot.lane.b32.xlu0 %v591, 126
        %v701 = vpop.permute.xlu0 %700
        %702 = vrot.lane.b32.xlu0 %v595, 126
        %v703 = vpop.permute.xlu0 %702
        %704 = vrot.lane.b32.xlu0 %v599, 126
        %v705 = vpop.permute.xlu0 %704
        %v706 = vsel %vm445, %v699, %v701
        %v707 = vsel %vm445, %v701, %v703
        %v708 = vsel %vm445, %v703, %v705
        %713 = vrot.lane.b32.xlu0 %v587, 125
        %v714 = vpop.permute.xlu0 %713
        %715 = vrot.lane.b32.xlu0 %v591, 125
        %v716 = vpop.permute.xlu0 %715
        %717 = vrot.lane.b32.xlu0 %v595, 125
        %v718 = vpop.permute.xlu0 %717
        %719 = vrot.lane.b32.xlu0 %v599, 125
        %v720 = vpop.permute.xlu0 %719
        %v721 = vsel %vm457, %v714, %v716
        %v722 = vsel %vm457, %v716, %v718
        %v723 = vsel %vm457, %v718, %v720
        %728 = vrot.lane.b32.xlu0 %v587, 124
        %v729 = vpop.permute.xlu0 %728
        %730 = vrot.lane.b32.xlu0 %v591, 124
        %v731 = vpop.permute.xlu0 %730
        %732 = vrot.lane.b32.xlu0 %v595, 124
        %v733 = vpop.permute.xlu0 %732
        %734 = vrot.lane.b32.xlu0 %v599, 124
        %v735 = vpop.permute.xlu0 %734
        %v736 = vsel %vm469, %v729, %v731
        %v737 = vsel %vm469, %v731, %v733
        %v738 = vsel %vm469, %v733, %v735
        %743 = vrot.lane.b32.xlu0 %v587, 108
        %v744 = vpop.permute.xlu0 %743
        %745 = vrot.lane.b32.xlu0 %v591, 108
        %v746 = vpop.permute.xlu0 %745
        %747 = vrot.lane.b32.xlu0 %v595, 108
        %v748 = vpop.permute.xlu0 %747
        %749 = vrot.lane.b32.xlu0 %v599, 108
        %v750 = vpop.permute.xlu0 %749
        %vm751 = vcmask 883712
        %v752 = vsel %vm751, %v744, %v746
        %v753 = vsel %vm751, %v746, %v748
        %v754 = vsel %vm751, %v748, %v750
        %759 = vrot.lane.b32.xlu0 %v587, 107
        %v760 = vpop.permute.xlu0 %759
        %761 = vrot.lane.b32.xlu0 %v591, 107
        %v762 = vpop.permute.xlu0 %761
        %763 = vrot.lane.b32.xlu0 %v595, 107
        %v764 = vpop.permute.xlu0 %763
        %765 = vrot.lane.b32.xlu0 %v599, 107
        %v766 = vpop.permute.xlu0 %765
        %vm767 = vcmask 875520
        %v768 = vsel %vm767, %v760, %v762
        %v769 = vsel %vm767, %v762, %v764
        %v770 = vsel %vm767, %v764, %v766
        %775 = vrot.lane.b32.xlu0 %v587, 106
        %v776 = vpop.permute.xlu0 %775
        %777 = vrot.lane.b32.xlu0 %v591, 106
        %v778 = vpop.permute.xlu0 %777
        %779 = vrot.lane.b32.xlu0 %v595, 106
        %v780 = vpop.permute.xlu0 %779
        %781 = vrot.lane.b32.xlu0 %v599, 106
        %v782 = vpop.permute.xlu0 %781
        %v783 = vsel %vm505, %v776, %v778
        %v784 = vsel %vm505, %v778, %v780
        %v785 = vsel %vm505, %v780, %v782
        %790 = vrot.lane.b32.xlu0 %v587, 105
        %v791 = vpop.permute.xlu0 %790
        %792 = vrot.lane.b32.xlu0 %v591, 105
        %v793 = vpop.permute.xlu0 %792
        %794 = vrot.lane.b32.xlu0 %v595, 105
        %v795 = vpop.permute.xlu0 %794
        %796 = vrot.lane.b32.xlu0 %v599, 105
        %v797 = vpop.permute.xlu0 %796
        %v798 = vsel %vm517, %v791, %v793
        %v799 = vsel %vm517, %v793, %v795
        %v800 = vsel %vm517, %v795, %v797
        %805 = vrot.lane.b32.xlu0 %v587, 104
        %v806 = vpop.permute.xlu0 %805
        %807 = vrot.lane.b32.xlu0 %v591, 104
        %v808 = vpop.permute.xlu0 %807
        %809 = vrot.lane.b32.xlu0 %v595, 104
        %v810 = vpop.permute.xlu0 %809
        %811 = vrot.lane.b32.xlu0 %v599, 104
        %v812 = vpop.permute.xlu0 %811
        %v813 = vsel %vm529, %v806, %v808
        %v814 = vsel %vm529, %v808, %v810
        %v815 = vsel %vm529, %v810, %v812
        %820 = vrot.lane.b32.xlu0 %v587, 103
        %v821 = vpop.permute.xlu0 %820
        %822 = vrot.lane.b32.xlu0 %v591, 103
        %v823 = vpop.permute.xlu0 %822
        %824 = vrot.lane.b32.xlu0 %v595, 103
        %v825 = vpop.permute.xlu0 %824
        %826 = vrot.lane.b32.xlu0 %v599, 103
        %v827 = vpop.permute.xlu0 %826
        %v828 = vsel %vm541, %v821, %v823
        %v829 = vsel %vm541, %v823, %v825
        %v830 = vsel %vm541, %v825, %v827
        %835 = vrot.lane.b32.xlu0 %v587, 102
        %v836 = vpop.permute.xlu0 %835
        %837 = vrot.lane.b32.xlu0 %v591, 102
        %v838 = vpop.permute.xlu0 %837
        %839 = vrot.lane.b32.xlu0 %v595, 102
        %v840 = vpop.permute.xlu0 %839
        %841 = vrot.lane.b32.xlu0 %v599, 102
        %v842 = vpop.permute.xlu0 %841
        %v843 = vsel %vm553, %v836, %v838
        %v844 = vsel %vm553, %v838, %v840
        %v845 = vsel %vm553, %v840, %v842
        %850 = vrot.lane.b32.xlu0 %v587, 86
        %v851 = vpop.permute.xlu0 %850
        %852 = vrot.lane.b32.xlu0 %v591, 86
        %v853 = vpop.permute.xlu0 %852
        %854 = vrot.lane.b32.xlu0 %v595, 86
        %v855 = vpop.permute.xlu0 %854
        %856 = vrot.lane.b32.xlu0 %v599, 86
        %v857 = vpop.permute.xlu0 %856
        %vm858 = vcmask 703488
        %v859 = vsel %vm858, %v851, %v853
        %v860 = vsel %vm858, %v853, %v855
        %v861 = vsel %vm858, %v855, %v857
        %866 = vrot.lane.b32.xlu0 %v587, 85
        %v867 = vpop.permute.xlu0 %866
        %868 = vrot.lane.b32.xlu0 %v591, 85
        %v869 = vpop.permute.xlu0 %868
        %870 = vrot.lane.b32.xlu0 %v595, 85
        %v871 = vpop.permute.xlu0 %870
        %872 = vrot.lane.b32.xlu0 %v599, 85
        %v873 = vpop.permute.xlu0 %872
        %vm874 = vcmask 695296
        %v875 = vsel %vm874, %v867, %v869
        %v876 = vsel %vm874, %v869, %v871
        %v877 = vsel %vm874, %v871, %v873
        %v884 = vsel %vm630, %v587, %v691
        %v885 = vsel %vm630, %v591, %v692
        %v886 = vsel %vm630, %v595, %v693
        %v887 = vsel %vm630, %v599, %v690
        %v888 = vsel %vm634, %v884, %v706
        %v889 = vsel %vm634, %v885, %v707
        %v890 = vsel %vm634, %v886, %v708
        %v891 = vsel %vm634, %v887, %v705
        %v892 = vsel %vm638, %v888, %v721
        %v893 = vsel %vm638, %v889, %v722
        %v894 = vsel %vm638, %v890, %v723
        %v895 = vsel %vm638, %v891, %v720
        %v896 = vsel %vm642, %v892, %v736
        %v897 = vsel %vm642, %v893, %v737
        %v898 = vsel %vm642, %v894, %v738
        %v899 = vsel %vm642, %v895, %v735
        %v900 = vsel %vm646, %v896, %v752
        %v901 = vsel %vm646, %v897, %v753
        %v902 = vsel %vm646, %v898, %v754
        %v903 = vsel %vm646, %v899, %v750
        %v904 = vsel %vm650, %v900, %v768
        %v905 = vsel %vm650, %v901, %v769
        %v906 = vsel %vm650, %v902, %v770
        %v907 = vsel %vm650, %v903, %v766
        %v908 = vsel %vm654, %v904, %v783
        %v909 = vsel %vm654, %v905, %v784
        %v910 = vsel %vm654, %v906, %v785
        %v911 = vsel %vm654, %v907, %v782
        %v912 = vsel %vm630, %v798, %v813
        %v913 = vsel %vm630, %v799, %v814
        %v914 = vsel %vm630, %v800, %v815
        %v915 = vsel %vm630, %v797, %v812
        %v916 = vsel %vm634, %v912, %v828
        %v917 = vsel %vm634, %v913, %v829
        %v918 = vsel %vm634, %v914, %v830
        %v919 = vsel %vm634, %v915, %v827
        %v920 = vsel %vm638, %v916, %v843
        %v921 = vsel %vm638, %v917, %v844
        %v922 = vsel %vm638, %v918, %v845
        %v923 = vsel %vm638, %v919, %v842
        %v924 = vsel %vm642, %v920, %v859
        %v925 = vsel %vm642, %v921, %v860
        %v926 = vsel %vm642, %v922, %v861
        %v927 = vsel %vm642, %v923, %v857
        %v928 = vsel %vm646, %v924, %v875
        %v929 = vsel %vm646, %v925, %v876
        %v930 = vsel %vm646, %v926, %v877
        %v931 = vsel %vm646, %v927, %v873
        %v932 = vsel %vm650, %v928, %v609
        %v933 = vsel %vm650, %v929, %v610
        %v934 = vsel %vm650, %v930, %v611
        %v935 = vsel %vm650, %v931, %v607
        %v936 = vsel %vm654, %v932, %v624
        %v937 = vsel %vm654, %v933, %v625
        %v938 = vsel %vm654, %v934, %v626
        %v939 = vsel %vm654, %v935, %v622
        %940 = vrot.lane.b32.xlu0 %v587, 110
        %v941 = vpop.permute.xlu0 %940
        %942 = vrot.lane.b32.xlu0 %v591, 110
        %v943 = vpop.permute.xlu0 %942
        %944 = vrot.lane.b32.xlu0 %v595, 110
        %v945 = vpop.permute.xlu0 %944
        %946 = vrot.lane.b32.xlu0 %v599, 110
        %v947 = vpop.permute.xlu0 %946
        %vm948 = vcmask 900096
        %v949 = vsel %vm948, %v941, %v943
        %v950 = vsel %vm948, %v943, %v945
        %v951 = vsel %vm948, %v945, %v947
        %956 = vrot.lane.b32.xlu0 %v587, 109
        %v957 = vpop.permute.xlu0 %956
        %958 = vrot.lane.b32.xlu0 %v591, 109
        %v959 = vpop.permute.xlu0 %958
        %960 = vrot.lane.b32.xlu0 %v595, 109
        %v961 = vpop.permute.xlu0 %960
        %962 = vrot.lane.b32.xlu0 %v599, 109
        %v963 = vpop.permute.xlu0 %962
        %vm964 = vcmask 891904
        %v965 = vsel %vm964, %v957, %v959
        %v966 = vsel %vm964, %v959, %v961
        %v967 = vsel %vm964, %v961, %v963
        %v973 = vlaneseq
        %v974 = vshrl.u32 %v973, 7
        %v975 = vsub.s32 0, %v974
        %v976 = vrot.slane %v410, %v975
        %v977 = vlaneseq
        %v978 = vshrl.u32 %v977, 7
        %v979 = vsub.s32 1, %v978
        %v980 = vrot.slane %v410, %v979
        %v981 = vlaneseq
        %v982 = vshrl.u32 %v981, 7
        %v983 = vsub.s32 2, %v982
        %v984 = vrot.slane %v410, %v983
        %985 = vrot.lane.b32.xlu0 %v976, 88
        %v986 = vpop.permute.xlu0 %985
        %987 = vrot.lane.b32.xlu0 %v980, 88
        %v988 = vpop.permute.xlu0 %987
        %989 = vrot.lane.b32.xlu0 %v984, 88
        %v990 = vpop.permute.xlu0 %989
        %vm991 = vcmask 719872
        %v992 = vsel %vm991, %v986, %v988
        %v993 = vsel %vm991, %v988, %v990
        %998 = vrot.lane.b32.xlu0 %v976, 87
        %v999 = vpop.permute.xlu0 %998
        %1000 = vrot.lane.b32.xlu0 %v980, 87
        %v1001 = vpop.permute.xlu0 %1000
        %1002 = vrot.lane.b32.xlu0 %v984, 87
        %v1003 = vpop.permute.xlu0 %1002
        %vm1004 = vcmask 711680
        %v1005 = vsel %vm1004, %v999, %v1001
        %v1006 = vsel %vm1004, %v1001, %v1003
        %1011 = vrot.lane.b32.xlu0 %v976, 86
        %v1012 = vpop.permute.xlu0 %1011
        %1013 = vrot.lane.b32.xlu0 %v980, 86
        %v1014 = vpop.permute.xlu0 %1013
        %1015 = vrot.lane.b32.xlu0 %v984, 86
        %v1016 = vpop.permute.xlu0 %1015
        %v1017 = vsel %vm858, %v1012, %v1014
        %v1018 = vsel %vm858, %v1014, %v1016
        %1023 = vrot.lane.b32.xlu0 %v976, 85
        %v1024 = vpop.permute.xlu0 %1023
        %1025 = vrot.lane.b32.xlu0 %v980, 85
        %v1026 = vpop.permute.xlu0 %1025
        %1027 = vrot.lane.b32.xlu0 %v984, 85
        %v1028 = vpop.permute.xlu0 %1027
        %v1029 = vsel %vm874, %v1024, %v1026
        %v1030 = vsel %vm874, %v1026, %v1028
        %1035 = vrot.lane.b32.xlu0 %v976, 84
        %v1036 = vpop.permute.xlu0 %1035
        %1037 = vrot.lane.b32.xlu0 %v980, 84
        %v1038 = vpop.permute.xlu0 %1037
        %1039 = vrot.lane.b32.xlu0 %v984, 84
        %v1040 = vpop.permute.xlu0 %1039
        %v1041 = vsel %vm608, %v1036, %v1038
        %v1042 = vsel %vm608, %v1038, %v1040
        %1047 = vrot.lane.b32.xlu0 %v976, 83
        %v1048 = vpop.permute.xlu0 %1047
        %1049 = vrot.lane.b32.xlu0 %v980, 83
        %v1050 = vpop.permute.xlu0 %1049
        %1051 = vrot.lane.b32.xlu0 %v984, 83
        %v1052 = vpop.permute.xlu0 %1051
        %v1053 = vsel %vm623, %v1048, %v1050
        %v1054 = vsel %vm623, %v1050, %v1052
        %v1059 = vsel %vm638, %v888, %v949
        %v1060 = vsel %vm638, %v889, %v950
        %v1061 = vsel %vm638, %v890, %v951
        %v1062 = vsel %vm638, %v891, %v947
        %v1063 = vsel %vm642, %v1059, %v965
        %v1064 = vsel %vm642, %v1060, %v966
        %v1065 = vsel %vm642, %v1061, %v967
        %v1066 = vsel %vm642, %v1062, %v963
        %v1067 = vsel %vm646, %v1063, %v752
        %v1068 = vsel %vm646, %v1064, %v753
        %v1069 = vsel %vm646, %v1065, %v754
        %v1070 = vsel %vm646, %v1066, %v750
        %v1071 = vsel %vm650, %v1067, %v768
        %v1072 = vsel %vm650, %v1068, %v769
        %v1073 = vsel %vm650, %v1069, %v770
        %v1074 = vsel %vm650, %v1070, %v766
        %v1075 = vsel %vm654, %v1071, %v783
        %v1076 = vsel %vm654, %v1072, %v784
        %v1077 = vsel %vm654, %v1073, %v785
        %v1078 = vsel %vm654, %v1074, %v782
        %v1079 = vsel %vm634, %v912, %v986
        %v1080 = vsel %vm634, %v913, %v992
        %v1081 = vsel %vm634, %v914, %v993
        %v1082 = vsel %vm634, %v915, %v990
        %v1083 = vsel %vm638, %v1079, %v999
        %v1084 = vsel %vm638, %v1080, %v1005
        %v1085 = vsel %vm638, %v1081, %v1006
        %v1086 = vsel %vm638, %v1082, %v1003
        %v1087 = vsel %vm642, %v1083, %v1012
        %v1088 = vsel %vm642, %v1084, %v1017
        %v1089 = vsel %vm642, %v1085, %v1018
        %v1090 = vsel %vm642, %v1086, %v1016
        %v1091 = vsel %vm646, %v1087, %v1024
        %v1092 = vsel %vm646, %v1088, %v1029
        %v1093 = vsel %vm646, %v1089, %v1030
        %v1094 = vsel %vm646, %v1090, %v1028
        %v1095 = vsel %vm650, %v1091, %v1036
        %v1096 = vsel %vm650, %v1092, %v1041
        %v1097 = vsel %vm650, %v1093, %v1042
        %v1098 = vsel %vm650, %v1094, %v1040
        %v1099 = vsel %vm654, %v1095, %v1048
        %v1100 = vsel %vm654, %v1096, %v1053
        %v1101 = vsel %vm654, %v1097, %v1054
        %v1102 = vsel %vm654, %v1098, %v1052
        %v1107 = vlaneseq
        %v1108 = vshrl.u32 %v1107, 7
        %v1109 = vsub.s32 0, %v1108
        %v1110 = vrot.slane %v404, %v1109
        %v1111 = vlaneseq
        %v1112 = vshrl.u32 %v1111, 7
        %v1113 = vsub.s32 1, %v1112
        %v1114 = vrot.slane %v404, %v1113
        %v1115 = vlaneseq
        %v1116 = vshrl.u32 %v1115, 7
        %v1117 = vsub.s32 2, %v1116
        %v1118 = vrot.slane %v404, %v1117
        %1119 = vrot.lane.b32.xlu0 %v1110, 7
        %v1120 = vpop.permute.xlu0 %1119
        %1121 = vrot.lane.b32.xlu0 %v1114, 7
        %v1122 = vpop.permute.xlu0 %1121
        %1123 = vrot.lane.b32.xlu0 %v1118, 7
        %v1124 = vpop.permute.xlu0 %1123
        %vm1125 = vcmask 56320
        %v1126 = vsel %vm1125, %v1120, %v1122
        %v1127 = vsel %vm1125, %v1122, %v1124
        %1131 = vrot.lane.b32.xlu0 %v1110, 113
        %v1132 = vpop.permute.xlu0 %1131
        %1133 = vrot.lane.b32.xlu0 %v1114, 113
        %v1134 = vpop.permute.xlu0 %1133
        %1135 = vrot.lane.b32.xlu0 %v1118, 113
        %v1136 = vpop.permute.xlu0 %1135
        %vm1137 = vcmask 924672
        %v1138 = vsel %vm1137, %v1132, %v1134
        %v1139 = vsel %vm1137, %v1134, %v1136
        %v1144 = vlaneseq
        %v1145 = vshrl.u32 %v1144, 7
        %v1146 = vsub.s32 0, %v1145
        %v1147 = vrot.slane %v405, %v1146
        %v1148 = vlaneseq
        %v1149 = vshrl.u32 %v1148, 7
        %v1150 = vsub.s32 1, %v1149
        %v1151 = vrot.slane %v405, %v1150
        %v1152 = vlaneseq
        %v1153 = vshrl.u32 %v1152, 7
        %v1154 = vsub.s32 2, %v1153
        %v1155 = vrot.slane %v405, %v1154
        %v1156 = vlaneseq
        %v1157 = vshrl.u32 %v1156, 7
        %v1158 = vsub.s32 3, %v1157
        %v1159 = vrot.slane %v405, %v1158
        %1160 = vrot.lane.b32.xlu0 %v1147, 91
        %v1161 = vpop.permute.xlu0 %1160
        %1162 = vrot.lane.b32.xlu0 %v1151, 91
        %v1163 = vpop.permute.xlu0 %1162
        %1164 = vrot.lane.b32.xlu0 %v1155, 91
        %v1165 = vpop.permute.xlu0 %1164
        %1166 = vrot.lane.b32.xlu0 %v1159, 91
        %v1167 = vpop.permute.xlu0 %1166
        %vm1168 = vcmask 744448
        %v1169 = vsel %vm1168, %v1161, %v1163
        %v1170 = vsel %vm1168, %v1163, %v1165
        %v1171 = vsel %vm1168, %v1165, %v1167
        %1175 = vrot.lane.b32.xlu0 %v1147, 69
        %v1176 = vpop.permute.xlu0 %1175
        %1177 = vrot.lane.b32.xlu0 %v1151, 69
        %v1178 = vpop.permute.xlu0 %1177
        %1179 = vrot.lane.b32.xlu0 %v1155, 69
        %v1180 = vpop.permute.xlu0 %1179
        %1181 = vrot.lane.b32.xlu0 %v1159, 69
        %v1182 = vpop.permute.xlu0 %1181
        %vm1183 = vcmask 564224
        %v1184 = vsel %vm1183, %v1176, %v1178
        %v1185 = vsel %vm1183, %v1178, %v1180
        %v1186 = vsel %vm1183, %v1180, %v1182
        %1190 = vrot.lane.b32.xlu0 %v1147, 47
        %v1191 = vpop.permute.xlu0 %1190
        %1192 = vrot.lane.b32.xlu0 %v1151, 47
        %v1193 = vpop.permute.xlu0 %1192
        %1194 = vrot.lane.b32.xlu0 %v1155, 47
        %v1195 = vpop.permute.xlu0 %1194
        %1196 = vrot.lane.b32.xlu0 %v1159, 47
        %v1197 = vpop.permute.xlu0 %1196
        %vm1198 = vcmask 384000
        %v1199 = vsel %vm1198, %v1191, %v1193
        %v1200 = vsel %vm1198, %v1193, %v1195
        %v1201 = vsel %vm1198, %v1195, %v1197
        %1205 = vrot.lane.b32.xlu0 %v1147, 25
        %v1206 = vpop.permute.xlu0 %1205
        %1207 = vrot.lane.b32.xlu0 %v1151, 25
        %v1208 = vpop.permute.xlu0 %1207
        %1209 = vrot.lane.b32.xlu0 %v1155, 25
        %v1210 = vpop.permute.xlu0 %1209
        %1211 = vrot.lane.b32.xlu0 %v1159, 25
        %v1212 = vpop.permute.xlu0 %1211
        %vm1213 = vcmask 203776
        %v1214 = vsel %vm1213, %v1206, %v1208
        %v1215 = vsel %vm1213, %v1208, %v1210
        %v1216 = vsel %vm1213, %v1210, %v1212
        %v1221 = vlaneseq
        %v1222 = vshrl.u32 %v1221, 7
        %v1223 = vsub.s32 0, %v1222
        %v1224 = vrot.slane %v406, %v1223
        %v1225 = vlaneseq
        %v1226 = vshrl.u32 %v1225, 7
        %v1227 = vsub.s32 1, %v1226
        %v1228 = vrot.slane %v406, %v1227
        %v1229 = vlaneseq
        %v1230 = vshrl.u32 %v1229, 7
        %v1231 = vsub.s32 2, %v1230
        %v1232 = vrot.slane %v406, %v1231
        %1233 = vrot.lane.b32.xlu0 %v1224, 3
        %v1234 = vpop.permute.xlu0 %1233
        %1235 = vrot.lane.b32.xlu0 %v1228, 3
        %v1236 = vpop.permute.xlu0 %1235
        %1237 = vrot.lane.b32.xlu0 %v1232, 3
        %v1238 = vpop.permute.xlu0 %1237
        %vm1239 = vcmask 23552
        %v1240 = vsel %vm1239, %v1234, %v1236
        %v1241 = vsel %vm1239, %v1236, %v1238
        %v1245 = vsel %vm630, %v976, %v1120
        %v1246 = vsel %vm630, %v980, %v1126
        %v1247 = vsel %vm630, %v984, %v1127
        %v1248 = vsel %vm634, %v1245, %v1138
        %v1249 = vsel %vm634, %v1246, %v1139
        %v1250 = vsel %vm634, %v1247, %v1136
        %v1251 = vsel %vm638, %v1248, %v1169
        %v1252 = vsel %vm638, %v1249, %v1170
        %v1253 = vsel %vm638, %v1250, %v1171
        %v1254 = vsel %vm642, %v1251, %v1184
        %v1255 = vsel %vm642, %v1252, %v1185
        %v1256 = vsel %vm642, %v1253, %v1186
        %v1257 = vsel %vm646, %v1254, %v1199
        %v1258 = vsel %vm646, %v1255, %v1200
        %v1259 = vsel %vm646, %v1256, %v1201
        %v1260 = vsel %vm650, %v1257, %v1214
        %v1261 = vsel %vm650, %v1258, %v1215
        %v1262 = vsel %vm650, %v1259, %v1216
        %v1263 = vsel %vm654, %v1260, %v1234
        %v1264 = vsel %vm654, %v1261, %v1240
        %v1265 = vsel %vm654, %v1262, %v1241
        %1274 = vrot.lane.b32.xlu0 %v908, 82
        %v1275 = vpop.permute.xlu0 %1274
        %1276 = vrot.lane.b32.xlu0 %v909, 82
        %v1277 = vpop.permute.xlu0 %1276
        %1278 = vrot.lane.b32.xlu0 %v910, 82
        %v1279 = vpop.permute.xlu0 %1278
        %1280 = vrot.lane.b32.xlu0 %v911, 82
        %v1281 = vpop.permute.xlu0 %1280
        %1282 = vrot.lane.b32.xlu0 %v936, 82
        %v1283 = vpop.permute.xlu0 %1282
        %1284 = vrot.lane.b32.xlu0 %v937, 82
        %v1285 = vpop.permute.xlu0 %1284
        %1286 = vrot.lane.b32.xlu0 %v938, 82
        %v1287 = vpop.permute.xlu0 %1286
        %1288 = vrot.lane.b32.xlu0 %v939, 82
        %v1289 = vpop.permute.xlu0 %1288
        %vm1290 = vcmask 670720
        %v1291 = vsel %vm1290, %v1275, %v1277
        %v1292 = vsel %vm1290, %v1277, %v1279
        %v1293 = vsel %vm1290, %v1279, %v1281
        %v1294 = vsel %vm1290, %v1283, %v1285
        %v1295 = vsel %vm1290, %v1285, %v1287
        %v1296 = vsel %vm1290, %v1287, %v1289
        %1311 = vrot.lane.b32.xlu0 %v1075, 36
        %v1312 = vpop.permute.xlu0 %1311
        %1313 = vrot.lane.b32.xlu0 %v1076, 36
        %v1314 = vpop.permute.xlu0 %1313
        %1315 = vrot.lane.b32.xlu0 %v1077, 36
        %v1316 = vpop.permute.xlu0 %1315
        %1317 = vrot.lane.b32.xlu0 %v1078, 36
        %v1318 = vpop.permute.xlu0 %1317
        %1319 = vrot.lane.b32.xlu0 %v1099, 36
        %v1320 = vpop.permute.xlu0 %1319
        %1321 = vrot.lane.b32.xlu0 %v1100, 36
        %v1322 = vpop.permute.xlu0 %1321
        %1323 = vrot.lane.b32.xlu0 %v1101, 36
        %v1324 = vpop.permute.xlu0 %1323
        %1325 = vrot.lane.b32.xlu0 %v1102, 36
        %v1326 = vpop.permute.xlu0 %1325
        %vm1327 = vcmask 293888
        %v1328 = vsel %vm1327, %v1312, %v1314
        %v1329 = vsel %vm1327, %v1314, %v1316
        %v1330 = vsel %vm1327, %v1316, %v1318
        %v1331 = vsel %vm1327, %v1320, %v1322
        %v1332 = vsel %vm1327, %v1322, %v1324
        %v1333 = vsel %vm1327, %v1324, %v1326
        %1343 = vrot.lane.b32.xlu0 %v1263, 118
        %v1344 = vpop.permute.xlu0 %1343
        %1345 = vrot.lane.b32.xlu0 %v1264, 118
        %v1346 = vpop.permute.xlu0 %1345
        %1347 = vrot.lane.b32.xlu0 %v1265, 118
        %v1348 = vpop.permute.xlu0 %1347
        %vm1349 = vcmask 965632
        %v1350 = vsel %vm1349, %v1344, %v1346
        %v1351 = vsel %vm1349, %v1346, %v1348
        %v1355 = vld [vmem:[%s317] sm:$0xf]
        %vm1356 = vcmask 457728
        %v1358 = vsel %vm1356, %v1355, 0
        %1360 = vmatprep.subr.mxu0 0.0
        %1361 = vmatpush1.msra.mxu0 0.0
        %1362 = vmatprep.subr.mxu0 0.0
        %1363 = vmatpush1.msra.mxu0 0.0
        %1364 = vmatprep.subr.mxu0 0.0
        %1365 = vmatpush1.msra.mxu0 0.0
        %1366 = vmatprep.subr.mxu0 0.0
        %1367 = vmatpush1.msra.mxu0 0.0
        %1368 = vmatprep.subr.mxu0 0.0
        %1369 = vmatpush1.msra.mxu0 0.0
        %1370 = vmatprep.subr.mxu0 0.0
        %1371 = vmatpush1.msra.mxu0 0.0
        %1372 = vmatprep.subr.mxu0 0.0
        %1373 = vmatpush1.msra.mxu0 0.0
        %1374 = vmatprep.subr.mxu0 0.0
        %1375 = vmatpush1.msra.mxu0 0.0
        %1376 = vmatprep.subr.mxu0 0.0
        %1377 = vmatpush1.msra.mxu0 0.0
        %1378 = vmatprep.subr.mxu0 %v1351
        %1379 = vmatpush1.msra.mxu0 %v1350
        %1380 = vmatprep.subr.mxu0 %v1332
        %1381 = vmatpush1.msra.mxu0 %v1331
        %1382 = vmatprep.subr.mxu0 %v1329
        %1383 = vmatpush1.msra.mxu0 %v1328
        %1384 = vmatprep.subr.mxu0 %v1295
        %1385 = vmatpush1.msra.mxu0 %v1294
        %1386 = vmatprep.subr.mxu0 %v1292
        %1387 = vmatpush1.msra.mxu0 %v1291
        %1388 = vmatprep.subr.mxu0 %v677
        %1389 = vmatpush1.msra.mxu0 %v676
        %1390 = vmatprep.subr.mxu0 %v656
        %1391 = vmatpush1.msra.mxu0 %v655
        %1392 = vmatprep.subr.mxu0 0.0
        %1393 = vmatpush2.msra.mxu0 0.0
        %1394 = vmatprep.subr.mxu0 0.0
        %1395 = vmatpush2.msra.mxu0 0.0
        %1396 = vmatprep.subr.mxu0 0.0
        %1397 = vmatpush2.msra.mxu0 0.0
        %1398 = vmatprep.subr.mxu0 0.0
        %1399 = vmatpush2.msra.mxu0 0.0
        %1400 = vmatprep.subr.mxu0 0.0
        %1401 = vmatpush2.msra.mxu0 0.0
        %1402 = vmatprep.subr.mxu0 0.0
        %1403 = vmatpush2.msra.mxu0 0.0
        %1404 = vmatprep.subr.mxu0 0.0
        %1405 = vmatpush2.msra.mxu0 0.0
        %1406 = vmatprep.subr.mxu0 0.0
        %1407 = vmatpush2.msra.mxu0 0.0
        %1408 = vmatprep.subr.mxu0 0.0
        %1409 = vmatpush2.msra.mxu0 0.0
        %1410 = vmatprep.subr.mxu0 0.0
        %1411 = vmatpush2.msra.mxu0 0.0
        %1412 = vmatprep.subr.mxu0 0.0
        %1413 = vmatpush2.msra.mxu0 0.0
        %1414 = vmatprep.subr.mxu0 0.0
        %1415 = vmatpush2.msra.mxu0 0.0
        %1416 = vmatprep.subr.mxu0 0.0
        %1417 = vmatpush2.msra.mxu0 0.0
        %1418 = vmatprep.subr.mxu0 0.0
        %1419 = vmatpush2.msra.mxu0 0.0
        %1420 = vmatprep.subr.mxu0 0.0
        %1421 = vmatpush2.msra.mxu0 0.0
        %1422 = vmatprep.subr.mxu0 0.0
        %1423 = vmatpush2.msra.mxu0 0.0
        %1424 = vmatprep.mubr.f32.mxu0 0.0
        %1425 = vmatmul.mubr.f32.gmra.mxu0 %v1358
        %v1426 = vpop.f32.mrf.mxu0
        %v1427 = vadd.f32 0.0, %v1426
        %v1428 = vpop.f32.mrf.mxu0
        %v1429 = vadd.f32 0.0, %v1428
        %1430 = vdwg.mxu0
        %1431 = vmatprep.subr.mxu0 0.0
        %1432 = vmatpush1.msra.mxu0 0.0
        %1433 = vmatprep.subr.mxu0 0.0
        %1434 = vmatpush1.msra.mxu0 0.0
        %1435 = vmatprep.subr.mxu0 0.0
        %1436 = vmatpush1.msra.mxu0 0.0
        %1437 = vmatprep.subr.mxu0 0.0
        %1438 = vmatpush1.msra.mxu0 0.0
        %1439 = vmatprep.subr.mxu0 0.0
        %1440 = vmatpush1.msra.mxu0 0.0
        %1441 = vmatprep.subr.mxu0 0.0
        %1442 = vmatpush1.msra.mxu0 0.0
        %1443 = vmatprep.subr.mxu0 0.0
        %1444 = vmatpush1.msra.mxu0 0.0
        %1445 = vmatprep.subr.mxu0 0.0
        %1446 = vmatpush1.msra.mxu0 0.0
        %1447 = vmatprep.subr.mxu0 0.0
        %1448 = vmatpush1.msra.mxu0 0.0
        %1449 = vmatprep.subr.mxu0 0.0
        %1450 = vmatpush1.msra.mxu0 %v1348
        %1451 = vmatprep.subr.mxu0 0.0
        %1452 = vmatpush1.msra.mxu0 %v1333
        %1453 = vmatprep.subr.mxu0 0.0
        %1454 = vmatpush1.msra.mxu0 %v1330
        %1455 = vmatprep.subr.mxu0 0.0
        %1456 = vmatpush1.msra.mxu0 %v1296
        %1457 = vmatprep.subr.mxu0 0.0
        %1458 = vmatpush1.msra.mxu0 %v1293
        %1459 = vmatprep.subr.mxu0 0.0
        %1460 = vmatpush1.msra.mxu0 %v678
        %1461 = vmatprep.subr.mxu0 0.0
        %1462 = vmatpush1.msra.mxu0 %v657
        %1463 = vmatprep.subr.mxu0 0.0
        %1464 = vmatpush2.msra.mxu0 0.0
        %1465 = vmatprep.subr.mxu0 0.0
        %1466 = vmatpush2.msra.mxu0 0.0
        %1467 = vmatprep.subr.mxu0 0.0
        %1468 = vmatpush2.msra.mxu0 0.0
        %1469 = vmatprep.subr.mxu0 0.0
        %1470 = vmatpush2.msra.mxu0 0.0
        %1471 = vmatprep.subr.mxu0 0.0
        %1472 = vmatpush2.msra.mxu0 0.0
        %1473 = vmatprep.subr.mxu0 0.0
        %1474 = vmatpush2.msra.mxu0 0.0
        %1475 = vmatprep.subr.mxu0 0.0
        %1476 = vmatpush2.msra.mxu0 0.0
        %1477 = vmatprep.subr.mxu0 0.0
        %1478 = vmatpush2.msra.mxu0 0.0
        %1479 = vmatprep.subr.mxu0 0.0
        %1480 = vmatpush2.msra.mxu0 0.0
        %1481 = vmatprep.subr.mxu0 0.0
        %1482 = vmatpush2.msra.mxu0 0.0
        %1483 = vmatprep.subr.mxu0 0.0
        %1484 = vmatpush2.msra.mxu0 0.0
        %1485 = vmatprep.subr.mxu0 0.0
        %1486 = vmatpush2.msra.mxu0 0.0
        %1487 = vmatprep.subr.mxu0 0.0
        %1488 = vmatpush2.msra.mxu0 0.0
        %1489 = vmatprep.subr.mxu0 0.0
        %1490 = vmatpush2.msra.mxu0 0.0
        %1491 = vmatprep.subr.mxu0 0.0
        %1492 = vmatpush2.msra.mxu0 0.0
        %1493 = vmatprep.subr.mxu0 0.0
        %1494 = vmatpush2.msra.mxu0 0.0
        %1495 = vmatprep.mubr.f32.mxu0 0.0
        %1496 = vmatmul.mubr.f32.gmra.mxu0 %v1358
        %v1497 = vpop.f32.mrf.mxu0
        %v1498 = vadd.f32 0.0, %v1497
        %v1499 = vpop.f32.mrf.mxu0
        %1500 = vdwg.mxu0
        %1501 = vrot.lane.b32.xlu0 %v1147, 59
        %v1502 = vpop.permute.xlu0 %1501
        %1503 = vrot.lane.b32.xlu0 %v1151, 59
        %v1504 = vpop.permute.xlu0 %1503
        %1505 = vrot.lane.b32.xlu0 %v1155, 59
        %v1506 = vpop.permute.xlu0 %1505
        %1507 = vrot.lane.b32.xlu0 %v1159, 59
        %v1508 = vpop.permute.xlu0 %1507
        %vm1509 = vcmask 482304
        %v1510 = vsel %vm1509, %v1502, %v1504
        %v1511 = vsel %vm1509, %v1504, %v1506
        %v1512 = vsel %vm1509, %v1506, %v1508
        %v1516 = vmul.f32 %v1427, %v1510
        %v1517 = vmul.f32 %v1429, %v1511
        %v1518 = vmul.f32 %v1498, %v1512
        %1522 = vrot.lane.b32.xlu0 %v1516, 44
        %v1523 = vpop.permute.xlu0 %1522
        %1524 = vrot.lane.b32.xlu0 %v1517, 44
        %v1525 = vpop.permute.xlu0 %1524
        %1526 = vrot.lane.b32.xlu0 %v1518, 44
        %v1527 = vpop.permute.xlu0 %1526
        %v1528 = vsel %vm398, %v1523, %v1525
        %v1529 = vsel %vm398, %v1525, %v1527
        %vm1534 = vcmask 1043808
        %1535 = vst.msk [vmem:[#allocation2] sm:$0xf] %vm1534, %v1523
        %1536 = vst [vmem:[#allocation2 + $0x8] sm:$0xf] %v1528
        %1537 = vst [vmem:[#allocation2 + $0x10] sm:$0xf] %v1529
        %vm1538 = vcmask 93184
        %1539 = vst.msk [vmem:[#allocation2 + $0x18] sm:$0xf] %vm1538, %v1527
        %s1540 = scalar_lea.vmem %s387, 1
        %v1541 = vld [vmem:[%s1540] ss:$4 sm:$0x7]
        %v1542 = vld [vmem:[%s1540] ss:$4 sm:$0xf]
        %s1543 = scalar_lea.vmem %s387, 5
        %v1544 = vld [vmem:[%s1543] ss:$4 sm:$0x7]
        %v1546 = vlaneseq
        %v1547 = vshrl.u32 %v1546, 7
        %v1548 = vsub.s32 0, %v1547
        %v1549 = vrot.slane %v1541, %v1548
        %v1550 = vlaneseq
        %v1551 = vshrl.u32 %v1550, 7
        %v1552 = vsub.s32 1, %v1551
        %v1553 = vrot.slane %v1541, %v1552
        %v1554 = vlaneseq
        %v1555 = vshrl.u32 %v1554, 7
        %v1556 = vsub.s32 2, %v1555
        %v1557 = vrot.slane %v1541, %v1556
        %1561 = vrot.lane.b32.xlu0 %v1549, 127
        %v1562 = vpop.permute.xlu0 %1561
        %1563 = vrot.lane.b32.xlu0 %v1553, 127
        %v1564 = vpop.permute.xlu0 %1563
        %1565 = vrot.lane.b32.xlu0 %v1557, 127
        %v1566 = vpop.permute.xlu0 %1565
        %v1567 = vsel %vm433, %v1562, %v1564
        %v1568 = vsel %vm433, %v1564, %v1566
        %1572 = vrot.lane.b32.xlu0 %v1549, 126
        %v1573 = vpop.permute.xlu0 %1572
        %1574 = vrot.lane.b32.xlu0 %v1553, 126
        %v1575 = vpop.permute.xlu0 %1574
        %1576 = vrot.lane.b32.xlu0 %v1557, 126
        %v1577 = vpop.permute.xlu0 %1576
        %v1578 = vsel %vm445, %v1573, %v1575
        %v1579 = vsel %vm445, %v1575, %v1577
        %1583 = vrot.lane.b32.xlu0 %v1549, 125
        %v1584 = vpop.permute.xlu0 %1583
        %1585 = vrot.lane.b32.xlu0 %v1553, 125
        %v1586 = vpop.permute.xlu0 %1585
        %1587 = vrot.lane.b32.xlu0 %v1557, 125
        %v1588 = vpop.permute.xlu0 %1587
        %v1589 = vsel %vm457, %v1584, %v1586
        %v1590 = vsel %vm457, %v1586, %v1588
        %1594 = vrot.lane.b32.xlu0 %v1549, 124
        %v1595 = vpop.permute.xlu0 %1594
        %1596 = vrot.lane.b32.xlu0 %v1553, 124
        %v1597 = vpop.permute.xlu0 %1596
        %1598 = vrot.lane.b32.xlu0 %v1557, 124
        %v1599 = vpop.permute.xlu0 %1598
        %v1600 = vsel %vm469, %v1595, %v1597
        %v1601 = vsel %vm469, %v1597, %v1599
        %1605 = vrot.lane.b32.xlu0 %v1549, 123
        %v1606 = vpop.permute.xlu0 %1605
        %1607 = vrot.lane.b32.xlu0 %v1553, 123
        %v1608 = vpop.permute.xlu0 %1607
        %1609 = vrot.lane.b32.xlu0 %v1557, 123
        %v1610 = vpop.permute.xlu0 %1609
        %v1611 = vsel %vm481, %v1606, %v1608
        %v1612 = vsel %vm481, %v1608, %v1610
        %1616 = vrot.lane.b32.xlu0 %v1549, 122
        %v1617 = vpop.permute.xlu0 %1616
        %1618 = vrot.lane.b32.xlu0 %v1553, 122
        %v1619 = vpop.permute.xlu0 %1618
        %1620 = vrot.lane.b32.xlu0 %v1557, 122
        %v1621 = vpop.permute.xlu0 %1620
        %v1622 = vsel %vm493, %v1617, %v1619
        %v1623 = vsel %vm493, %v1619, %v1621
        %1627 = vrot.lane.b32.xlu0 %v1549, 106
        %v1628 = vpop.permute.xlu0 %1627
        %1629 = vrot.lane.b32.xlu0 %v1553, 106
        %v1630 = vpop.permute.xlu0 %1629
        %1631 = vrot.lane.b32.xlu0 %v1557, 106
        %v1632 = vpop.permute.xlu0 %1631
        %v1633 = vsel %vm505, %v1628, %v1630
        %v1634 = vsel %vm505, %v1630, %v1632
        %1638 = vrot.lane.b32.xlu0 %v1549, 105
        %v1639 = vpop.permute.xlu0 %1638
        %1640 = vrot.lane.b32.xlu0 %v1553, 105
        %v1641 = vpop.permute.xlu0 %1640
        %1642 = vrot.lane.b32.xlu0 %v1557, 105
        %v1643 = vpop.permute.xlu0 %1642
        %v1644 = vsel %vm517, %v1639, %v1641
        %v1645 = vsel %vm517, %v1641, %v1643
        %1649 = vrot.lane.b32.xlu0 %v1549, 104
        %v1650 = vpop.permute.xlu0 %1649
        %1651 = vrot.lane.b32.xlu0 %v1553, 104
        %v1652 = vpop.permute.xlu0 %1651
        %1653 = vrot.lane.b32.xlu0 %v1557, 104
        %v1654 = vpop.permute.xlu0 %1653
        %v1655 = vsel %vm529, %v1650, %v1652
        %v1656 = vsel %vm529, %v1652, %v1654
        %1660 = vrot.lane.b32.xlu0 %v1549, 103
        %v1661 = vpop.permute.xlu0 %1660
        %1662 = vrot.lane.b32.xlu0 %v1553, 103
        %v1663 = vpop.permute.xlu0 %1662
        %1664 = vrot.lane.b32.xlu0 %v1557, 103
        %v1665 = vpop.permute.xlu0 %1664
        %v1666 = vsel %vm541, %v1661, %v1663
        %v1667 = vsel %vm541, %v1663, %v1665
        %1671 = vrot.lane.b32.xlu0 %v1549, 102
        %v1672 = vpop.permute.xlu0 %1671
        %1673 = vrot.lane.b32.xlu0 %v1553, 102
        %v1674 = vpop.permute.xlu0 %1673
        %1675 = vrot.lane.b32.xlu0 %v1557, 102
        %v1676 = vpop.permute.xlu0 %1675
        %v1677 = vsel %vm553, %v1672, %v1674
        %v1678 = vsel %vm553, %v1674, %v1676
        %1682 = vrot.lane.b32.xlu0 %v1549, 101
        %v1683 = vpop.permute.xlu0 %1682
        %1684 = vrot.lane.b32.xlu0 %v1553, 101
        %v1685 = vpop.permute.xlu0 %1684
        %1686 = vrot.lane.b32.xlu0 %v1557, 101
        %v1687 = vpop.permute.xlu0 %1686
        %v1688 = vsel %vm565, %v1683, %v1685
        %v1689 = vsel %vm565, %v1685, %v1687
        %1693 = vrot.lane.b32.xlu0 %v1549, 100
        %v1694 = vpop.permute.xlu0 %1693
        %1695 = vrot.lane.b32.xlu0 %v1553, 100
        %v1696 = vpop.permute.xlu0 %1695
        %1697 = vrot.lane.b32.xlu0 %v1557, 100
        %v1698 = vpop.permute.xlu0 %1697
        %v1699 = vsel %vm577, %v1694, %v1696
        %v1700 = vsel %vm577, %v1696, %v1698
        %v1705 = vlaneseq
        %v1706 = vshrl.u32 %v1705, 7
        %v1707 = vsub.s32 0, %v1706
        %v1708 = vrot.slane %v1542, %v1707
        %v1709 = vlaneseq
        %v1710 = vshrl.u32 %v1709, 7
        %v1711 = vsub.s32 1, %v1710
        %v1712 = vrot.slane %v1542, %v1711
        %v1713 = vlaneseq
        %v1714 = vshrl.u32 %v1713, 7
        %v1715 = vsub.s32 2, %v1714
        %v1716 = vrot.slane %v1542, %v1715
        %v1717 = vlaneseq
        %v1718 = vshrl.u32 %v1717, 7
        %v1719 = vsub.s32 3, %v1718
        %v1720 = vrot.slane %v1542, %v1719
        %1721 = vrot.lane.b32.xlu0 %v1708, 84
        %v1722 = vpop.permute.xlu0 %1721
        %1723 = vrot.lane.b32.xlu0 %v1712, 84
        %v1724 = vpop.permute.xlu0 %1723
        %1725 = vrot.lane.b32.xlu0 %v1716, 84
        %v1726 = vpop.permute.xlu0 %1725
        %1727 = vrot.lane.b32.xlu0 %v1720, 84
        %v1728 = vpop.permute.xlu0 %1727
        %v1729 = vsel %vm608, %v1722, %v1724
        %v1730 = vsel %vm608, %v1724, %v1726
        %v1731 = vsel %vm608, %v1726, %v1728
        %1735 = vrot.lane.b32.xlu0 %v1708, 83
        %v1736 = vpop.permute.xlu0 %1735
        %1737 = vrot.lane.b32.xlu0 %v1712, 83
        %v1738 = vpop.permute.xlu0 %1737
        %1739 = vrot.lane.b32.xlu0 %v1716, 83
        %v1740 = vpop.permute.xlu0 %1739
        %1741 = vrot.lane.b32.xlu0 %v1720, 83
        %v1742 = vpop.permute.xlu0 %1741
        %v1743 = vsel %vm623, %v1736, %v1738
        %v1744 = vsel %vm623, %v1738, %v1740
        %v1745 = vsel %vm623, %v1740, %v1742
        %v1749 = vsel %vm630, %v1549, %v1567
        %v1750 = vsel %vm630, %v1553, %v1568
        %v1751 = vsel %vm630, %v1557, %v1566
        %v1752 = vsel %vm634, %v1749, %v1578
        %v1753 = vsel %vm634, %v1750, %v1579
        %v1754 = vsel %vm634, %v1751, %v1577
        %v1755 = vsel %vm638, %v1752, %v1589
        %v1756 = vsel %vm638, %v1753, %v1590
        %v1757 = vsel %vm638, %v1754, %v1588
        %v1758 = vsel %vm642, %v1755, %v1600
        %v1759 = vsel %vm642, %v1756, %v1601
        %v1760 = vsel %vm642, %v1757, %v1599
        %v1761 = vsel %vm646, %v1758, %v1611
        %v1762 = vsel %vm646, %v1759, %v1612
        %v1763 = vsel %vm646, %v1760, %v1610
        %v1764 = vsel %vm650, %v1761, %v1622
        %v1765 = vsel %vm650, %v1762, %v1623
        %v1766 = vsel %vm650, %v1763, %v1621
        %v1767 = vsel %vm654, %v1764, %v1633
        %v1768 = vsel %vm654, %v1765, %v1634
        %v1769 = vsel %vm654, %v1766, %v1632
        %v1770 = vsel %vm630, %v1644, %v1655
        %v1771 = vsel %vm630, %v1645, %v1656
        %v1772 = vsel %vm630, %v1643, %v1654
        %v1773 = vsel %vm634, %v1770, %v1666
        %v1774 = vsel %vm634, %v1771, %v1667
        %v1775 = vsel %vm634, %v1772, %v1665
        %v1776 = vsel %vm638, %v1773, %v1677
        %v1777 = vsel %vm638, %v1774, %v1678
        %v1778 = vsel %vm638, %v1775, %v1676
        %v1779 = vsel %vm642, %v1776, %v1688
        %v1780 = vsel %vm642, %v1777, %v1689
        %v1781 = vsel %vm642, %v1778, %v1687
        %v1782 = vsel %vm646, %v1779, %v1699
        %v1783 = vsel %vm646, %v1780, %v1700
        %v1784 = vsel %vm646, %v1781, %v1698
        %v1785 = vsel %vm650, %v1782, %v1729
        %v1786 = vsel %vm650, %v1783, %v1730
        %v1787 = vsel %vm650, %v1784, %v1731
        %v1788 = vsel %vm654, %v1785, %v1743
        %v1789 = vsel %vm654, %v1786, %v1744
        %v1790 = vsel %vm654, %v1787, %v1745
        %1795 = vrot.lane.b32.xlu0 %v1708, 127
        %v1796 = vpop.permute.xlu0 %1795
        %1797 = vrot.lane.b32.xlu0 %v1712, 127
        %v1798 = vpop.permute.xlu0 %1797
        %1799 = vrot.lane.b32.xlu0 %v1716, 127
        %v1800 = vpop.permute.xlu0 %1799
        %1801 = vrot.lane.b32.xlu0 %v1720, 127
        %v1802 = vpop.permute.xlu0 %1801
        %v1803 = vsel %vm433, %v1796, %v1798
        %v1804 = vsel %vm433, %v1798, %v1800
        %v1805 = vsel %vm433, %v1800, %v1802
        %1810 = vrot.lane.b32.xlu0 %v1708, 126
        %v1811 = vpop.permute.xlu0 %1810
        %1812 = vrot.lane.b32.xlu0 %v1712, 126
        %v1813 = vpop.permute.xlu0 %1812
        %1814 = vrot.lane.b32.xlu0 %v1716, 126
        %v1815 = vpop.permute.xlu0 %1814
        %1816 = vrot.lane.b32.xlu0 %v1720, 126
        %v1817 = vpop.permute.xlu0 %1816
        %v1818 = vsel %vm445, %v1811, %v1813
        %v1819 = vsel %vm445, %v1813, %v1815
        %v1820 = vsel %vm445, %v1815, %v1817
        %1825 = vrot.lane.b32.xlu0 %v1708, 125
        %v1826 = vpop.permute.xlu0 %1825
        %1827 = vrot.lane.b32.xlu0 %v1712, 125
        %v1828 = vpop.permute.xlu0 %1827
        %1829 = vrot.lane.b32.xlu0 %v1716, 125
        %v1830 = vpop.permute.xlu0 %1829
        %1831 = vrot.lane.b32.xlu0 %v1720, 125
        %v1832 = vpop.permute.xlu0 %1831
        %v1833 = vsel %vm457, %v1826, %v1828
        %v1834 = vsel %vm457, %v1828, %v1830
        %v1835 = vsel %vm457, %v1830, %v1832
        %1840 = vrot.lane.b32.xlu0 %v1708, 124
        %v1841 = vpop.permute.xlu0 %1840
        %1842 = vrot.lane.b32.xlu0 %v1712, 124
        %v1843 = vpop.permute.xlu0 %1842
        %1844 = vrot.lane.b32.xlu0 %v1716, 124
        %v1845 = vpop.permute.xlu0 %1844
        %1846 = vrot.lane.b32.xlu0 %v1720, 124
        %v1847 = vpop.permute.xlu0 %1846
        %v1848 = vsel %vm469, %v1841, %v1843
        %v1849 = vsel %vm469, %v1843, %v1845
        %v1850 = vsel %vm469, %v1845, %v1847
        %1855 = vrot.lane.b32.xlu0 %v1708, 108
        %v1856 = vpop.permute.xlu0 %1855
        %1857 = vrot.lane.b32.xlu0 %v1712, 108
        %v1858 = vpop.permute.xlu0 %1857
        %1859 = vrot.lane.b32.xlu0 %v1716, 108
        %v1860 = vpop.permute.xlu0 %1859
        %1861 = vrot.lane.b32.xlu0 %v1720, 108
        %v1862 = vpop.permute.xlu0 %1861
        %v1863 = vsel %vm751, %v1856, %v1858
        %v1864 = vsel %vm751, %v1858, %v1860
        %v1865 = vsel %vm751, %v1860, %v1862
        %1870 = vrot.lane.b32.xlu0 %v1708, 107
        %v1871 = vpop.permute.xlu0 %1870
        %1872 = vrot.lane.b32.xlu0 %v1712, 107
        %v1873 = vpop.permute.xlu0 %1872
        %1874 = vrot.lane.b32.xlu0 %v1716, 107
        %v1875 = vpop.permute.xlu0 %1874
        %1876 = vrot.lane.b32.xlu0 %v1720, 107
        %v1877 = vpop.permute.xlu0 %1876
        %v1878 = vsel %vm767, %v1871, %v1873
        %v1879 = vsel %vm767, %v1873, %v1875
        %v1880 = vsel %vm767, %v1875, %v1877
        %1885 = vrot.lane.b32.xlu0 %v1708, 106
        %v1886 = vpop.permute.xlu0 %1885
        %1887 = vrot.lane.b32.xlu0 %v1712, 106
        %v1888 = vpop.permute.xlu0 %1887
        %1889 = vrot.lane.b32.xlu0 %v1716, 106
        %v1890 = vpop.permute.xlu0 %1889
        %1891 = vrot.lane.b32.xlu0 %v1720, 106
        %v1892 = vpop.permute.xlu0 %1891
        %v1893 = vsel %vm505, %v1886, %v1888
        %v1894 = vsel %vm505, %v1888, %v1890
        %v1895 = vsel %vm505, %v1890, %v1892
        %1900 = vrot.lane.b32.xlu0 %v1708, 105
        %v1901 = vpop.permute.xlu0 %1900
        %1902 = vrot.lane.b32.xlu0 %v1712, 105
        %v1903 = vpop.permute.xlu0 %1902
        %1904 = vrot.lane.b32.xlu0 %v1716, 105
        %v1905 = vpop.permute.xlu0 %1904
        %1906 = vrot.lane.b32.xlu0 %v1720, 105
        %v1907 = vpop.permute.xlu0 %1906
        %v1908 = vsel %vm517, %v1901, %v1903
        %v1909 = vsel %vm517, %v1903, %v1905
        %v1910 = vsel %vm517, %v1905, %v1907
        %1915 = vrot.lane.b32.xlu0 %v1708, 104
        %v1916 = vpop.permute.xlu0 %1915
        %1917 = vrot.lane.b32.xlu0 %v1712, 104
        %v1918 = vpop.permute.xlu0 %1917
        %1919 = vrot.lane.b32.xlu0 %v1716, 104
        %v1920 = vpop.permute.xlu0 %1919
        %1921 = vrot.lane.b32.xlu0 %v1720, 104
        %v1922 = vpop.permute.xlu0 %1921
        %v1923 = vsel %vm529, %v1916, %v1918
        %v1924 = vsel %vm529, %v1918, %v1920
        %v1925 = vsel %vm529, %v1920, %v1922
        %1930 = vrot.lane.b32.xlu0 %v1708, 103
        %v1931 = vpop.permute.xlu0 %1930
        %1932 = vrot.lane.b32.xlu0 %v1712, 103
        %v1933 = vpop.permute.xlu0 %1932
        %1934 = vrot.lane.b32.xlu0 %v1716, 103
        %v1935 = vpop.permute.xlu0 %1934
        %1936 = vrot.lane.b32.xlu0 %v1720, 103
        %v1937 = vpop.permute.xlu0 %1936
        %v1938 = vsel %vm541, %v1931, %v1933
        %v1939 = vsel %vm541, %v1933, %v1935
        %v1940 = vsel %vm541, %v1935, %v1937
        %1945 = vrot.lane.b32.xlu0 %v1708, 102
        %v1946 = vpop.permute.xlu0 %1945
        %1947 = vrot.lane.b32.xlu0 %v1712, 102
        %v1948 = vpop.permute.xlu0 %1947
        %1949 = vrot.lane.b32.xlu0 %v1716, 102
        %v1950 = vpop.permute.xlu0 %1949
        %1951 = vrot.lane.b32.xlu0 %v1720, 102
        %v1952 = vpop.permute.xlu0 %1951
        %v1953 = vsel %vm553, %v1946, %v1948
        %v1954 = vsel %vm553, %v1948, %v1950
        %v1955 = vsel %vm553, %v1950, %v1952
        %1960 = vrot.lane.b32.xlu0 %v1708, 86
        %v1961 = vpop.permute.xlu0 %1960
        %1962 = vrot.lane.b32.xlu0 %v1712, 86
        %v1963 = vpop.permute.xlu0 %1962
        %1964 = vrot.lane.b32.xlu0 %v1716, 86
        %v1965 = vpop.permute.xlu0 %1964
        %1966 = vrot.lane.b32.xlu0 %v1720, 86
        %v1967 = vpop.permute.xlu0 %1966
        %v1968 = vsel %vm858, %v1961, %v1963
        %v1969 = vsel %vm858, %v1963, %v1965
        %v1970 = vsel %vm858, %v1965, %v1967
        %1975 = vrot.lane.b32.xlu0 %v1708, 85
        %v1976 = vpop.permute.xlu0 %1975
        %1977 = vrot.lane.b32.xlu0 %v1712, 85
        %v1978 = vpop.permute.xlu0 %1977
        %1979 = vrot.lane.b32.xlu0 %v1716, 85
        %v1980 = vpop.permute.xlu0 %1979
        %1981 = vrot.lane.b32.xlu0 %v1720, 85
        %v1982 = vpop.permute.xlu0 %1981
        %v1983 = vsel %vm874, %v1976, %v1978
        %v1984 = vsel %vm874, %v1978, %v1980
        %v1985 = vsel %vm874, %v1980, %v1982
        %v1992 = vsel %vm630, %v1708, %v1803
        %v1993 = vsel %vm630, %v1712, %v1804
        %v1994 = vsel %vm630, %v1716, %v1805
        %v1995 = vsel %vm630, %v1720, %v1802
        %v1996 = vsel %vm634, %v1992, %v1818
        %v1997 = vsel %vm634, %v1993, %v1819
        %v1998 = vsel %vm634, %v1994, %v1820
        %v1999 = vsel %vm634, %v1995, %v1817
        %v2000 = vsel %vm638, %v1996, %v1833
        %v2001 = vsel %vm638, %v1997, %v1834
        %v2002 = vsel %vm638, %v1998, %v1835
        %v2003 = vsel %vm638, %v1999, %v1832
        %v2004 = vsel %vm642, %v2000, %v1848
        %v2005 = vsel %vm642, %v2001, %v1849
        %v2006 = vsel %vm642, %v2002, %v1850
        %v2007 = vsel %vm642, %v2003, %v1847
        %v2008 = vsel %vm646, %v2004, %v1863
        %v2009 = vsel %vm646, %v2005, %v1864
        %v2010 = vsel %vm646, %v2006, %v1865
        %v2011 = vsel %vm646, %v2007, %v1862
        %v2012 = vsel %vm650, %v2008, %v1878
        %v2013 = vsel %vm650, %v2009, %v1879
        %v2014 = vsel %vm650, %v2010, %v1880
        %v2015 = vsel %vm650, %v2011, %v1877
        %v2016 = vsel %vm654, %v2012, %v1893
        %v2017 = vsel %vm654, %v2013, %v1894
        %v2018 = vsel %vm654, %v2014, %v1895
        %v2019 = vsel %vm654, %v2015, %v1892
        %v2020 = vsel %vm630, %v1908, %v1923
        %v2021 = vsel %vm630, %v1909, %v1924
        %v2022 = vsel %vm630, %v1910, %v1925
        %v2023 = vsel %vm630, %v1907, %v1922
        %v2024 = vsel %vm634, %v2020, %v1938
        %v2025 = vsel %vm634, %v2021, %v1939
        %v2026 = vsel %vm634, %v2022, %v1940
        %v2027 = vsel %vm634, %v2023, %v1937
        %v2028 = vsel %vm638, %v2024, %v1953
        %v2029 = vsel %vm638, %v2025, %v1954
        %v2030 = vsel %vm638, %v2026, %v1955
        %v2031 = vsel %vm638, %v2027, %v1952
        %v2032 = vsel %vm642, %v2028, %v1968
        %v2033 = vsel %vm642, %v2029, %v1969
        %v2034 = vsel %vm642, %v2030, %v1970
        %v2035 = vsel %vm642, %v2031, %v1967
        %v2036 = vsel %vm646, %v2032, %v1983
        %v2037 = vsel %vm646, %v2033, %v1984
        %v2038 = vsel %vm646, %v2034, %v1985
        %v2039 = vsel %vm646, %v2035, %v1982
        %v2040 = vsel %vm650, %v2036, %v1729
        %v2041 = vsel %vm650, %v2037, %v1730
        %v2042 = vsel %vm650, %v2038, %v1731
        %v2043 = vsel %vm650, %v2039, %v1728
        %v2044 = vsel %vm654, %v2040, %v1743
        %v2045 = vsel %vm654, %v2041, %v1744
        %v2046 = vsel %vm654, %v2042, %v1745
        %v2047 = vsel %vm654, %v2043, %v1742
        %2048 = vrot.lane.b32.xlu0 %v1708, 110
        %v2049 = vpop.permute.xlu0 %2048
        %2050 = vrot.lane.b32.xlu0 %v1712, 110
        %v2051 = vpop.permute.xlu0 %2050
        %2052 = vrot.lane.b32.xlu0 %v1716, 110
        %v2053 = vpop.permute.xlu0 %2052
        %2054 = vrot.lane.b32.xlu0 %v1720, 110
        %v2055 = vpop.permute.xlu0 %2054
        %v2056 = vsel %vm948, %v2049, %v2051
        %v2057 = vsel %vm948, %v2051, %v2053
        %v2058 = vsel %vm948, %v2053, %v2055
        %2063 = vrot.lane.b32.xlu0 %v1708, 109
        %v2064 = vpop.permute.xlu0 %2063
        %2065 = vrot.lane.b32.xlu0 %v1712, 109
        %v2066 = vpop.permute.xlu0 %2065
        %2067 = vrot.lane.b32.xlu0 %v1716, 109
        %v2068 = vpop.permute.xlu0 %2067
        %2069 = vrot.lane.b32.xlu0 %v1720, 109
        %v2070 = vpop.permute.xlu0 %2069
        %v2071 = vsel %vm964, %v2064, %v2066
        %v2072 = vsel %vm964, %v2066, %v2068
        %v2073 = vsel %vm964, %v2068, %v2070
        %v2079 = vlaneseq
        %v2080 = vshrl.u32 %v2079, 7
        %v2081 = vsub.s32 0, %v2080
        %v2082 = vrot.slane %v1544, %v2081
        %v2083 = vlaneseq
        %v2084 = vshrl.u32 %v2083, 7
        %v2085 = vsub.s32 1, %v2084
        %v2086 = vrot.slane %v1544, %v2085
        %v2087 = vlaneseq
        %v2088 = vshrl.u32 %v2087, 7
        %v2089 = vsub.s32 2, %v2088
        %v2090 = vrot.slane %v1544, %v2089
        %2091 = vrot.lane.b32.xlu0 %v2082, 88
        %v2092 = vpop.permute.xlu0 %2091
        %2093 = vrot.lane.b32.xlu0 %v2086, 88
        %v2094 = vpop.permute.xlu0 %2093
        %2095 = vrot.lane.b32.xlu0 %v2090, 88
        %v2096 = vpop.permute.xlu0 %2095
        %v2097 = vsel %vm991, %v2092, %v2094
        %v2098 = vsel %vm991, %v2094, %v2096
        %2103 = vrot.lane.b32.xlu0 %v2082, 87
        %v2104 = vpop.permute.xlu0 %2103
        %2105 = vrot.lane.b32.xlu0 %v2086, 87
        %v2106 = vpop.permute.xlu0 %2105
        %2107 = vrot.lane.b32.xlu0 %v2090, 87
        %v2108 = vpop.permute.xlu0 %2107
        %v2109 = vsel %vm1004, %v2104, %v2106
        %v2110 = vsel %vm1004, %v2106, %v2108
        %2115 = vrot.lane.b32.xlu0 %v2082, 86
        %v2116 = vpop.permute.xlu0 %2115
        %2117 = vrot.lane.b32.xlu0 %v2086, 86
        %v2118 = vpop.permute.xlu0 %2117
        %2119 = vrot.lane.b32.xlu0 %v2090, 86
        %v2120 = vpop.permute.xlu0 %2119
        %v2121 = vsel %vm858, %v2116, %v2118
        %v2122 = vsel %vm858, %v2118, %v2120
        %2127 = vrot.lane.b32.xlu0 %v2082, 85
        %v2128 = vpop.permute.xlu0 %2127
        %2129 = vrot.lane.b32.xlu0 %v2086, 85
        %v2130 = vpop.permute.xlu0 %2129
        %2131 = vrot.lane.b32.xlu0 %v2090, 85
        %v2132 = vpop.permute.xlu0 %2131
        %v2133 = vsel %vm874, %v2128, %v2130
        %v2134 = vsel %vm874, %v2130, %v2132
        %2139 = vrot.lane.b32.xlu0 %v2082, 84
        %v2140 = vpop.permute.xlu0 %2139
        %2141 = vrot.lane.b32.xlu0 %v2086, 84
        %v2142 = vpop.permute.xlu0 %2141
        %2143 = vrot.lane.b32.xlu0 %v2090, 84
        %v2144 = vpop.permute.xlu0 %2143
        %v2145 = vsel %vm608, %v2140, %v2142
        %v2146 = vsel %vm608, %v2142, %v2144
        %2151 = vrot.lane.b32.xlu0 %v2082, 83
        %v2152 = vpop.permute.xlu0 %2151
        %2153 = vrot.lane.b32.xlu0 %v2086, 83
        %v2154 = vpop.permute.xlu0 %2153
        %2155 = vrot.lane.b32.xlu0 %v2090, 83
        %v2156 = vpop.permute.xlu0 %2155
        %v2157 = vsel %vm623, %v2152, %v2154
        %v2158 = vsel %vm623, %v2154, %v2156
        %v2163 = vsel %vm638, %v1996, %v2056
        %v2164 = vsel %vm638, %v1997, %v2057
        %v2165 = vsel %vm638, %v1998, %v2058
        %v2166 = vsel %vm638, %v1999, %v2055
        %v2167 = vsel %vm642, %v2163, %v2071
        %v2168 = vsel %vm642, %v2164, %v2072
        %v2169 = vsel %vm642, %v2165, %v2073
        %v2170 = vsel %vm642, %v2166, %v2070
        %v2171 = vsel %vm646, %v2167, %v1863
        %v2172 = vsel %vm646, %v2168, %v1864
        %v2173 = vsel %vm646, %v2169, %v1865
        %v2174 = vsel %vm646, %v2170, %v1862
        %v2175 = vsel %vm650, %v2171, %v1878
        %v2176 = vsel %vm650, %v2172, %v1879
        %v2177 = vsel %vm650, %v2173, %v1880
        %v2178 = vsel %vm650, %v2174, %v1877
        %v2179 = vsel %vm654, %v2175, %v1893
        %v2180 = vsel %vm654, %v2176, %v1894
        %v2181 = vsel %vm654, %v2177, %v1895
        %v2182 = vsel %vm654, %v2178, %v1892
        %v2183 = vsel %vm634, %v2020, %v2092
        %v2184 = vsel %vm634, %v2021, %v2097
        %v2185 = vsel %vm634, %v2022, %v2098
        %v2186 = vsel %vm634, %v2023, %v2096
        %v2187 = vsel %vm638, %v2183, %v2104
        %v2188 = vsel %vm638, %v2184, %v2109
        %v2189 = vsel %vm638, %v2185, %v2110
        %v2190 = vsel %vm638, %v2186, %v2108
        %v2191 = vsel %vm642, %v2187, %v2116
        %v2192 = vsel %vm642, %v2188, %v2121
        %v2193 = vsel %vm642, %v2189, %v2122
        %v2194 = vsel %vm642, %v2190, %v2120
        %v2195 = vsel %vm646, %v2191, %v2128
        %v2196 = vsel %vm646, %v2192, %v2133
        %v2197 = vsel %vm646, %v2193, %v2134
        %v2198 = vsel %vm646, %v2194, %v2132
        %v2199 = vsel %vm650, %v2195, %v2140
        %v2200 = vsel %vm650, %v2196, %v2145
        %v2201 = vsel %vm650, %v2197, %v2146
        %v2202 = vsel %vm650, %v2198, %v2144
        %v2203 = vsel %vm654, %v2199, %v2152
        %v2204 = vsel %vm654, %v2200, %v2157
        %v2205 = vsel %vm654, %v2201, %v2158
        %v2206 = vsel %vm654, %v2202, %v2156
        %v2210 = vsel %vm630, %v2082, %v1120
        %v2211 = vsel %vm630, %v2086, %v1126
        %v2212 = vsel %vm630, %v2090, %v1127
        %v2213 = vsel %vm634, %v2210, %v1138
        %v2214 = vsel %vm634, %v2211, %v1139
        %v2215 = vsel %vm634, %v2212, %v1136
        %v2216 = vsel %vm638, %v2213, %v1169
        %v2217 = vsel %vm638, %v2214, %v1170
        %v2218 = vsel %vm638, %v2215, %v1171
        %v2219 = vsel %vm642, %v2216, %v1184
        %v2220 = vsel %vm642, %v2217, %v1185
        %v2221 = vsel %vm642, %v2218, %v1186
        %v2222 = vsel %vm646, %v2219, %v1199
        %v2223 = vsel %vm646, %v2220, %v1200
        %v2224 = vsel %vm646, %v2221, %v1201
        %v2225 = vsel %vm650, %v2222, %v1214
        %v2226 = vsel %vm650, %v2223, %v1215
        %v2227 = vsel %vm650, %v2224, %v1216
        %v2228 = vsel %vm654, %v2225, %v1234
        %v2229 = vsel %vm654, %v2226, %v1240
        %v2230 = vsel %vm654, %v2227, %v1241
        %2239 = vrot.lane.b32.xlu0 %v2016, 82
        %v2240 = vpop.permute.xlu0 %2239
        %2241 = vrot.lane.b32.xlu0 %v2017, 82
        %v2242 = vpop.permute.xlu0 %2241
        %2243 = vrot.lane.b32.xlu0 %v2018, 82
        %v2244 = vpop.permute.xlu0 %2243
        %2245 = vrot.lane.b32.xlu0 %v2019, 82
        %v2246 = vpop.permute.xlu0 %2245
        %2247 = vrot.lane.b32.xlu0 %v2044, 82
        %v2248 = vpop.permute.xlu0 %2247
        %2249 = vrot.lane.b32.xlu0 %v2045, 82
        %v2250 = vpop.permute.xlu0 %2249
        %2251 = vrot.lane.b32.xlu0 %v2046, 82
        %v2252 = vpop.permute.xlu0 %2251
        %2253 = vrot.lane.b32.xlu0 %v2047, 82
        %v2254 = vpop.permute.xlu0 %2253
        %v2255 = vsel %vm1290, %v2240, %v2242
        %v2256 = vsel %vm1290, %v2242, %v2244
        %v2257 = vsel %vm1290, %v2244, %v2246
        %v2258 = vsel %vm1290, %v2248, %v2250
        %v2259 = vsel %vm1290, %v2250, %v2252
        %v2260 = vsel %vm1290, %v2252, %v2254
        %2275 = vrot.lane.b32.xlu0 %v2179, 36
        %v2276 = vpop.permute.xlu0 %2275
        %2277 = vrot.lane.b32.xlu0 %v2180, 36
        %v2278 = vpop.permute.xlu0 %2277
        %2279 = vrot.lane.b32.xlu0 %v2181, 36
        %v2280 = vpop.permute.xlu0 %2279
        %2281 = vrot.lane.b32.xlu0 %v2182, 36
        %v2282 = vpop.permute.xlu0 %2281
        %2283 = vrot.lane.b32.xlu0 %v2203, 36
        %v2284 = vpop.permute.xlu0 %2283
        %2285 = vrot.lane.b32.xlu0 %v2204, 36
        %v2286 = vpop.permute.xlu0 %2285
        %2287 = vrot.lane.b32.xlu0 %v2205, 36
        %v2288 = vpop.permute.xlu0 %2287
        %2289 = vrot.lane.b32.xlu0 %v2206, 36
        %v2290 = vpop.permute.xlu0 %2289
        %v2291 = vsel %vm1327, %v2276, %v2278
        %v2292 = vsel %vm1327, %v2278, %v2280
        %v2293 = vsel %vm1327, %v2280, %v2282
        %v2294 = vsel %vm1327, %v2284, %v2286
        %v2295 = vsel %vm1327, %v2286, %v2288
        %v2296 = vsel %vm1327, %v2288, %v2290
        %2306 = vrot.lane.b32.xlu0 %v2228, 118
        %v2307 = vpop.permute.xlu0 %2306
        %2308 = vrot.lane.b32.xlu0 %v2229, 118
        %v2309 = vpop.permute.xlu0 %2308
        %2310 = vrot.lane.b32.xlu0 %v2230, 118
        %v2311 = vpop.permute.xlu0 %2310
        %v2312 = vsel %vm1349, %v2307, %v2309
        %v2313 = vsel %vm1349, %v2309, %v2311
        %s2317 = scalar_lea.vmem %s317, 4 [#allocation3]
        %v2318 = vld [vmem:[%s2317] sm:$0xf]
        %v2320 = vsel %vm1356, %v2318, 0
        %2322 = vmatprep.subr.mxu0 0.0
        %2323 = vmatpush1.msra.mxu0 0.0
        %2324 = vmatprep.subr.mxu0 0.0
        %2325 = vmatpush1.msra.mxu0 0.0
        %2326 = vmatprep.subr.mxu0 0.0
        %2327 = vmatpush1.msra.mxu0 0.0
        %2328 = vmatprep.subr.mxu0 0.0
        %2329 = vmatpush1.msra.mxu0 0.0
        %2330 = vmatprep.subr.mxu0 0.0
        %2331 = vmatpush1.msra.mxu0 0.0
        %2332 = vmatprep.subr.mxu0 0.0
        %2333 = vmatpush1.msra.mxu0 0.0
        %2334 = vmatprep.subr.mxu0 0.0
        %2335 = vmatpush1.msra.mxu0 0.0
        %2336 = vmatprep.subr.mxu0 0.0
        %2337 = vmatpush1.msra.mxu0 0.0
        %2338 = vmatprep.subr.mxu0 0.0
        %2339 = vmatpush1.msra.mxu0 0.0
        %2340 = vmatprep.subr.mxu0 %v2313
        %2341 = vmatpush1.msra.mxu0 %v2312
        %2342 = vmatprep.subr.mxu0 %v2295
        %2343 = vmatpush1.msra.mxu0 %v2294
        %2344 = vmatprep.subr.mxu0 %v2292
        %2345 = vmatpush1.msra.mxu0 %v2291
        %2346 = vmatprep.subr.mxu0 %v2259
        %2347 = vmatpush1.msra.mxu0 %v2258
        %2348 = vmatprep.subr.mxu0 %v2256
        %2349 = vmatpush1.msra.mxu0 %v2255
        %2350 = vmatprep.subr.mxu0 %v1789
        %2351 = vmatpush1.msra.mxu0 %v1788
        %2352 = vmatprep.subr.mxu0 %v1768
        %2353 = vmatpush1.msra.mxu0 %v1767
        %2354 = vmatprep.subr.mxu0 0.0
        %2355 = vmatpush2.msra.mxu0 0.0
        %2356 = vmatprep.subr.mxu0 0.0
        %2357 = vmatpush2.msra.mxu0 0.0
        %2358 = vmatprep.subr.mxu0 0.0
        %2359 = vmatpush2.msra.mxu0 0.0
        %2360 = vmatprep.subr.mxu0 0.0
        %2361 = vmatpush2.msra.mxu0 0.0
        %2362 = vmatprep.subr.mxu0 0.0
        %2363 = vmatpush2.msra.mxu0 0.0
        %2364 = vmatprep.subr.mxu0 0.0
        %2365 = vmatpush2.msra.mxu0 0.0
        %2366 = vmatprep.subr.mxu0 0.0
        %2367 = vmatpush2.msra.mxu0 0.0
        %2368 = vmatprep.subr.mxu0 0.0
        %2369 = vmatpush2.msra.mxu0 0.0
        %2370 = vmatprep.subr.mxu0 0.0
        %2371 = vmatpush2.msra.mxu0 0.0
        %2372 = vmatprep.subr.mxu0 0.0
        %2373 = vmatpush2.msra.mxu0 0.0
        %2374 = vmatprep.subr.mxu0 0.0
        %2375 = vmatpush2.msra.mxu0 0.0
        %2376 = vmatprep.subr.mxu0 0.0
        %2377 = vmatpush2.msra.mxu0 0.0
        %2378 = vmatprep.subr.mxu0 0.0
        %2379 = vmatpush2.msra.mxu0 0.0
        %2380 = vmatprep.subr.mxu0 0.0
        %2381 = vmatpush2.msra.mxu0 0.0
        %2382 = vmatprep.subr.mxu0 0.0
        %2383 = vmatpush2.msra.mxu0 0.0
        %2384 = vmatprep.subr.mxu0 0.0
        %2385 = vmatpush2.msra.mxu0 0.0
        %2386 = vmatprep.mubr.f32.mxu0 0.0
        %2387 = vmatmul.mubr.f32.gmra.mxu0 %v2320
        %v2388 = vpop.f32.mrf.mxu0
        %v2389 = vadd.f32 0.0, %v2388
        %v2390 = vpop.f32.mrf.mxu0
        %v2391 = vadd.f32 0.0, %v2390
        %2392 = vdwg.mxu0
        %2393 = vmatprep.subr.mxu0 0.0
        %2394 = vmatpush1.msra.mxu0 0.0
        %2395 = vmatprep.subr.mxu0 0.0
        %2396 = vmatpush1.msra.mxu0 0.0
        %2397 = vmatprep.subr.mxu0 0.0
        %2398 = vmatpush1.msra.mxu0 0.0
        %2399 = vmatprep.subr.mxu0 0.0
        %2400 = vmatpush1.msra.mxu0 0.0
        %2401 = vmatprep.subr.mxu0 0.0
        %2402 = vmatpush1.msra.mxu0 0.0
        %2403 = vmatprep.subr.mxu0 0.0
        %2404 = vmatpush1.msra.mxu0 0.0
        %2405 = vmatprep.subr.mxu0 0.0
        %2406 = vmatpush1.msra.mxu0 0.0
        %2407 = vmatprep.subr.mxu0 0.0
        %2408 = vmatpush1.msra.mxu0 0.0
        %2409 = vmatprep.subr.mxu0 0.0
        %2410 = vmatpush1.msra.mxu0 0.0
        %2411 = vmatprep.subr.mxu0 0.0
        %2412 = vmatpush1.msra.mxu0 %v2311
        %2413 = vmatprep.subr.mxu0 0.0
        %2414 = vmatpush1.msra.mxu0 %v2296
        %2415 = vmatprep.subr.mxu0 0.0
        %2416 = vmatpush1.msra.mxu0 %v2293
        %2417 = vmatprep.subr.mxu0 0.0
        %2418 = vmatpush1.msra.mxu0 %v2260
        %2419 = vmatprep.subr.mxu0 0.0
        %2420 = vmatpush1.msra.mxu0 %v2257
        %2421 = vmatprep.subr.mxu0 0.0
        %2422 = vmatpush1.msra.mxu0 %v1790
        %2423 = vmatprep.subr.mxu0 0.0
        %2424 = vmatpush1.msra.mxu0 %v1769
        %2425 = vmatprep.subr.mxu0 0.0
        %2426 = vmatpush2.msra.mxu0 0.0
        %2427 = vmatprep.subr.mxu0 0.0
        %2428 = vmatpush2.msra.mxu0 0.0
        %2429 = vmatprep.subr.mxu0 0.0
        %2430 = vmatpush2.msra.mxu0 0.0
        %2431 = vmatprep.subr.mxu0 0.0
        %2432 = vmatpush2.msra.mxu0 0.0
        %2433 = vmatprep.subr.mxu0 0.0
        %2434 = vmatpush2.msra.mxu0 0.0
        %2435 = vmatprep.subr.mxu0 0.0
        %2436 = vmatpush2.msra.mxu0 0.0
        %2437 = vmatprep.subr.mxu0 0.0
        %2438 = vmatpush2.msra.mxu0 0.0
        %2439 = vmatprep.subr.mxu0 0.0
        %2440 = vmatpush2.msra.mxu0 0.0
        %2441 = vmatprep.subr.mxu0 0.0
        %2442 = vmatpush2.msra.mxu0 0.0
        %2443 = vmatprep.subr.mxu0 0.0
        %2444 = vmatpush2.msra.mxu0 0.0
        %2445 = vmatprep.subr.mxu0 0.0
        %2446 = vmatpush2.msra.mxu0 0.0
        %2447 = vmatprep.subr.mxu0 0.0
        %2448 = vmatpush2.msra.mxu0 0.0
        %2449 = vmatprep.subr.mxu0 0.0
        %2450 = vmatpush2.msra.mxu0 0.0
        %2451 = vmatprep.subr.mxu0 0.0
        %2452 = vmatpush2.msra.mxu0 0.0
        %2453 = vmatprep.subr.mxu0 0.0
        %2454 = vmatpush2.msra.mxu0 0.0
        %2455 = vmatprep.subr.mxu0 0.0
        %2456 = vmatpush2.msra.mxu0 0.0
        %2457 = vmatprep.mubr.f32.mxu0 0.0
        %2458 = vmatmul.mubr.f32.gmra.mxu0 %v2320
        %v2459 = vpop.f32.mrf.mxu0
        %v2460 = vadd.f32 0.0, %v2459
        %v2461 = vpop.f32.mrf.mxu0
        %2462 = vdwg.mxu0
        %v2463 = vmul.f32 %v2389, %v1510
        %v2464 = vmul.f32 %v2391, %v1511
        %v2465 = vmul.f32 %v2460, %v1512
        %v2469 = vrot.slane %v2463, 4
        %v2470 = vrot.slane %v2464, 4
        %v2471 = vrot.slane %v2465, 4
        %2472 = vrot.lane.b32.xlu0 %v2469, 44
        %v2473 = vpop.permute.xlu0 %2472
        %2474 = vrot.lane.b32.xlu0 %v2470, 44
        %v2475 = vpop.permute.xlu0 %2474
        %2476 = vrot.lane.b32.xlu0 %v2471, 44
        %v2477 = vpop.permute.xlu0 %2476
        %v2478 = vsel %vm398, %v2473, %v2475
        %v2479 = vsel %vm398, %v2475, %v2477
        %vm2484 = vcmask 1047908
        %2485 = vst.msk [vmem:[#allocation2] sm:$0xf0] %vm2484, %v2473
        %2486 = vst [vmem:[#allocation2 + $0x8] sm:$0xf0] %v2478
        %2487 = vst [vmem:[#allocation2 + $0x10] sm:$0xf0] %v2479
        %vm2488 = vcmask 97284
        %2489 = vst.msk [vmem:[#allocation2 + $0x18] sm:$0xf0] %vm2488, %v2477
        %s2490 = scalar_lea.vmem %s387, 2
        %v2491 = vld [vmem:[%s2490] ss:$4 sm:$0x7]
        %v2492 = vld [vmem:[%s2490] ss:$4 sm:$0xf]
        %s2493 = scalar_lea.vmem %s387, 6
        %v2494 = vld [vmem:[%s2493] ss:$4 sm:$0x7]
        %v2496 = vlaneseq
        %v2497 = vshrl.u32 %v2496, 7
        %v2498 = vsub.s32 0, %v2497
        %v2499 = vrot.slane %v2491, %v2498
        %v2500 = vlaneseq
        %v2501 = vshrl.u32 %v2500, 7
        %v2502 = vsub.s32 1, %v2501
        %v2503 = vrot.slane %v2491, %v2502
        %v2504 = vlaneseq
        %v2505 = vshrl.u32 %v2504, 7
        %v2506 = vsub.s32 2, %v2505
        %v2507 = vrot.slane %v2491, %v2506
        %2511 = vrot.lane.b32.xlu0 %v2499, 127
        %v2512 = vpop.permute.xlu0 %2511
        %2513 = vrot.lane.b32.xlu0 %v2503, 127
        %v2514 = vpop.permute.xlu0 %2513
        %2515 = vrot.lane.b32.xlu0 %v2507, 127
        %v2516 = vpop.permute.xlu0 %2515
        %v2517 = vsel %vm433, %v2512, %v2514
        %v2518 = vsel %vm433, %v2514, %v2516
        %2522 = vrot.lane.b32.xlu0 %v2499, 126
        %v2523 = vpop.permute.xlu0 %2522
        %2524 = vrot.lane.b32.xlu0 %v2503, 126
        %v2525 = vpop.permute.xlu0 %2524
        %2526 = vrot.lane.b32.xlu0 %v2507, 126
        %v2527 = vpop.permute.xlu0 %2526
        %v2528 = vsel %vm445, %v2523, %v2525
        %v2529 = vsel %vm445, %v2525, %v2527
        %2533 = vrot.lane.b32.xlu0 %v2499, 125
        %v2534 = vpop.permute.xlu0 %2533
        %2535 = vrot.lane.b32.xlu0 %v2503, 125
        %v2536 = vpop.permute.xlu0 %2535
        %2537 = vrot.lane.b32.xlu0 %v2507, 125
        %v2538 = vpop.permute.xlu0 %2537
        %v2539 = vsel %vm457, %v2534, %v2536
        %v2540 = vsel %vm457, %v2536, %v2538
        %2544 = vrot.lane.b32.xlu0 %v2499, 124
        %v2545 = vpop.permute.xlu0 %2544
        %2546 = vrot.lane.b32.xlu0 %v2503, 124
        %v2547 = vpop.permute.xlu0 %2546
        %2548 = vrot.lane.b32.xlu0 %v2507, 124
        %v2549 = vpop.permute.xlu0 %2548
        %v2550 = vsel %vm469, %v2545, %v2547
        %v2551 = vsel %vm469, %v2547, %v2549
        %2555 = vrot.lane.b32.xlu0 %v2499, 123
        %v2556 = vpop.permute.xlu0 %2555
        %2557 = vrot.lane.b32.xlu0 %v2503, 123
        %v2558 = vpop.permute.xlu0 %2557
        %2559 = vrot.lane.b32.xlu0 %v2507, 123
        %v2560 = vpop.permute.xlu0 %2559
        %v2561 = vsel %vm481, %v2556, %v2558
        %v2562 = vsel %vm481, %v2558, %v2560
        %2566 = vrot.lane.b32.xlu0 %v2499, 122
        %v2567 = vpop.permute.xlu0 %2566
        %2568 = vrot.lane.b32.xlu0 %v2503, 122
        %v2569 = vpop.permute.xlu0 %2568
        %2570 = vrot.lane.b32.xlu0 %v2507, 122
        %v2571 = vpop.permute.xlu0 %2570
        %v2572 = vsel %vm493, %v2567, %v2569
        %v2573 = vsel %vm493, %v2569, %v2571
        %2577 = vrot.lane.b32.xlu0 %v2499, 106
        %v2578 = vpop.permute.xlu0 %2577
        %2579 = vrot.lane.b32.xlu0 %v2503, 106
        %v2580 = vpop.permute.xlu0 %2579
        %2581 = vrot.lane.b32.xlu0 %v2507, 106
        %v2582 = vpop.permute.xlu0 %2581
        %v2583 = vsel %vm505, %v2578, %v2580
        %v2584 = vsel %vm505, %v2580, %v2582
        %2588 = vrot.lane.b32.xlu0 %v2499, 105
        %v2589 = vpop.permute.xlu0 %2588
        %2590 = vrot.lane.b32.xlu0 %v2503, 105
        %v2591 = vpop.permute.xlu0 %2590
        %2592 = vrot.lane.b32.xlu0 %v2507, 105
        %v2593 = vpop.permute.xlu0 %2592
        %v2594 = vsel %vm517, %v2589, %v2591
        %v2595 = vsel %vm517, %v2591, %v2593
        %2599 = vrot.lane.b32.xlu0 %v2499, 104
        %v2600 = vpop.permute.xlu0 %2599
        %2601 = vrot.lane.b32.xlu0 %v2503, 104
        %v2602 = vpop.permute.xlu0 %2601
        %2603 = vrot.lane.b32.xlu0 %v2507, 104
        %v2604 = vpop.permute.xlu0 %2603
        %v2605 = vsel %vm529, %v2600, %v2602
        %v2606 = vsel %vm529, %v2602, %v2604
        %2610 = vrot.lane.b32.xlu0 %v2499, 103
        %v2611 = vpop.permute.xlu0 %2610
        %2612 = vrot.lane.b32.xlu0 %v2503, 103
        %v2613 = vpop.permute.xlu0 %2612
        %2614 = vrot.lane.b32.xlu0 %v2507, 103
        %v2615 = vpop.permute.xlu0 %2614
        %v2616 = vsel %vm541, %v2611, %v2613
        %v2617 = vsel %vm541, %v2613, %v2615
        %2621 = vrot.lane.b32.xlu0 %v2499, 102
        %v2622 = vpop.permute.xlu0 %2621
        %2623 = vrot.lane.b32.xlu0 %v2503, 102
        %v2624 = vpop.permute.xlu0 %2623
        %2625 = vrot.lane.b32.xlu0 %v2507, 102
        %v2626 = vpop.permute.xlu0 %2625
        %v2627 = vsel %vm553, %v2622, %v2624
        %v2628 = vsel %vm553, %v2624, %v2626
        %2632 = vrot.lane.b32.xlu0 %v2499, 101
        %v2633 = vpop.permute.xlu0 %2632
        %2634 = vrot.lane.b32.xlu0 %v2503, 101
        %v2635 = vpop.permute.xlu0 %2634
        %2636 = vrot.lane.b32.xlu0 %v2507, 101
        %v2637 = vpop.permute.xlu0 %2636
        %v2638 = vsel %vm565, %v2633, %v2635
        %v2639 = vsel %vm565, %v2635, %v2637
        %2643 = vrot.lane.b32.xlu0 %v2499, 100
        %v2644 = vpop.permute.xlu0 %2643
        %2645 = vrot.lane.b32.xlu0 %v2503, 100
        %v2646 = vpop.permute.xlu0 %2645
        %2647 = vrot.lane.b32.xlu0 %v2507, 100
        %v2648 = vpop.permute.xlu0 %2647
        %v2649 = vsel %vm577, %v2644, %v2646
        %v2650 = vsel %vm577, %v2646, %v2648
        %v2655 = vlaneseq
        %v2656 = vshrl.u32 %v2655, 7
        %v2657 = vsub.s32 0, %v2656
        %v2658 = vrot.slane %v2492, %v2657
        %v2659 = vlaneseq
        %v2660 = vshrl.u32 %v2659, 7
        %v2661 = vsub.s32 1, %v2660
        %v2662 = vrot.slane %v2492, %v2661
        %v2663 = vlaneseq
        %v2664 = vshrl.u32 %v2663, 7
        %v2665 = vsub.s32 2, %v2664
        %v2666 = vrot.slane %v2492, %v2665
        %v2667 = vlaneseq
        %v2668 = vshrl.u32 %v2667, 7
        %v2669 = vsub.s32 3, %v2668
        %v2670 = vrot.slane %v2492, %v2669
        %2671 = vrot.lane.b32.xlu0 %v2658, 84
        %v2672 = vpop.permute.xlu0 %2671
        %2673 = vrot.lane.b32.xlu0 %v2662, 84
        %v2674 = vpop.permute.xlu0 %2673
        %2675 = vrot.lane.b32.xlu0 %v2666, 84
        %v2676 = vpop.permute.xlu0 %2675
        %2677 = vrot.lane.b32.xlu0 %v2670, 84
        %v2678 = vpop.permute.xlu0 %2677
        %v2679 = vsel %vm608, %v2672, %v2674
        %v2680 = vsel %vm608, %v2674, %v2676
        %v2681 = vsel %vm608, %v2676, %v2678
        %2685 = vrot.lane.b32.xlu0 %v2658, 83
        %v2686 = vpop.permute.xlu0 %2685
        %2687 = vrot.lane.b32.xlu0 %v2662, 83
        %v2688 = vpop.permute.xlu0 %2687
        %2689 = vrot.lane.b32.xlu0 %v2666, 83
        %v2690 = vpop.permute.xlu0 %2689
        %2691 = vrot.lane.b32.xlu0 %v2670, 83
        %v2692 = vpop.permute.xlu0 %2691
        %v2693 = vsel %vm623, %v2686, %v2688
        %v2694 = vsel %vm623, %v2688, %v2690
        %v2695 = vsel %vm623, %v2690, %v2692
        %v2699 = vsel %vm630, %v2499, %v2517
        %v2700 = vsel %vm630, %v2503, %v2518
        %v2701 = vsel %vm630, %v2507, %v2516
        %v2702 = vsel %vm634, %v2699, %v2528
        %v2703 = vsel %vm634, %v2700, %v2529
        %v2704 = vsel %vm634, %v2701, %v2527
        %v2705 = vsel %vm638, %v2702, %v2539
        %v2706 = vsel %vm638, %v2703, %v2540
        %v2707 = vsel %vm638, %v2704, %v2538
        %v2708 = vsel %vm642, %v2705, %v2550
        %v2709 = vsel %vm642, %v2706, %v2551
        %v2710 = vsel %vm642, %v2707, %v2549
        %v2711 = vsel %vm646, %v2708, %v2561
        %v2712 = vsel %vm646, %v2709, %v2562
        %v2713 = vsel %vm646, %v2710, %v2560
        %v2714 = vsel %vm650, %v2711, %v2572
        %v2715 = vsel %vm650, %v2712, %v2573
        %v2716 = vsel %vm650, %v2713, %v2571
        %v2717 = vsel %vm654, %v2714, %v2583
        %v2718 = vsel %vm654, %v2715, %v2584
        %v2719 = vsel %vm654, %v2716, %v2582
        %v2720 = vsel %vm630, %v2594, %v2605
        %v2721 = vsel %vm630, %v2595, %v2606
        %v2722 = vsel %vm630, %v2593, %v2604
        %v2723 = vsel %vm634, %v2720, %v2616
        %v2724 = vsel %vm634, %v2721, %v2617
        %v2725 = vsel %vm634, %v2722, %v2615
        %v2726 = vsel %vm638, %v2723, %v2627
        %v2727 = vsel %vm638, %v2724, %v2628
        %v2728 = vsel %vm638, %v2725, %v2626
        %v2729 = vsel %vm642, %v2726, %v2638
        %v2730 = vsel %vm642, %v2727, %v2639
        %v2731 = vsel %vm642, %v2728, %v2637
        %v2732 = vsel %vm646, %v2729, %v2649
        %v2733 = vsel %vm646, %v2730, %v2650
        %v2734 = vsel %vm646, %v2731, %v2648
        %v2735 = vsel %vm650, %v2732, %v2679
        %v2736 = vsel %vm650, %v2733, %v2680
        %v2737 = vsel %vm650, %v2734, %v2681
        %v2738 = vsel %vm654, %v2735, %v2693
        %v2739 = vsel %vm654, %v2736, %v2694
        %v2740 = vsel %vm654, %v2737, %v2695
        %2745 = vrot.lane.b32.xlu0 %v2658, 127
        %v2746 = vpop.permute.xlu0 %2745
        %2747 = vrot.lane.b32.xlu0 %v2662, 127
        %v2748 = vpop.permute.xlu0 %2747
        %2749 = vrot.lane.b32.xlu0 %v2666, 127
        %v2750 = vpop.permute.xlu0 %2749
        %2751 = vrot.lane.b32.xlu0 %v2670, 127
        %v2752 = vpop.permute.xlu0 %2751
        %v2753 = vsel %vm433, %v2746, %v2748
        %v2754 = vsel %vm433, %v2748, %v2750
        %v2755 = vsel %vm433, %v2750, %v2752
        %2760 = vrot.lane.b32.xlu0 %v2658, 126
        %v2761 = vpop.permute.xlu0 %2760
        %2762 = vrot.lane.b32.xlu0 %v2662, 126
        %v2763 = vpop.permute.xlu0 %2762
        %2764 = vrot.lane.b32.xlu0 %v2666, 126
        %v2765 = vpop.permute.xlu0 %2764
        %2766 = vrot.lane.b32.xlu0 %v2670, 126
        %v2767 = vpop.permute.xlu0 %2766
        %v2768 = vsel %vm445, %v2761, %v2763
        %v2769 = vsel %vm445, %v2763, %v2765
        %v2770 = vsel %vm445, %v2765, %v2767
        %2775 = vrot.lane.b32.xlu0 %v2658, 125
        %v2776 = vpop.permute.xlu0 %2775
        %2777 = vrot.lane.b32.xlu0 %v2662, 125
        %v2778 = vpop.permute.xlu0 %2777
        %2779 = vrot.lane.b32.xlu0 %v2666, 125
        %v2780 = vpop.permute.xlu0 %2779
        %2781 = vrot.lane.b32.xlu0 %v2670, 125
        %v2782 = vpop.permute.xlu0 %2781
        %v2783 = vsel %vm457, %v2776, %v2778
        %v2784 = vsel %vm457, %v2778, %v2780
        %v2785 = vsel %vm457, %v2780, %v2782
        %2790 = vrot.lane.b32.xlu0 %v2658, 124
        %v2791 = vpop.permute.xlu0 %2790
        %2792 = vrot.lane.b32.xlu0 %v2662, 124
        %v2793 = vpop.permute.xlu0 %2792
        %2794 = vrot.lane.b32.xlu0 %v2666, 124
        %v2795 = vpop.permute.xlu0 %2794
        %2796 = vrot.lane.b32.xlu0 %v2670, 124
        %v2797 = vpop.permute.xlu0 %2796
        %v2798 = vsel %vm469, %v2791, %v2793
        %v2799 = vsel %vm469, %v2793, %v2795
        %v2800 = vsel %vm469, %v2795, %v2797
        %2805 = vrot.lane.b32.xlu0 %v2658, 108
        %v2806 = vpop.permute.xlu0 %2805
        %2807 = vrot.lane.b32.xlu0 %v2662, 108
        %v2808 = vpop.permute.xlu0 %2807
        %2809 = vrot.lane.b32.xlu0 %v2666, 108
        %v2810 = vpop.permute.xlu0 %2809
        %2811 = vrot.lane.b32.xlu0 %v2670, 108
        %v2812 = vpop.permute.xlu0 %2811
        %v2813 = vsel %vm751, %v2806, %v2808
        %v2814 = vsel %vm751, %v2808, %v2810
        %v2815 = vsel %vm751, %v2810, %v2812
        %2820 = vrot.lane.b32.xlu0 %v2658, 107
        %v2821 = vpop.permute.xlu0 %2820
        %2822 = vrot.lane.b32.xlu0 %v2662, 107
        %v2823 = vpop.permute.xlu0 %2822
        %2824 = vrot.lane.b32.xlu0 %v2666, 107
        %v2825 = vpop.permute.xlu0 %2824
        %2826 = vrot.lane.b32.xlu0 %v2670, 107
        %v2827 = vpop.permute.xlu0 %2826
        %v2828 = vsel %vm767, %v2821, %v2823
        %v2829 = vsel %vm767, %v2823, %v2825
        %v2830 = vsel %vm767, %v2825, %v2827
        %2835 = vrot.lane.b32.xlu0 %v2658, 106
        %v2836 = vpop.permute.xlu0 %2835
        %2837 = vrot.lane.b32.xlu0 %v2662, 106
        %v2838 = vpop.permute.xlu0 %2837
        %2839 = vrot.lane.b32.xlu0 %v2666, 106
        %v2840 = vpop.permute.xlu0 %2839
        %2841 = vrot.lane.b32.xlu0 %v2670, 106
        %v2842 = vpop.permute.xlu0 %2841
        %v2843 = vsel %vm505, %v2836, %v2838
        %v2844 = vsel %vm505, %v2838, %v2840
        %v2845 = vsel %vm505, %v2840, %v2842
        %2850 = vrot.lane.b32.xlu0 %v2658, 105
        %v2851 = vpop.permute.xlu0 %2850
        %2852 = vrot.lane.b32.xlu0 %v2662, 105
        %v2853 = vpop.permute.xlu0 %2852
        %2854 = vrot.lane.b32.xlu0 %v2666, 105
        %v2855 = vpop.permute.xlu0 %2854
        %2856 = vrot.lane.b32.xlu0 %v2670, 105
        %v2857 = vpop.permute.xlu0 %2856
        %v2858 = vsel %vm517, %v2851, %v2853
        %v2859 = vsel %vm517, %v2853, %v2855
        %v2860 = vsel %vm517, %v2855, %v2857
        %2865 = vrot.lane.b32.xlu0 %v2658, 104
        %v2866 = vpop.permute.xlu0 %2865
        %2867 = vrot.lane.b32.xlu0 %v2662, 104
        %v2868 = vpop.permute.xlu0 %2867
        %2869 = vrot.lane.b32.xlu0 %v2666, 104
        %v2870 = vpop.permute.xlu0 %2869
        %2871 = vrot.lane.b32.xlu0 %v2670, 104
        %v2872 = vpop.permute.xlu0 %2871
        %v2873 = vsel %vm529, %v2866, %v2868
        %v2874 = vsel %vm529, %v2868, %v2870
        %v2875 = vsel %vm529, %v2870, %v2872
        %2880 = vrot.lane.b32.xlu0 %v2658, 103
        %v2881 = vpop.permute.xlu0 %2880
        %2882 = vrot.lane.b32.xlu0 %v2662, 103
        %v2883 = vpop.permute.xlu0 %2882
        %2884 = vrot.lane.b32.xlu0 %v2666, 103
        %v2885 = vpop.permute.xlu0 %2884
        %2886 = vrot.lane.b32.xlu0 %v2670, 103
        %v2887 = vpop.permute.xlu0 %2886
        %v2888 = vsel %vm541, %v2881, %v2883
        %v2889 = vsel %vm541, %v2883, %v2885
        %v2890 = vsel %vm541, %v2885, %v2887
        %2895 = vrot.lane.b32.xlu0 %v2658, 102
        %v2896 = vpop.permute.xlu0 %2895
        %2897 = vrot.lane.b32.xlu0 %v2662, 102
        %v2898 = vpop.permute.xlu0 %2897
        %2899 = vrot.lane.b32.xlu0 %v2666, 102
        %v2900 = vpop.permute.xlu0 %2899
        %2901 = vrot.lane.b32.xlu0 %v2670, 102
        %v2902 = vpop.permute.xlu0 %2901
        %v2903 = vsel %vm553, %v2896, %v2898
        %v2904 = vsel %vm553, %v2898, %v2900
        %v2905 = vsel %vm553, %v2900, %v2902
        %2910 = vrot.lane.b32.xlu0 %v2658, 86
        %v2911 = vpop.permute.xlu0 %2910
        %2912 = vrot.lane.b32.xlu0 %v2662, 86
        %v2913 = vpop.permute.xlu0 %2912
        %2914 = vrot.lane.b32.xlu0 %v2666, 86
        %v2915 = vpop.permute.xlu0 %2914
        %2916 = vrot.lane.b32.xlu0 %v2670, 86
        %v2917 = vpop.permute.xlu0 %2916
        %v2918 = vsel %vm858, %v2911, %v2913
        %v2919 = vsel %vm858, %v2913, %v2915
        %v2920 = vsel %vm858, %v2915, %v2917
        %2925 = vrot.lane.b32.xlu0 %v2658, 85
        %v2926 = vpop.permute.xlu0 %2925
        %2927 = vrot.lane.b32.xlu0 %v2662, 85
        %v2928 = vpop.permute.xlu0 %2927
        %2929 = vrot.lane.b32.xlu0 %v2666, 85
        %v2930 = vpop.permute.xlu0 %2929
        %2931 = vrot.lane.b32.xlu0 %v2670, 85
        %v2932 = vpop.permute.xlu0 %2931
        %v2933 = vsel %vm874, %v2926, %v2928
        %v2934 = vsel %vm874, %v2928, %v2930
        %v2935 = vsel %vm874, %v2930, %v2932
        %v2942 = vsel %vm630, %v2658, %v2753
        %v2943 = vsel %vm630, %v2662, %v2754
        %v2944 = vsel %vm630, %v2666, %v2755
        %v2945 = vsel %vm630, %v2670, %v2752
        %v2946 = vsel %vm634, %v2942, %v2768
        %v2947 = vsel %vm634, %v2943, %v2769
        %v2948 = vsel %vm634, %v2944, %v2770
        %v2949 = vsel %vm634, %v2945, %v2767
        %v2950 = vsel %vm638, %v2946, %v2783
        %v2951 = vsel %vm638, %v2947, %v2784
        %v2952 = vsel %vm638, %v2948, %v2785
        %v2953 = vsel %vm638, %v2949, %v2782
        %v2954 = vsel %vm642, %v2950, %v2798
        %v2955 = vsel %vm642, %v2951, %v2799
        %v2956 = vsel %vm642, %v2952, %v2800
        %v2957 = vsel %vm642, %v2953, %v2797
        %v2958 = vsel %vm646, %v2954, %v2813
        %v2959 = vsel %vm646, %v2955, %v2814
        %v2960 = vsel %vm646, %v2956, %v2815
        %v2961 = vsel %vm646, %v2957, %v2812
        %v2962 = vsel %vm650, %v2958, %v2828
        %v2963 = vsel %vm650, %v2959, %v2829
        %v2964 = vsel %vm650, %v2960, %v2830
        %v2965 = vsel %vm650, %v2961, %v2827
        %v2966 = vsel %vm654, %v2962, %v2843
        %v2967 = vsel %vm654, %v2963, %v2844
        %v2968 = vsel %vm654, %v2964, %v2845
        %v2969 = vsel %vm654, %v2965, %v2842
        %v2970 = vsel %vm630, %v2858, %v2873
        %v2971 = vsel %vm630, %v2859, %v2874
        %v2972 = vsel %vm630, %v2860, %v2875
        %v2973 = vsel %vm630, %v2857, %v2872
        %v2974 = vsel %vm634, %v2970, %v2888
        %v2975 = vsel %vm634, %v2971, %v2889
        %v2976 = vsel %vm634, %v2972, %v2890
        %v2977 = vsel %vm634, %v2973, %v2887
        %v2978 = vsel %vm638, %v2974, %v2903
        %v2979 = vsel %vm638, %v2975, %v2904
        %v2980 = vsel %vm638, %v2976, %v2905
        %v2981 = vsel %vm638, %v2977, %v2902
        %v2982 = vsel %vm642, %v2978, %v2918
        %v2983 = vsel %vm642, %v2979, %v2919
        %v2984 = vsel %vm642, %v2980, %v2920
        %v2985 = vsel %vm642, %v2981, %v2917
        %v2986 = vsel %vm646, %v2982, %v2933
        %v2987 = vsel %vm646, %v2983, %v2934
        %v2988 = vsel %vm646, %v2984, %v2935
        %v2989 = vsel %vm646, %v2985, %v2932
        %v2990 = vsel %vm650, %v2986, %v2679
        %v2991 = vsel %vm650, %v2987, %v2680
        %v2992 = vsel %vm650, %v2988, %v2681
        %v2993 = vsel %vm650, %v2989, %v2678
        %v2994 = vsel %vm654, %v2990, %v2693
        %v2995 = vsel %vm654, %v2991, %v2694
        %v2996 = vsel %vm654, %v2992, %v2695
        %v2997 = vsel %vm654, %v2993, %v2692
        %2998 = vrot.lane.b32.xlu0 %v2658, 110
        %v2999 = vpop.permute.xlu0 %2998
        %3000 = vrot.lane.b32.xlu0 %v2662, 110
        %v3001 = vpop.permute.xlu0 %3000
        %3002 = vrot.lane.b32.xlu0 %v2666, 110
        %v3003 = vpop.permute.xlu0 %3002
        %3004 = vrot.lane.b32.xlu0 %v2670, 110
        %v3005 = vpop.permute.xlu0 %3004
        %v3006 = vsel %vm948, %v2999, %v3001
        %v3007 = vsel %vm948, %v3001, %v3003
        %v3008 = vsel %vm948, %v3003, %v3005
        %3013 = vrot.lane.b32.xlu0 %v2658, 109
        %v3014 = vpop.permute.xlu0 %3013
        %3015 = vrot.lane.b32.xlu0 %v2662, 109
        %v3016 = vpop.permute.xlu0 %3015
        %3017 = vrot.lane.b32.xlu0 %v2666, 109
        %v3018 = vpop.permute.xlu0 %3017
        %3019 = vrot.lane.b32.xlu0 %v2670, 109
        %v3020 = vpop.permute.xlu0 %3019
        %v3021 = vsel %vm964, %v3014, %v3016
        %v3022 = vsel %vm964, %v3016, %v3018
        %v3023 = vsel %vm964, %v3018, %v3020
        %v3029 = vlaneseq
        %v3030 = vshrl.u32 %v3029, 7
        %v3031 = vsub.s32 0, %v3030
        %v3032 = vrot.slane %v2494, %v3031
        %v3033 = vlaneseq
        %v3034 = vshrl.u32 %v3033, 7
        %v3035 = vsub.s32 1, %v3034
        %v3036 = vrot.slane %v2494, %v3035
        %v3037 = vlaneseq
        %v3038 = vshrl.u32 %v3037, 7
        %v3039 = vsub.s32 2, %v3038
        %v3040 = vrot.slane %v2494, %v3039
        %3041 = vrot.lane.b32.xlu0 %v3032, 88
        %v3042 = vpop.permute.xlu0 %3041
        %3043 = vrot.lane.b32.xlu0 %v3036, 88
        %v3044 = vpop.permute.xlu0 %3043
        %3045 = vrot.lane.b32.xlu0 %v3040, 88
        %v3046 = vpop.permute.xlu0 %3045
        %v3047 = vsel %vm991, %v3042, %v3044
        %v3048 = vsel %vm991, %v3044, %v3046
        %3053 = vrot.lane.b32.xlu0 %v3032, 87
        %v3054 = vpop.permute.xlu0 %3053
        %3055 = vrot.lane.b32.xlu0 %v3036, 87
        %v3056 = vpop.permute.xlu0 %3055
        %3057 = vrot.lane.b32.xlu0 %v3040, 87
        %v3058 = vpop.permute.xlu0 %3057
        %v3059 = vsel %vm1004, %v3054, %v3056
        %v3060 = vsel %vm1004, %v3056, %v3058
        %3065 = vrot.lane.b32.xlu0 %v3032, 86
        %v3066 = vpop.permute.xlu0 %3065
        %3067 = vrot.lane.b32.xlu0 %v3036, 86
        %v3068 = vpop.permute.xlu0 %3067
        %3069 = vrot.lane.b32.xlu0 %v3040, 86
        %v3070 = vpop.permute.xlu0 %3069
        %v3071 = vsel %vm858, %v3066, %v3068
        %v3072 = vsel %vm858, %v3068, %v3070
        %3077 = vrot.lane.b32.xlu0 %v3032, 85
        %v3078 = vpop.permute.xlu0 %3077
        %3079 = vrot.lane.b32.xlu0 %v3036, 85
        %v3080 = vpop.permute.xlu0 %3079
        %3081 = vrot.lane.b32.xlu0 %v3040, 85
        %v3082 = vpop.permute.xlu0 %3081
        %v3083 = vsel %vm874, %v3078, %v3080
        %v3084 = vsel %vm874, %v3080, %v3082
        %3089 = vrot.lane.b32.xlu0 %v3032, 84
        %v3090 = vpop.permute.xlu0 %3089
        %3091 = vrot.lane.b32.xlu0 %v3036, 84
        %v3092 = vpop.permute.xlu0 %3091
        %3093 = vrot.lane.b32.xlu0 %v3040, 84
        %v3094 = vpop.permute.xlu0 %3093
        %v3095 = vsel %vm608, %v3090, %v3092
        %v3096 = vsel %vm608, %v3092, %v3094
        %3101 = vrot.lane.b32.xlu0 %v3032, 83
        %v3102 = vpop.permute.xlu0 %3101
        %3103 = vrot.lane.b32.xlu0 %v3036, 83
        %v3104 = vpop.permute.xlu0 %3103
        %3105 = vrot.lane.b32.xlu0 %v3040, 83
        %v3106 = vpop.permute.xlu0 %3105
        %v3107 = vsel %vm623, %v3102, %v3104
        %v3108 = vsel %vm623, %v3104, %v3106
        %v3113 = vsel %vm638, %v2946, %v3006
        %v3114 = vsel %vm638, %v2947, %v3007
        %v3115 = vsel %vm638, %v2948, %v3008
        %v3116 = vsel %vm638, %v2949, %v3005
        %v3117 = vsel %vm642, %v3113, %v3021
        %v3118 = vsel %vm642, %v3114, %v3022
        %v3119 = vsel %vm642, %v3115, %v3023
        %v3120 = vsel %vm642, %v3116, %v3020
        %v3121 = vsel %vm646, %v3117, %v2813
        %v3122 = vsel %vm646, %v3118, %v2814
        %v3123 = vsel %vm646, %v3119, %v2815
        %v3124 = vsel %vm646, %v3120, %v2812
        %v3125 = vsel %vm650, %v3121, %v2828
        %v3126 = vsel %vm650, %v3122, %v2829
        %v3127 = vsel %vm650, %v3123, %v2830
        %v3128 = vsel %vm650, %v3124, %v2827
        %v3129 = vsel %vm654, %v3125, %v2843
        %v3130 = vsel %vm654, %v3126, %v2844
        %v3131 = vsel %vm654, %v3127, %v2845
        %v3132 = vsel %vm654, %v3128, %v2842
        %v3133 = vsel %vm634, %v2970, %v3042
        %v3134 = vsel %vm634, %v2971, %v3047
        %v3135 = vsel %vm634, %v2972, %v3048
        %v3136 = vsel %vm634, %v2973, %v3046
        %v3137 = vsel %vm638, %v3133, %v3054
        %v3138 = vsel %vm638, %v3134, %v3059
        %v3139 = vsel %vm638, %v3135, %v3060
        %v3140 = vsel %vm638, %v3136, %v3058
        %v3141 = vsel %vm642, %v3137, %v3066
        %v3142 = vsel %vm642, %v3138, %v3071
        %v3143 = vsel %vm642, %v3139, %v3072
        %v3144 = vsel %vm642, %v3140, %v3070
        %v3145 = vsel %vm646, %v3141, %v3078
        %v3146 = vsel %vm646, %v3142, %v3083
        %v3147 = vsel %vm646, %v3143, %v3084
        %v3148 = vsel %vm646, %v3144, %v3082
        %v3149 = vsel %vm650, %v3145, %v3090
        %v3150 = vsel %vm650, %v3146, %v3095
        %v3151 = vsel %vm650, %v3147, %v3096
        %v3152 = vsel %vm650, %v3148, %v3094
        %v3153 = vsel %vm654, %v3149, %v3102
        %v3154 = vsel %vm654, %v3150, %v3107
        %v3155 = vsel %vm654, %v3151, %v3108
        %v3156 = vsel %vm654, %v3152, %v3106
        %v3160 = vsel %vm630, %v3032, %v1120
        %v3161 = vsel %vm630, %v3036, %v1126
        %v3162 = vsel %vm630, %v3040, %v1127
        %v3163 = vsel %vm634, %v3160, %v1138
        %v3164 = vsel %vm634, %v3161, %v1139
        %v3165 = vsel %vm634, %v3162, %v1136
        %v3166 = vsel %vm638, %v3163, %v1169
        %v3167 = vsel %vm638, %v3164, %v1170
        %v3168 = vsel %vm638, %v3165, %v1171
        %v3169 = vsel %vm642, %v3166, %v1184
        %v3170 = vsel %vm642, %v3167, %v1185
        %v3171 = vsel %vm642, %v3168, %v1186
        %v3172 = vsel %vm646, %v3169, %v1199
        %v3173 = vsel %vm646, %v3170, %v1200
        %v3174 = vsel %vm646, %v3171, %v1201
        %v3175 = vsel %vm650, %v3172, %v1214
        %v3176 = vsel %vm650, %v3173, %v1215
        %v3177 = vsel %vm650, %v3174, %v1216
        %v3178 = vsel %vm654, %v3175, %v1234
        %v3179 = vsel %vm654, %v3176, %v1240
        %v3180 = vsel %vm654, %v3177, %v1241
        %3189 = vrot.lane.b32.xlu0 %v2966, 82
        %v3190 = vpop.permute.xlu0 %3189
        %3191 = vrot.lane.b32.xlu0 %v2967, 82
        %v3192 = vpop.permute.xlu0 %3191
        %3193 = vrot.lane.b32.xlu0 %v2968, 82
        %v3194 = vpop.permute.xlu0 %3193
        %3195 = vrot.lane.b32.xlu0 %v2969, 82
        %v3196 = vpop.permute.xlu0 %3195
        %3197 = vrot.lane.b32.xlu0 %v2994, 82
        %v3198 = vpop.permute.xlu0 %3197
        %3199 = vrot.lane.b32.xlu0 %v2995, 82
        %v3200 = vpop.permute.xlu0 %3199
        %3201 = vrot.lane.b32.xlu0 %v2996, 82
        %v3202 = vpop.permute.xlu0 %3201
        %3203 = vrot.lane.b32.xlu0 %v2997, 82
        %v3204 = vpop.permute.xlu0 %3203
        %v3205 = vsel %vm1290, %v3190, %v3192
        %v3206 = vsel %vm1290, %v3192, %v3194
        %v3207 = vsel %vm1290, %v3194, %v3196
        %v3208 = vsel %vm1290, %v3198, %v3200
        %v3209 = vsel %vm1290, %v3200, %v3202
        %v3210 = vsel %vm1290, %v3202, %v3204
        %3225 = vrot.lane.b32.xlu0 %v3129, 36
        %v3226 = vpop.permute.xlu0 %3225
        %3227 = vrot.lane.b32.xlu0 %v3130, 36
        %v3228 = vpop.permute.xlu0 %3227
        %3229 = vrot.lane.b32.xlu0 %v3131, 36
        %v3230 = vpop.permute.xlu0 %3229
        %3231 = vrot.lane.b32.xlu0 %v3132, 36
        %v3232 = vpop.permute.xlu0 %3231
        %3233 = vrot.lane.b32.xlu0 %v3153, 36
        %v3234 = vpop.permute.xlu0 %3233
        %3235 = vrot.lane.b32.xlu0 %v3154, 36
        %v3236 = vpop.permute.xlu0 %3235
        %3237 = vrot.lane.b32.xlu0 %v3155, 36
        %v3238 = vpop.permute.xlu0 %3237
        %3239 = vrot.lane.b32.xlu0 %v3156, 36
        %v3240 = vpop.permute.xlu0 %3239
        %v3241 = vsel %vm1327, %v3226, %v3228
        %v3242 = vsel %vm1327, %v3228, %v3230
        %v3243 = vsel %vm1327, %v3230, %v3232
        %v3244 = vsel %vm1327, %v3234, %v3236
        %v3245 = vsel %vm1327, %v3236, %v3238
        %v3246 = vsel %vm1327, %v3238, %v3240
        %3256 = vrot.lane.b32.xlu0 %v3178, 118
        %v3257 = vpop.permute.xlu0 %3256
        %3258 = vrot.lane.b32.xlu0 %v3179, 118
        %v3259 = vpop.permute.xlu0 %3258
        %3260 = vrot.lane.b32.xlu0 %v3180, 118
        %v3261 = vpop.permute.xlu0 %3260
        %v3262 = vsel %vm1349, %v3257, %v3259
        %v3263 = vsel %vm1349, %v3259, %v3261
        %s3267 = scalar_lea.vmem %s317, 8 [#allocation3]
        %v3268 = vld [vmem:[%s3267] sm:$0xf]
        %v3270 = vsel %vm1356, %v3268, 0
        %3272 = vmatprep.subr.mxu0 0.0
        %3273 = vmatpush1.msra.mxu0 0.0
        %3274 = vmatprep.subr.mxu0 0.0
        %3275 = vmatpush1.msra.mxu0 0.0
        %3276 = vmatprep.subr.mxu0 0.0
        %3277 = vmatpush1.msra.mxu0 0.0
        %3278 = vmatprep.subr.mxu0 0.0
        %3279 = vmatpush1.msra.mxu0 0.0
        %3280 = vmatprep.subr.mxu0 0.0
        %3281 = vmatpush1.msra.mxu0 0.0
        %3282 = vmatprep.subr.mxu0 0.0
        %3283 = vmatpush1.msra.mxu0 0.0
        %3284 = vmatprep.subr.mxu0 0.0
        %3285 = vmatpush1.msra.mxu0 0.0
        %3286 = vmatprep.subr.mxu0 0.0
        %3287 = vmatpush1.msra.mxu0 0.0
        %3288 = vmatprep.subr.mxu0 0.0
        %3289 = vmatpush1.msra.mxu0 0.0
        %3290 = vmatprep.subr.mxu0 %v3263
        %3291 = vmatpush1.msra.mxu0 %v3262
        %3292 = vmatprep.subr.mxu0 %v3245
        %3293 = vmatpush1.msra.mxu0 %v3244
        %3294 = vmatprep.subr.mxu0 %v3242
        %3295 = vmatpush1.msra.mxu0 %v3241
        %3296 = vmatprep.subr.mxu0 %v3209
        %3297 = vmatpush1.msra.mxu0 %v3208
        %3298 = vmatprep.subr.mxu0 %v3206
        %3299 = vmatpush1.msra.mxu0 %v3205
        %3300 = vmatprep.subr.mxu0 %v2739
        %3301 = vmatpush1.msra.mxu0 %v2738
        %3302 = vmatprep.subr.mxu0 %v2718
        %3303 = vmatpush1.msra.mxu0 %v2717
        %3304 = vmatprep.subr.mxu0 0.0
        %3305 = vmatpush2.msra.mxu0 0.0
        %3306 = vmatprep.subr.mxu0 0.0
        %3307 = vmatpush2.msra.mxu0 0.0
        %3308 = vmatprep.subr.mxu0 0.0
        %3309 = vmatpush2.msra.mxu0 0.0
        %3310 = vmatprep.subr.mxu0 0.0
        %3311 = vmatpush2.msra.mxu0 0.0
        %3312 = vmatprep.subr.mxu0 0.0
        %3313 = vmatpush2.msra.mxu0 0.0
        %3314 = vmatprep.subr.mxu0 0.0
        %3315 = vmatpush2.msra.mxu0 0.0
        %3316 = vmatprep.subr.mxu0 0.0
        %3317 = vmatpush2.msra.mxu0 0.0
        %3318 = vmatprep.subr.mxu0 0.0
        %3319 = vmatpush2.msra.mxu0 0.0
        %3320 = vmatprep.subr.mxu0 0.0
        %3321 = vmatpush2.msra.mxu0 0.0
        %3322 = vmatprep.subr.mxu0 0.0
        %3323 = vmatpush2.msra.mxu0 0.0
        %3324 = vmatprep.subr.mxu0 0.0
        %3325 = vmatpush2.msra.mxu0 0.0
        %3326 = vmatprep.subr.mxu0 0.0
        %3327 = vmatpush2.msra.mxu0 0.0
        %3328 = vmatprep.subr.mxu0 0.0
        %3329 = vmatpush2.msra.mxu0 0.0
        %3330 = vmatprep.subr.mxu0 0.0
        %3331 = vmatpush2.msra.mxu0 0.0
        %3332 = vmatprep.subr.mxu0 0.0
        %3333 = vmatpush2.msra.mxu0 0.0
        %3334 = vmatprep.subr.mxu0 0.0
        %3335 = vmatpush2.msra.mxu0 0.0
        %3336 = vmatprep.mubr.f32.mxu0 0.0
        %3337 = vmatmul.mubr.f32.gmra.mxu0 %v3270
        %v3338 = vpop.f32.mrf.mxu0
        %v3339 = vadd.f32 0.0, %v3338
        %v3340 = vpop.f32.mrf.mxu0
        %v3341 = vadd.f32 0.0, %v3340
        %3342 = vdwg.mxu0
        %3343 = vmatprep.subr.mxu0 0.0
        %3344 = vmatpush1.msra.mxu0 0.0
        %3345 = vmatprep.subr.mxu0 0.0
        %3346 = vmatpush1.msra.mxu0 0.0
        %3347 = vmatprep.subr.mxu0 0.0
        %3348 = vmatpush1.msra.mxu0 0.0
        %3349 = vmatprep.subr.mxu0 0.0
        %3350 = vmatpush1.msra.mxu0 0.0
        %3351 = vmatprep.subr.mxu0 0.0
        %3352 = vmatpush1.msra.mxu0 0.0
        %3353 = vmatprep.subr.mxu0 0.0
        %3354 = vmatpush1.msra.mxu0 0.0
        %3355 = vmatprep.subr.mxu0 0.0
        %3356 = vmatpush1.msra.mxu0 0.0
        %3357 = vmatprep.subr.mxu0 0.0
        %3358 = vmatpush1.msra.mxu0 0.0
        %3359 = vmatprep.subr.mxu0 0.0
        %3360 = vmatpush1.msra.mxu0 0.0
        %3361 = vmatprep.subr.mxu0 0.0
        %3362 = vmatpush1.msra.mxu0 %v3261
        %3363 = vmatprep.subr.mxu0 0.0
        %3364 = vmatpush1.msra.mxu0 %v3246
        %3365 = vmatprep.subr.mxu0 0.0
        %3366 = vmatpush1.msra.mxu0 %v3243
        %3367 = vmatprep.subr.mxu0 0.0
        %3368 = vmatpush1.msra.mxu0 %v3210
        %3369 = vmatprep.subr.mxu0 0.0
        %3370 = vmatpush1.msra.mxu0 %v3207
        %3371 = vmatprep.subr.mxu0 0.0
        %3372 = vmatpush1.msra.mxu0 %v2740
        %3373 = vmatprep.subr.mxu0 0.0
        %3374 = vmatpush1.msra.mxu0 %v2719
        %3375 = vmatprep.subr.mxu0 0.0
        %3376 = vmatpush2.msra.mxu0 0.0
        %3377 = vmatprep.subr.mxu0 0.0
        %3378 = vmatpush2.msra.mxu0 0.0
        %3379 = vmatprep.subr.mxu0 0.0
        %3380 = vmatpush2.msra.mxu0 0.0
        %3381 = vmatprep.subr.mxu0 0.0
        %3382 = vmatpush2.msra.mxu0 0.0
        %3383 = vmatprep.subr.mxu0 0.0
        %3384 = vmatpush2.msra.mxu0 0.0
        %3385 = vmatprep.subr.mxu0 0.0
        %3386 = vmatpush2.msra.mxu0 0.0
        %3387 = vmatprep.subr.mxu0 0.0
        %3388 = vmatpush2.msra.mxu0 0.0
        %3389 = vmatprep.subr.mxu0 0.0
        %3390 = vmatpush2.msra.mxu0 0.0
        %3391 = vmatprep.subr.mxu0 0.0
        %3392 = vmatpush2.msra.mxu0 0.0
        %3393 = vmatprep.subr.mxu0 0.0
        %3394 = vmatpush2.msra.mxu0 0.0
        %3395 = vmatprep.subr.mxu0 0.0
        %3396 = vmatpush2.msra.mxu0 0.0
        %3397 = vmatprep.subr.mxu0 0.0
        %3398 = vmatpush2.msra.mxu0 0.0
        %3399 = vmatprep.subr.mxu0 0.0
        %3400 = vmatpush2.msra.mxu0 0.0
        %3401 = vmatprep.subr.mxu0 0.0
        %3402 = vmatpush2.msra.mxu0 0.0
        %3403 = vmatprep.subr.mxu0 0.0
        %3404 = vmatpush2.msra.mxu0 0.0
        %3405 = vmatprep.subr.mxu0 0.0
        %3406 = vmatpush2.msra.mxu0 0.0
        %3407 = vmatprep.mubr.f32.mxu0 0.0
        %3408 = vmatmul.mubr.f32.gmra.mxu0 %v3270
        %v3409 = vpop.f32.mrf.mxu0
        %v3410 = vadd.f32 0.0, %v3409
        %v3411 = vpop.f32.mrf.mxu0
        %3412 = vdwg.mxu0
        %v3413 = vmul.f32 %v3339, %v1510
        %v3414 = vmul.f32 %v3341, %v1511
        %v3415 = vmul.f32 %v3410, %v1512
        %3419 = vrot.lane.b32.xlu0 %v3413, 44
        %v3420 = vpop.permute.xlu0 %3419
        %3421 = vrot.lane.b32.xlu0 %v3414, 44
        %v3422 = vpop.permute.xlu0 %3421
        %3423 = vrot.lane.b32.xlu0 %v3415, 44
        %v3424 = vpop.permute.xlu0 %3423
        %v3425 = vsel %vm398, %v3420, %v3422
        %v3426 = vsel %vm398, %v3422, %v3424
        %3431 = vst.msk [vmem:[#allocation2 + $0x20] sm:$0xf] %vm1534, %v3420
        %3432 = vst [vmem:[#allocation2 + $0x28] sm:$0xf] %v3425
        %3433 = vst [vmem:[#allocation2 + $0x30] sm:$0xf] %v3426
        %3434 = vst.msk [vmem:[#allocation2 + $0x38] sm:$0xf] %vm1538, %v3424
        %s3435 = scalar_lea.vmem %s387, 3
        %v3436 = vld [vmem:[%s3435] ss:$4 sm:$0x7]
        %v3437 = vld [vmem:[%s3435] ss:$4 sm:$0xf]
        %s3438 = scalar_lea.vmem %s387, 7
        %v3439 = vld [vmem:[%s3438] ss:$4 sm:$0x7]
        %v3441 = vlaneseq
        %v3442 = vshrl.u32 %v3441, 7
        %v3443 = vsub.s32 0, %v3442
        %v3444 = vrot.slane %v3436, %v3443
        %v3445 = vlaneseq
        %v3446 = vshrl.u32 %v3445, 7
        %v3447 = vsub.s32 1, %v3446
        %v3448 = vrot.slane %v3436, %v3447
        %v3449 = vlaneseq
        %v3450 = vshrl.u32 %v3449, 7
        %v3451 = vsub.s32 2, %v3450
        %v3452 = vrot.slane %v3436, %v3451
        %3456 = vrot.lane.b32.xlu0 %v3444, 127
        %v3457 = vpop.permute.xlu0 %3456
        %3458 = vrot.lane.b32.xlu0 %v3448, 127
        %v3459 = vpop.permute.xlu0 %3458
        %3460 = vrot.lane.b32.xlu0 %v3452, 127
        %v3461 = vpop.permute.xlu0 %3460
        %v3462 = vsel %vm433, %v3457, %v3459
        %v3463 = vsel %vm433, %v3459, %v3461
        %3467 = vrot.lane.b32.xlu0 %v3444, 126
        %v3468 = vpop.permute.xlu0 %3467
        %3469 = vrot.lane.b32.xlu0 %v3448, 126
        %v3470 = vpop.permute.xlu0 %3469
        %3471 = vrot.lane.b32.xlu0 %v3452, 126
        %v3472 = vpop.permute.xlu0 %3471
        %v3473 = vsel %vm445, %v3468, %v3470
        %v3474 = vsel %vm445, %v3470, %v3472
        %3478 = vrot.lane.b32.xlu0 %v3444, 125
        %v3479 = vpop.permute.xlu0 %3478
        %3480 = vrot.lane.b32.xlu0 %v3448, 125
        %v3481 = vpop.permute.xlu0 %3480
        %3482 = vrot.lane.b32.xlu0 %v3452, 125
        %v3483 = vpop.permute.xlu0 %3482
        %v3484 = vsel %vm457, %v3479, %v3481
        %v3485 = vsel %vm457, %v3481, %v3483
        %3489 = vrot.lane.b32.xlu0 %v3444, 124
        %v3490 = vpop.permute.xlu0 %3489
        %3491 = vrot.lane.b32.xlu0 %v3448, 124
        %v3492 = vpop.permute.xlu0 %3491
        %3493 = vrot.lane.b32.xlu0 %v3452, 124
        %v3494 = vpop.permute.xlu0 %3493
        %v3495 = vsel %vm469, %v3490, %v3492
        %v3496 = vsel %vm469, %v3492, %v3494
        %3500 = vrot.lane.b32.xlu0 %v3444, 123
        %v3501 = vpop.permute.xlu0 %3500
        %3502 = vrot.lane.b32.xlu0 %v3448, 123
        %v3503 = vpop.permute.xlu0 %3502
        %3504 = vrot.lane.b32.xlu0 %v3452, 123
        %v3505 = vpop.permute.xlu0 %3504
        %v3506 = vsel %vm481, %v3501, %v3503
        %v3507 = vsel %vm481, %v3503, %v3505
        %3511 = vrot.lane.b32.xlu0 %v3444, 122
        %v3512 = vpop.permute.xlu0 %3511
        %3513 = vrot.lane.b32.xlu0 %v3448, 122
        %v3514 = vpop.permute.xlu0 %3513
        %3515 = vrot.lane.b32.xlu0 %v3452, 122
        %v3516 = vpop.permute.xlu0 %3515
        %v3517 = vsel %vm493, %v3512, %v3514
        %v3518 = vsel %vm493, %v3514, %v3516
        %3522 = vrot.lane.b32.xlu0 %v3444, 106
        %v3523 = vpop.permute.xlu0 %3522
        %3524 = vrot.lane.b32.xlu0 %v3448, 106
        %v3525 = vpop.permute.xlu0 %3524
        %3526 = vrot.lane.b32.xlu0 %v3452, 106
        %v3527 = vpop.permute.xlu0 %3526
        %v3528 = vsel %vm505, %v3523, %v3525
        %v3529 = vsel %vm505, %v3525, %v3527
        %3533 = vrot.lane.b32.xlu0 %v3444, 105
        %v3534 = vpop.permute.xlu0 %3533
        %3535 = vrot.lane.b32.xlu0 %v3448, 105
        %v3536 = vpop.permute.xlu0 %3535
        %3537 = vrot.lane.b32.xlu0 %v3452, 105
        %v3538 = vpop.permute.xlu0 %3537
        %v3539 = vsel %vm517, %v3534, %v3536
        %v3540 = vsel %vm517, %v3536, %v3538
        %3544 = vrot.lane.b32.xlu0 %v3444, 104
        %v3545 = vpop.permute.xlu0 %3544
        %3546 = vrot.lane.b32.xlu0 %v3448, 104
        %v3547 = vpop.permute.xlu0 %3546
        %3548 = vrot.lane.b32.xlu0 %v3452, 104
        %v3549 = vpop.permute.xlu0 %3548
        %v3550 = vsel %vm529, %v3545, %v3547
        %v3551 = vsel %vm529, %v3547, %v3549
        %3555 = vrot.lane.b32.xlu0 %v3444, 103
        %v3556 = vpop.permute.xlu0 %3555
        %3557 = vrot.lane.b32.xlu0 %v3448, 103
        %v3558 = vpop.permute.xlu0 %3557
        %3559 = vrot.lane.b32.xlu0 %v3452, 103
        %v3560 = vpop.permute.xlu0 %3559
        %v3561 = vsel %vm541, %v3556, %v3558
        %v3562 = vsel %vm541, %v3558, %v3560
        %3566 = vrot.lane.b32.xlu0 %v3444, 102
        %v3567 = vpop.permute.xlu0 %3566
        %3568 = vrot.lane.b32.xlu0 %v3448, 102
        %v3569 = vpop.permute.xlu0 %3568
        %3570 = vrot.lane.b32.xlu0 %v3452, 102
        %v3571 = vpop.permute.xlu0 %3570
        %v3572 = vsel %vm553, %v3567, %v3569
        %v3573 = vsel %vm553, %v3569, %v3571
        %3577 = vrot.lane.b32.xlu0 %v3444, 101
        %v3578 = vpop.permute.xlu0 %3577
        %3579 = vrot.lane.b32.xlu0 %v3448, 101
        %v3580 = vpop.permute.xlu0 %3579
        %3581 = vrot.lane.b32.xlu0 %v3452, 101
        %v3582 = vpop.permute.xlu0 %3581
        %v3583 = vsel %vm565, %v3578, %v3580
        %v3584 = vsel %vm565, %v3580, %v3582
        %3588 = vrot.lane.b32.xlu0 %v3444, 100
        %v3589 = vpop.permute.xlu0 %3588
        %3590 = vrot.lane.b32.xlu0 %v3448, 100
        %v3591 = vpop.permute.xlu0 %3590
        %3592 = vrot.lane.b32.xlu0 %v3452, 100
        %v3593 = vpop.permute.xlu0 %3592
        %v3594 = vsel %vm577, %v3589, %v3591
        %v3595 = vsel %vm577, %v3591, %v3593
        %v3600 = vlaneseq
        %v3601 = vshrl.u32 %v3600, 7
        %v3602 = vsub.s32 0, %v3601
        %v3603 = vrot.slane %v3437, %v3602
        %v3604 = vlaneseq
        %v3605 = vshrl.u32 %v3604, 7
        %v3606 = vsub.s32 1, %v3605
        %v3607 = vrot.slane %v3437, %v3606
        %v3608 = vlaneseq
        %v3609 = vshrl.u32 %v3608, 7
        %v3610 = vsub.s32 2, %v3609
        %v3611 = vrot.slane %v3437, %v3610
        %v3612 = vlaneseq
        %v3613 = vshrl.u32 %v3612, 7
        %v3614 = vsub.s32 3, %v3613
        %v3615 = vrot.slane %v3437, %v3614
        %3616 = vrot.lane.b32.xlu0 %v3603, 84
        %v3617 = vpop.permute.xlu0 %3616
        %3618 = vrot.lane.b32.xlu0 %v3607, 84
        %v3619 = vpop.permute.xlu0 %3618
        %3620 = vrot.lane.b32.xlu0 %v3611, 84
        %v3621 = vpop.permute.xlu0 %3620
        %3622 = vrot.lane.b32.xlu0 %v3615, 84
        %v3623 = vpop.permute.xlu0 %3622
        %v3624 = vsel %vm608, %v3617, %v3619
        %v3625 = vsel %vm608, %v3619, %v3621
        %v3626 = vsel %vm608, %v3621, %v3623
        %3630 = vrot.lane.b32.xlu0 %v3603, 83
        %v3631 = vpop.permute.xlu0 %3630
        %3632 = vrot.lane.b32.xlu0 %v3607, 83
        %v3633 = vpop.permute.xlu0 %3632
        %3634 = vrot.lane.b32.xlu0 %v3611, 83
        %v3635 = vpop.permute.xlu0 %3634
        %3636 = vrot.lane.b32.xlu0 %v3615, 83
        %v3637 = vpop.permute.xlu0 %3636
        %v3638 = vsel %vm623, %v3631, %v3633
        %v3639 = vsel %vm623, %v3633, %v3635
        %v3640 = vsel %vm623, %v3635, %v3637
        %v3644 = vsel %vm630, %v3444, %v3462
        %v3645 = vsel %vm630, %v3448, %v3463
        %v3646 = vsel %vm630, %v3452, %v3461
        %v3647 = vsel %vm634, %v3644, %v3473
        %v3648 = vsel %vm634, %v3645, %v3474
        %v3649 = vsel %vm634, %v3646, %v3472
        %v3650 = vsel %vm638, %v3647, %v3484
        %v3651 = vsel %vm638, %v3648, %v3485
        %v3652 = vsel %vm638, %v3649, %v3483
        %v3653 = vsel %vm642, %v3650, %v3495
        %v3654 = vsel %vm642, %v3651, %v3496
        %v3655 = vsel %vm642, %v3652, %v3494
        %v3656 = vsel %vm646, %v3653, %v3506
        %v3657 = vsel %vm646, %v3654, %v3507
        %v3658 = vsel %vm646, %v3655, %v3505
        %v3659 = vsel %vm650, %v3656, %v3517
        %v3660 = vsel %vm650, %v3657, %v3518
        %v3661 = vsel %vm650, %v3658, %v3516
        %v3662 = vsel %vm654, %v3659, %v3528
        %v3663 = vsel %vm654, %v3660, %v3529
        %v3664 = vsel %vm654, %v3661, %v3527
        %v3665 = vsel %vm630, %v3539, %v3550
        %v3666 = vsel %vm630, %v3540, %v3551
        %v3667 = vsel %vm630, %v3538, %v3549
        %v3668 = vsel %vm634, %v3665, %v3561
        %v3669 = vsel %vm634, %v3666, %v3562
        %v3670 = vsel %vm634, %v3667, %v3560
        %v3671 = vsel %vm638, %v3668, %v3572
        %v3672 = vsel %vm638, %v3669, %v3573
        %v3673 = vsel %vm638, %v3670, %v3571
        %v3674 = vsel %vm642, %v3671, %v3583
        %v3675 = vsel %vm642, %v3672, %v3584
        %v3676 = vsel %vm642, %v3673, %v3582
        %v3677 = vsel %vm646, %v3674, %v3594
        %v3678 = vsel %vm646, %v3675, %v3595
        %v3679 = vsel %vm646, %v3676, %v3593
        %v3680 = vsel %vm650, %v3677, %v3624
        %v3681 = vsel %vm650, %v3678, %v3625
        %v3682 = vsel %vm650, %v3679, %v3626
        %v3683 = vsel %vm654, %v3680, %v3638
        %v3684 = vsel %vm654, %v3681, %v3639
        %v3685 = vsel %vm654, %v3682, %v3640
        %3690 = vrot.lane.b32.xlu0 %v3603, 127
        %v3691 = vpop.permute.xlu0 %3690
        %3692 = vrot.lane.b32.xlu0 %v3607, 127
        %v3693 = vpop.permute.xlu0 %3692
        %3694 = vrot.lane.b32.xlu0 %v3611, 127
        %v3695 = vpop.permute.xlu0 %3694
        %3696 = vrot.lane.b32.xlu0 %v3615, 127
        %v3697 = vpop.permute.xlu0 %3696
        %v3698 = vsel %vm433, %v3691, %v3693
        %v3699 = vsel %vm433, %v3693, %v3695
        %v3700 = vsel %vm433, %v3695, %v3697
        %3705 = vrot.lane.b32.xlu0 %v3603, 126
        %v3706 = vpop.permute.xlu0 %3705
        %3707 = vrot.lane.b32.xlu0 %v3607, 126
        %v3708 = vpop.permute.xlu0 %3707
        %3709 = vrot.lane.b32.xlu0 %v3611, 126
        %v3710 = vpop.permute.xlu0 %3709
        %3711 = vrot.lane.b32.xlu0 %v3615, 126
        %v3712 = vpop.permute.xlu0 %3711
        %v3713 = vsel %vm445, %v3706, %v3708
        %v3714 = vsel %vm445, %v3708, %v3710
        %v3715 = vsel %vm445, %v3710, %v3712
        %3720 = vrot.lane.b32.xlu0 %v3603, 125
        %v3721 = vpop.permute.xlu0 %3720
        %3722 = vrot.lane.b32.xlu0 %v3607, 125
        %v3723 = vpop.permute.xlu0 %3722
        %3724 = vrot.lane.b32.xlu0 %v3611, 125
        %v3725 = vpop.permute.xlu0 %3724
        %3726 = vrot.lane.b32.xlu0 %v3615, 125
        %v3727 = vpop.permute.xlu0 %3726
        %v3728 = vsel %vm457, %v3721, %v3723
        %v3729 = vsel %vm457, %v3723, %v3725
        %v3730 = vsel %vm457, %v3725, %v3727
        %3735 = vrot.lane.b32.xlu0 %v3603, 124
        %v3736 = vpop.permute.xlu0 %3735
        %3737 = vrot.lane.b32.xlu0 %v3607, 124
        %v3738 = vpop.permute.xlu0 %3737
        %3739 = vrot.lane.b32.xlu0 %v3611, 124
        %v3740 = vpop.permute.xlu0 %3739
        %3741 = vrot.lane.b32.xlu0 %v3615, 124
        %v3742 = vpop.permute.xlu0 %3741
        %v3743 = vsel %vm469, %v3736, %v3738
        %v3744 = vsel %vm469, %v3738, %v3740
        %v3745 = vsel %vm469, %v3740, %v3742
        %3750 = vrot.lane.b32.xlu0 %v3603, 108
        %v3751 = vpop.permute.xlu0 %3750
        %3752 = vrot.lane.b32.xlu0 %v3607, 108
        %v3753 = vpop.permute.xlu0 %3752
        %3754 = vrot.lane.b32.xlu0 %v3611, 108
        %v3755 = vpop.permute.xlu0 %3754
        %3756 = vrot.lane.b32.xlu0 %v3615, 108
        %v3757 = vpop.permute.xlu0 %3756
        %v3758 = vsel %vm751, %v3751, %v3753
        %v3759 = vsel %vm751, %v3753, %v3755
        %v3760 = vsel %vm751, %v3755, %v3757
        %3765 = vrot.lane.b32.xlu0 %v3603, 107
        %v3766 = vpop.permute.xlu0 %3765
        %3767 = vrot.lane.b32.xlu0 %v3607, 107
        %v3768 = vpop.permute.xlu0 %3767
        %3769 = vrot.lane.b32.xlu0 %v3611, 107
        %v3770 = vpop.permute.xlu0 %3769
        %3771 = vrot.lane.b32.xlu0 %v3615, 107
        %v3772 = vpop.permute.xlu0 %3771
        %v3773 = vsel %vm767, %v3766, %v3768
        %v3774 = vsel %vm767, %v3768, %v3770
        %v3775 = vsel %vm767, %v3770, %v3772
        %3780 = vrot.lane.b32.xlu0 %v3603, 106
        %v3781 = vpop.permute.xlu0 %3780
        %3782 = vrot.lane.b32.xlu0 %v3607, 106
        %v3783 = vpop.permute.xlu0 %3782
        %3784 = vrot.lane.b32.xlu0 %v3611, 106
        %v3785 = vpop.permute.xlu0 %3784
        %3786 = vrot.lane.b32.xlu0 %v3615, 106
        %v3787 = vpop.permute.xlu0 %3786
        %v3788 = vsel %vm505, %v3781, %v3783
        %v3789 = vsel %vm505, %v3783, %v3785
        %v3790 = vsel %vm505, %v3785, %v3787
        %3795 = vrot.lane.b32.xlu0 %v3603, 105
        %v3796 = vpop.permute.xlu0 %3795
        %3797 = vrot.lane.b32.xlu0 %v3607, 105
        %v3798 = vpop.permute.xlu0 %3797
        %3799 = vrot.lane.b32.xlu0 %v3611, 105
        %v3800 = vpop.permute.xlu0 %3799
        %3801 = vrot.lane.b32.xlu0 %v3615, 105
        %v3802 = vpop.permute.xlu0 %3801
        %v3803 = vsel %vm517, %v3796, %v3798
        %v3804 = vsel %vm517, %v3798, %v3800
        %v3805 = vsel %vm517, %v3800, %v3802
        %3810 = vrot.lane.b32.xlu0 %v3603, 104
        %v3811 = vpop.permute.xlu0 %3810
        %3812 = vrot.lane.b32.xlu0 %v3607, 104
        %v3813 = vpop.permute.xlu0 %3812
        %3814 = vrot.lane.b32.xlu0 %v3611, 104
        %v3815 = vpop.permute.xlu0 %3814
        %3816 = vrot.lane.b32.xlu0 %v3615, 104
        %v3817 = vpop.permute.xlu0 %3816
        %v3818 = vsel %vm529, %v3811, %v3813
        %v3819 = vsel %vm529, %v3813, %v3815
        %v3820 = vsel %vm529, %v3815, %v3817
        %3825 = vrot.lane.b32.xlu0 %v3603, 103
        %v3826 = vpop.permute.xlu0 %3825
        %3827 = vrot.lane.b32.xlu0 %v3607, 103
        %v3828 = vpop.permute.xlu0 %3827
        %3829 = vrot.lane.b32.xlu0 %v3611, 103
        %v3830 = vpop.permute.xlu0 %3829
        %3831 = vrot.lane.b32.xlu0 %v3615, 103
        %v3832 = vpop.permute.xlu0 %3831
        %v3833 = vsel %vm541, %v3826, %v3828
        %v3834 = vsel %vm541, %v3828, %v3830
        %v3835 = vsel %vm541, %v3830, %v3832
        %3840 = vrot.lane.b32.xlu0 %v3603, 102
        %v3841 = vpop.permute.xlu0 %3840
        %3842 = vrot.lane.b32.xlu0 %v3607, 102
        %v3843 = vpop.permute.xlu0 %3842
        %3844 = vrot.lane.b32.xlu0 %v3611, 102
        %v3845 = vpop.permute.xlu0 %3844
        %3846 = vrot.lane.b32.xlu0 %v3615, 102
        %v3847 = vpop.permute.xlu0 %3846
        %v3848 = vsel %vm553, %v3841, %v3843
        %v3849 = vsel %vm553, %v3843, %v3845
        %v3850 = vsel %vm553, %v3845, %v3847
        %3855 = vrot.lane.b32.xlu0 %v3603, 86
        %v3856 = vpop.permute.xlu0 %3855
        %3857 = vrot.lane.b32.xlu0 %v3607, 86
        %v3858 = vpop.permute.xlu0 %3857
        %3859 = vrot.lane.b32.xlu0 %v3611, 86
        %v3860 = vpop.permute.xlu0 %3859
        %3861 = vrot.lane.b32.xlu0 %v3615, 86
        %v3862 = vpop.permute.xlu0 %3861
        %v3863 = vsel %vm858, %v3856, %v3858
        %v3864 = vsel %vm858, %v3858, %v3860
        %v3865 = vsel %vm858, %v3860, %v3862
        %3870 = vrot.lane.b32.xlu0 %v3603, 85
        %v3871 = vpop.permute.xlu0 %3870
        %3872 = vrot.lane.b32.xlu0 %v3607, 85
        %v3873 = vpop.permute.xlu0 %3872
        %3874 = vrot.lane.b32.xlu0 %v3611, 85
        %v3875 = vpop.permute.xlu0 %3874
        %3876 = vrot.lane.b32.xlu0 %v3615, 85
        %v3877 = vpop.permute.xlu0 %3876
        %v3878 = vsel %vm874, %v3871, %v3873
        %v3879 = vsel %vm874, %v3873, %v3875
        %v3880 = vsel %vm874, %v3875, %v3877
        %v3887 = vsel %vm630, %v3603, %v3698
        %v3888 = vsel %vm630, %v3607, %v3699
        %v3889 = vsel %vm630, %v3611, %v3700
        %v3890 = vsel %vm630, %v3615, %v3697
        %v3891 = vsel %vm634, %v3887, %v3713
        %v3892 = vsel %vm634, %v3888, %v3714
        %v3893 = vsel %vm634, %v3889, %v3715
        %v3894 = vsel %vm634, %v3890, %v3712
        %v3895 = vsel %vm638, %v3891, %v3728
        %v3896 = vsel %vm638, %v3892, %v3729
        %v3897 = vsel %vm638, %v3893, %v3730
        %v3898 = vsel %vm638, %v3894, %v3727
        %v3899 = vsel %vm642, %v3895, %v3743
        %v3900 = vsel %vm642, %v3896, %v3744
        %v3901 = vsel %vm642, %v3897, %v3745
        %v3902 = vsel %vm642, %v3898, %v3742
        %v3903 = vsel %vm646, %v3899, %v3758
        %v3904 = vsel %vm646, %v3900, %v3759
        %v3905 = vsel %vm646, %v3901, %v3760
        %v3906 = vsel %vm646, %v3902, %v3757
        %v3907 = vsel %vm650, %v3903, %v3773
        %v3908 = vsel %vm650, %v3904, %v3774
        %v3909 = vsel %vm650, %v3905, %v3775
        %v3910 = vsel %vm650, %v3906, %v3772
        %v3911 = vsel %vm654, %v3907, %v3788
        %v3912 = vsel %vm654, %v3908, %v3789
        %v3913 = vsel %vm654, %v3909, %v3790
        %v3914 = vsel %vm654, %v3910, %v3787
        %v3915 = vsel %vm630, %v3803, %v3818
        %v3916 = vsel %vm630, %v3804, %v3819
        %v3917 = vsel %vm630, %v3805, %v3820
        %v3918 = vsel %vm630, %v3802, %v3817
        %v3919 = vsel %vm634, %v3915, %v3833
        %v3920 = vsel %vm634, %v3916, %v3834
        %v3921 = vsel %vm634, %v3917, %v3835
        %v3922 = vsel %vm634, %v3918, %v3832
        %v3923 = vsel %vm638, %v3919, %v3848
        %v3924 = vsel %vm638, %v3920, %v3849
        %v3925 = vsel %vm638, %v3921, %v3850
        %v3926 = vsel %vm638, %v3922, %v3847
        %v3927 = vsel %vm642, %v3923, %v3863
        %v3928 = vsel %vm642, %v3924, %v3864
        %v3929 = vsel %vm642, %v3925, %v3865
        %v3930 = vsel %vm642, %v3926, %v3862
        %v3931 = vsel %vm646, %v3927, %v3878
        %v3932 = vsel %vm646, %v3928, %v3879
        %v3933 = vsel %vm646, %v3929, %v3880
        %v3934 = vsel %vm646, %v3930, %v3877
        %v3935 = vsel %vm650, %v3931, %v3624
        %v3936 = vsel %vm650, %v3932, %v3625
        %v3937 = vsel %vm650, %v3933, %v3626
        %v3938 = vsel %vm650, %v3934, %v3623
        %v3939 = vsel %vm654, %v3935, %v3638
        %v3940 = vsel %vm654, %v3936, %v3639
        %v3941 = vsel %vm654, %v3937, %v3640
        %v3942 = vsel %vm654, %v3938, %v3637
        %3943 = vrot.lane.b32.xlu0 %v3603, 110
        %v3944 = vpop.permute.xlu0 %3943
        %3945 = vrot.lane.b32.xlu0 %v3607, 110
        %v3946 = vpop.permute.xlu0 %3945
        %3947 = vrot.lane.b32.xlu0 %v3611, 110
        %v3948 = vpop.permute.xlu0 %3947
        %3949 = vrot.lane.b32.xlu0 %v3615, 110
        %v3950 = vpop.permute.xlu0 %3949
        %v3951 = vsel %vm948, %v3944, %v3946
        %v3952 = vsel %vm948, %v3946, %v3948
        %v3953 = vsel %vm948, %v3948, %v3950
        %3958 = vrot.lane.b32.xlu0 %v3603, 109
        %v3959 = vpop.permute.xlu0 %3958
        %3960 = vrot.lane.b32.xlu0 %v3607, 109
        %v3961 = vpop.permute.xlu0 %3960
        %3962 = vrot.lane.b32.xlu0 %v3611, 109
        %v3963 = vpop.permute.xlu0 %3962
        %3964 = vrot.lane.b32.xlu0 %v3615, 109
        %v3965 = vpop.permute.xlu0 %3964
        %v3966 = vsel %vm964, %v3959, %v3961
        %v3967 = vsel %vm964, %v3961, %v3963
        %v3968 = vsel %vm964, %v3963, %v3965
        %v3974 = vlaneseq
        %v3975 = vshrl.u32 %v3974, 7
        %v3976 = vsub.s32 0, %v3975
        %v3977 = vrot.slane %v3439, %v3976
        %v3978 = vlaneseq
        %v3979 = vshrl.u32 %v3978, 7
        %v3980 = vsub.s32 1, %v3979
        %v3981 = vrot.slane %v3439, %v3980
        %v3982 = vlaneseq
        %v3983 = vshrl.u32 %v3982, 7
        %v3984 = vsub.s32 2, %v3983
        %v3985 = vrot.slane %v3439, %v3984
        %3986 = vrot.lane.b32.xlu0 %v3977, 88
        %v3987 = vpop.permute.xlu0 %3986
        %3988 = vrot.lane.b32.xlu0 %v3981, 88
        %v3989 = vpop.permute.xlu0 %3988
        %3990 = vrot.lane.b32.xlu0 %v3985, 88
        %v3991 = vpop.permute.xlu0 %3990
        %v3992 = vsel %vm991, %v3987, %v3989
        %v3993 = vsel %vm991, %v3989, %v3991
        %3998 = vrot.lane.b32.xlu0 %v3977, 87
        %v3999 = vpop.permute.xlu0 %3998
        %4000 = vrot.lane.b32.xlu0 %v3981, 87
        %v4001 = vpop.permute.xlu0 %4000
        %4002 = vrot.lane.b32.xlu0 %v3985, 87
        %v4003 = vpop.permute.xlu0 %4002
        %v4004 = vsel %vm1004, %v3999, %v4001
        %v4005 = vsel %vm1004, %v4001, %v4003
        %4010 = vrot.lane.b32.xlu0 %v3977, 86
        %v4011 = vpop.permute.xlu0 %4010
        %4012 = vrot.lane.b32.xlu0 %v3981, 86
        %v4013 = vpop.permute.xlu0 %4012
        %4014 = vrot.lane.b32.xlu0 %v3985, 86
        %v4015 = vpop.permute.xlu0 %4014
        %v4016 = vsel %vm858, %v4011, %v4013
        %v4017 = vsel %vm858, %v4013, %v4015
        %4022 = vrot.lane.b32.xlu0 %v3977, 85
        %v4023 = vpop.permute.xlu0 %4022
        %4024 = vrot.lane.b32.xlu0 %v3981, 85
        %v4025 = vpop.permute.xlu0 %4024
        %4026 = vrot.lane.b32.xlu0 %v3985, 85
        %v4027 = vpop.permute.xlu0 %4026
        %v4028 = vsel %vm874, %v4023, %v4025
        %v4029 = vsel %vm874, %v4025, %v4027
        %4034 = vrot.lane.b32.xlu0 %v3977, 84
        %v4035 = vpop.permute.xlu0 %4034
        %4036 = vrot.lane.b32.xlu0 %v3981, 84
        %v4037 = vpop.permute.xlu0 %4036
        %4038 = vrot.lane.b32.xlu0 %v3985, 84
        %v4039 = vpop.permute.xlu0 %4038
        %v4040 = vsel %vm608, %v4035, %v4037
        %v4041 = vsel %vm608, %v4037, %v4039
        %4046 = vrot.lane.b32.xlu0 %v3977, 83
        %v4047 = vpop.permute.xlu0 %4046
        %4048 = vrot.lane.b32.xlu0 %v3981, 83
        %v4049 = vpop.permute.xlu0 %4048
        %4050 = vrot.lane.b32.xlu0 %v3985, 83
        %v4051 = vpop.permute.xlu0 %4050
        %v4052 = vsel %vm623, %v4047, %v4049
        %v4053 = vsel %vm623, %v4049, %v4051
        %v4058 = vsel %vm638, %v3891, %v3951
        %v4059 = vsel %vm638, %v3892, %v3952
        %v4060 = vsel %vm638, %v3893, %v3953
        %v4061 = vsel %vm638, %v3894, %v3950
        %v4062 = vsel %vm642, %v4058, %v3966
        %v4063 = vsel %vm642, %v4059, %v3967
        %v4064 = vsel %vm642, %v4060, %v3968
        %v4065 = vsel %vm642, %v4061, %v3965
        %v4066 = vsel %vm646, %v4062, %v3758
        %v4067 = vsel %vm646, %v4063, %v3759
        %v4068 = vsel %vm646, %v4064, %v3760
        %v4069 = vsel %vm646, %v4065, %v3757
        %v4070 = vsel %vm650, %v4066, %v3773
        %v4071 = vsel %vm650, %v4067, %v3774
        %v4072 = vsel %vm650, %v4068, %v3775
        %v4073 = vsel %vm650, %v4069, %v3772
        %v4074 = vsel %vm654, %v4070, %v3788
        %v4075 = vsel %vm654, %v4071, %v3789
        %v4076 = vsel %vm654, %v4072, %v3790
        %v4077 = vsel %vm654, %v4073, %v3787
        %v4078 = vsel %vm634, %v3915, %v3987
        %v4079 = vsel %vm634, %v3916, %v3992
        %v4080 = vsel %vm634, %v3917, %v3993
        %v4081 = vsel %vm634, %v3918, %v3991
        %v4082 = vsel %vm638, %v4078, %v3999
        %v4083 = vsel %vm638, %v4079, %v4004
        %v4084 = vsel %vm638, %v4080, %v4005
        %v4085 = vsel %vm638, %v4081, %v4003
        %v4086 = vsel %vm642, %v4082, %v4011
        %v4087 = vsel %vm642, %v4083, %v4016
        %v4088 = vsel %vm642, %v4084, %v4017
        %v4089 = vsel %vm642, %v4085, %v4015
        %v4090 = vsel %vm646, %v4086, %v4023
        %v4091 = vsel %vm646, %v4087, %v4028
        %v4092 = vsel %vm646, %v4088, %v4029
        %v4093 = vsel %vm646, %v4089, %v4027
        %v4094 = vsel %vm650, %v4090, %v4035
        %v4095 = vsel %vm650, %v4091, %v4040
        %v4096 = vsel %vm650, %v4092, %v4041
        %v4097 = vsel %vm650, %v4093, %v4039
        %v4098 = vsel %vm654, %v4094, %v4047
        %v4099 = vsel %vm654, %v4095, %v4052
        %v4100 = vsel %vm654, %v4096, %v4053
        %v4101 = vsel %vm654, %v4097, %v4051
        %v4105 = vsel %vm630, %v3977, %v1120
        %v4106 = vsel %vm630, %v3981, %v1126
        %v4107 = vsel %vm630, %v3985, %v1127
        %v4108 = vsel %vm634, %v4105, %v1138
        %v4109 = vsel %vm634, %v4106, %v1139
        %v4110 = vsel %vm634, %v4107, %v1136
        %v4111 = vsel %vm638, %v4108, %v1169
        %v4112 = vsel %vm638, %v4109, %v1170
        %v4113 = vsel %vm638, %v4110, %v1171
        %v4114 = vsel %vm642, %v4111, %v1184
        %v4115 = vsel %vm642, %v4112, %v1185
        %v4116 = vsel %vm642, %v4113, %v1186
        %v4117 = vsel %vm646, %v4114, %v1199
        %v4118 = vsel %vm646, %v4115, %v1200
        %v4119 = vsel %vm646, %v4116, %v1201
        %v4120 = vsel %vm650, %v4117, %v1214
        %v4121 = vsel %vm650, %v4118, %v1215
        %v4122 = vsel %vm650, %v4119, %v1216
        %v4123 = vsel %vm654, %v4120, %v1234
        %v4124 = vsel %vm654, %v4121, %v1240
        %v4125 = vsel %vm654, %v4122, %v1241
        %4134 = vrot.lane.b32.xlu0 %v3911, 82
        %v4135 = vpop.permute.xlu0 %4134
        %4136 = vrot.lane.b32.xlu0 %v3912, 82
        %v4137 = vpop.permute.xlu0 %4136
        %4138 = vrot.lane.b32.xlu0 %v3913, 82
        %v4139 = vpop.permute.xlu0 %4138
        %4140 = vrot.lane.b32.xlu0 %v3914, 82
        %v4141 = vpop.permute.xlu0 %4140
        %4142 = vrot.lane.b32.xlu0 %v3939, 82
        %v4143 = vpop.permute.xlu0 %4142
        %4144 = vrot.lane.b32.xlu0 %v3940, 82
        %v4145 = vpop.permute.xlu0 %4144
        %4146 = vrot.lane.b32.xlu0 %v3941, 82
        %v4147 = vpop.permute.xlu0 %4146
        %4148 = vrot.lane.b32.xlu0 %v3942, 82
        %v4149 = vpop.permute.xlu0 %4148
        %v4150 = vsel %vm1290, %v4135, %v4137
        %v4151 = vsel %vm1290, %v4137, %v4139
        %v4152 = vsel %vm1290, %v4139, %v4141
        %v4153 = vsel %vm1290, %v4143, %v4145
        %v4154 = vsel %vm1290, %v4145, %v4147
        %v4155 = vsel %vm1290, %v4147, %v4149
        %4170 = vrot.lane.b32.xlu0 %v4074, 36
        %v4171 = vpop.permute.xlu0 %4170
        %4172 = vrot.lane.b32.xlu0 %v4075, 36
        %v4173 = vpop.permute.xlu0 %4172
        %4174 = vrot.lane.b32.xlu0 %v4076, 36
        %v4175 = vpop.permute.xlu0 %4174
        %4176 = vrot.lane.b32.xlu0 %v4077, 36
        %v4177 = vpop.permute.xlu0 %4176
        %4178 = vrot.lane.b32.xlu0 %v4098, 36
        %v4179 = vpop.permute.xlu0 %4178
        %4180 = vrot.lane.b32.xlu0 %v4099, 36
        %v4181 = vpop.permute.xlu0 %4180
        %4182 = vrot.lane.b32.xlu0 %v4100, 36
        %v4183 = vpop.permute.xlu0 %4182
        %4184 = vrot.lane.b32.xlu0 %v4101, 36
        %v4185 = vpop.permute.xlu0 %4184
        %v4186 = vsel %vm1327, %v4171, %v4173
        %v4187 = vsel %vm1327, %v4173, %v4175
        %v4188 = vsel %vm1327, %v4175, %v4177
        %v4189 = vsel %vm1327, %v4179, %v4181
        %v4190 = vsel %vm1327, %v4181, %v4183
        %v4191 = vsel %vm1327, %v4183, %v4185
        %4201 = vrot.lane.b32.xlu0 %v4123, 118
        %v4202 = vpop.permute.xlu0 %4201
        %4203 = vrot.lane.b32.xlu0 %v4124, 118
        %v4204 = vpop.permute.xlu0 %4203
        %4205 = vrot.lane.b32.xlu0 %v4125, 118
        %v4206 = vpop.permute.xlu0 %4205
        %v4207 = vsel %vm1349, %v4202, %v4204
        %v4208 = vsel %vm1349, %v4204, %v4206
        %s4212 = scalar_lea.vmem %s317, 12 [#allocation3]
        %v4213 = vld [vmem:[%s4212] sm:$0xf]
        %v4215 = vsel %vm1356, %v4213, 0
        %4217 = vmatprep.subr.mxu0 0.0
        %4218 = vmatpush1.msra.mxu0 0.0
        %4219 = vmatprep.subr.mxu0 0.0
        %4220 = vmatpush1.msra.mxu0 0.0
        %4221 = vmatprep.subr.mxu0 0.0
        %4222 = vmatpush1.msra.mxu0 0.0
        %4223 = vmatprep.subr.mxu0 0.0
        %4224 = vmatpush1.msra.mxu0 0.0
        %4225 = vmatprep.subr.mxu0 0.0
        %4226 = vmatpush1.msra.mxu0 0.0
        %4227 = vmatprep.subr.mxu0 0.0
        %4228 = vmatpush1.msra.mxu0 0.0
        %4229 = vmatprep.subr.mxu0 0.0
        %4230 = vmatpush1.msra.mxu0 0.0
        %4231 = vmatprep.subr.mxu0 0.0
        %4232 = vmatpush1.msra.mxu0 0.0
        %4233 = vmatprep.subr.mxu0 0.0
        %4234 = vmatpush1.msra.mxu0 0.0
        %4235 = vmatprep.subr.mxu0 %v4208
        %4236 = vmatpush1.msra.mxu0 %v4207
        %4237 = vmatprep.subr.mxu0 %v4190
        %4238 = vmatpush1.msra.mxu0 %v4189
        %4239 = vmatprep.subr.mxu0 %v4187
        %4240 = vmatpush1.msra.mxu0 %v4186
        %4241 = vmatprep.subr.mxu0 %v4154
        %4242 = vmatpush1.msra.mxu0 %v4153
        %4243 = vmatprep.subr.mxu0 %v4151
        %4244 = vmatpush1.msra.mxu0 %v4150
        %4245 = vmatprep.subr.mxu0 %v3684
        %4246 = vmatpush1.msra.mxu0 %v3683
        %4247 = vmatprep.subr.mxu0 %v3663
        %4248 = vmatpush1.msra.mxu0 %v3662
        %4249 = vmatprep.subr.mxu0 0.0
        %4250 = vmatpush2.msra.mxu0 0.0
        %4251 = vmatprep.subr.mxu0 0.0
        %4252 = vmatpush2.msra.mxu0 0.0
        %4253 = vmatprep.subr.mxu0 0.0
        %4254 = vmatpush2.msra.mxu0 0.0
        %4255 = vmatprep.subr.mxu0 0.0
        %4256 = vmatpush2.msra.mxu0 0.0
        %4257 = vmatprep.subr.mxu0 0.0
        %4258 = vmatpush2.msra.mxu0 0.0
        %4259 = vmatprep.subr.mxu0 0.0
        %4260 = vmatpush2.msra.mxu0 0.0
        %4261 = vmatprep.subr.mxu0 0.0
        %4262 = vmatpush2.msra.mxu0 0.0
        %4263 = vmatprep.subr.mxu0 0.0
        %4264 = vmatpush2.msra.mxu0 0.0
        %4265 = vmatprep.subr.mxu0 0.0
        %4266 = vmatpush2.msra.mxu0 0.0
        %4267 = vmatprep.subr.mxu0 0.0
        %4268 = vmatpush2.msra.mxu0 0.0
        %4269 = vmatprep.subr.mxu0 0.0
        %4270 = vmatpush2.msra.mxu0 0.0
        %4271 = vmatprep.subr.mxu0 0.0
        %4272 = vmatpush2.msra.mxu0 0.0
        %4273 = vmatprep.subr.mxu0 0.0
        %4274 = vmatpush2.msra.mxu0 0.0
        %4275 = vmatprep.subr.mxu0 0.0
        %4276 = vmatpush2.msra.mxu0 0.0
        %4277 = vmatprep.subr.mxu0 0.0
        %4278 = vmatpush2.msra.mxu0 0.0
        %4279 = vmatprep.subr.mxu0 0.0
        %4280 = vmatpush2.msra.mxu0 0.0
        %4281 = vmatprep.mubr.f32.mxu0 0.0
        %4282 = vmatmul.mubr.f32.gmra.mxu0 %v4215
        %v4283 = vpop.f32.mrf.mxu0
        %v4284 = vadd.f32 0.0, %v4283
        %v4285 = vpop.f32.mrf.mxu0
        %v4286 = vadd.f32 0.0, %v4285
        %4287 = vdwg.mxu0
        %4288 = vmatprep.subr.mxu0 0.0
        %4289 = vmatpush1.msra.mxu0 0.0
        %4290 = vmatprep.subr.mxu0 0.0
        %4291 = vmatpush1.msra.mxu0 0.0
        %4292 = vmatprep.subr.mxu0 0.0
        %4293 = vmatpush1.msra.mxu0 0.0
        %4294 = vmatprep.subr.mxu0 0.0
        %4295 = vmatpush1.msra.mxu0 0.0
        %4296 = vmatprep.subr.mxu0 0.0
        %4297 = vmatpush1.msra.mxu0 0.0
        %4298 = vmatprep.subr.mxu0 0.0
        %4299 = vmatpush1.msra.mxu0 0.0
        %4300 = vmatprep.subr.mxu0 0.0
        %4301 = vmatpush1.msra.mxu0 0.0
        %4302 = vmatprep.subr.mxu0 0.0
        %4303 = vmatpush1.msra.mxu0 0.0
        %4304 = vmatprep.subr.mxu0 0.0
        %4305 = vmatpush1.msra.mxu0 0.0
        %4306 = vmatprep.subr.mxu0 0.0
        %4307 = vmatpush1.msra.mxu0 %v4206
        %4308 = vmatprep.subr.mxu0 0.0
        %4309 = vmatpush1.msra.mxu0 %v4191
        %4310 = vmatprep.subr.mxu0 0.0
        %4311 = vmatpush1.msra.mxu0 %v4188
        %4312 = vmatprep.subr.mxu0 0.0
        %4313 = vmatpush1.msra.mxu0 %v4155
        %4314 = vmatprep.subr.mxu0 0.0
        %4315 = vmatpush1.msra.mxu0 %v4152
        %4316 = vmatprep.subr.mxu0 0.0
        %4317 = vmatpush1.msra.mxu0 %v3685
        %4318 = vmatprep.subr.mxu0 0.0
        %4319 = vmatpush1.msra.mxu0 %v3664
        %4320 = vmatprep.subr.mxu0 0.0
        %4321 = vmatpush2.msra.mxu0 0.0
        %4322 = vmatprep.subr.mxu0 0.0
        %4323 = vmatpush2.msra.mxu0 0.0
        %4324 = vmatprep.subr.mxu0 0.0
        %4325 = vmatpush2.msra.mxu0 0.0
        %4326 = vmatprep.subr.mxu0 0.0
        %4327 = vmatpush2.msra.mxu0 0.0
        %4328 = vmatprep.subr.mxu0 0.0
        %4329 = vmatpush2.msra.mxu0 0.0
        %4330 = vmatprep.subr.mxu0 0.0
        %4331 = vmatpush2.msra.mxu0 0.0
        %4332 = vmatprep.subr.mxu0 0.0
        %4333 = vmatpush2.msra.mxu0 0.0
        %4334 = vmatprep.subr.mxu0 0.0
        %4335 = vmatpush2.msra.mxu0 0.0
        %4336 = vmatprep.subr.mxu0 0.0
        %4337 = vmatpush2.msra.mxu0 0.0
        %4338 = vmatprep.subr.mxu0 0.0
        %4339 = vmatpush2.msra.mxu0 0.0
        %4340 = vmatprep.subr.mxu0 0.0
        %4341 = vmatpush2.msra.mxu0 0.0
        %4342 = vmatprep.subr.mxu0 0.0
        %4343 = vmatpush2.msra.mxu0 0.0
        %4344 = vmatprep.subr.mxu0 0.0
        %4345 = vmatpush2.msra.mxu0 0.0
        %4346 = vmatprep.subr.mxu0 0.0
        %4347 = vmatpush2.msra.mxu0 0.0
        %4348 = vmatprep.subr.mxu0 0.0
        %4349 = vmatpush2.msra.mxu0 0.0
        %4350 = vmatprep.subr.mxu0 0.0
        %4351 = vmatpush2.msra.mxu0 0.0
        %4352 = vmatprep.mubr.f32.mxu0 0.0
        %4353 = vmatmul.mubr.f32.gmra.mxu0 %v4215
        %v4354 = vpop.f32.mrf.mxu0
        %v4355 = vadd.f32 0.0, %v4354
        %v4356 = vpop.f32.mrf.mxu0
        %4357 = vdwg.mxu0
        %v4358 = vmul.f32 %v4284, %v1510
        %v4359 = vmul.f32 %v4286, %v1511
        %v4360 = vmul.f32 %v4355, %v1512
        %v4364 = vrot.slane %v4358, 4
        %v4365 = vrot.slane %v4359, 4
        %v4366 = vrot.slane %v4360, 4
        %4367 = vrot.lane.b32.xlu0 %v4364, 44
        %v4368 = vpop.permute.xlu0 %4367
        %4369 = vrot.lane.b32.xlu0 %v4365, 44
        %v4370 = vpop.permute.xlu0 %4369
        %4371 = vrot.lane.b32.xlu0 %v4366, 44
        %v4372 = vpop.permute.xlu0 %4371
        %v4373 = vsel %vm398, %v4368, %v4370
        %v4374 = vsel %vm398, %v4370, %v4372
        %4379 = vst.msk [vmem:[#allocation2 + $0x20] sm:$0xf0] %vm2484, %v4368
        %4380 = vst [vmem:[#allocation2 + $0x28] sm:$0xf0] %v4373
        %4381 = vst [vmem:[#allocation2 + $0x30] sm:$0xf0] %v4374
        %4382 = vst.msk [vmem:[#allocation2 + $0x38] sm:$0xf0] %vm2488, %v4372
        %v4383 = vld [vmem:[#allocation2] sm:$0xff]
        %v4384 = vld [vmem:[#allocation2 + $0x8] sm:$0xff]
        %v4385 = vld [vmem:[#allocation2 + $0x10] sm:$0xff]
        %v4386 = vld [vmem:[#allocation2 + $0x20] sm:$0xff]
        %v4387 = vld [vmem:[#allocation2 + $0x28] sm:$0xff]
        %v4388 = vld [vmem:[#allocation2 + $0x30] sm:$0xff]
        %v4389 = vld [vmem:[#allocation2 + $0x18] sm:$0xff]
        %v4390 = vld [vmem:[#allocation2 + $0x38] sm:$0xff]
        %4397 = vrot.lane.b32.xlu0 %v4383, 127
        %v4398 = vpop.permute.xlu0 %4397
        %4399 = vrot.lane.b32.xlu0 %v4384, 127
        %v4400 = vpop.permute.xlu0 %4399
        %4401 = vrot.lane.b32.xlu0 %v4385, 127
        %v4402 = vpop.permute.xlu0 %4401
        %4403 = vrot.lane.b32.xlu0 %v4386, 127
        %v4404 = vpop.permute.xlu0 %4403
        %4405 = vrot.lane.b32.xlu0 %v4387, 127
        %v4406 = vpop.permute.xlu0 %4405
        %4407 = vrot.lane.b32.xlu0 %v4388, 127
        %v4408 = vpop.permute.xlu0 %4407
        %v4409 = vsel %vm433, %v4398, %v4400
        %v4410 = vsel %vm433, %v4400, %v4402
        %v4411 = vsel %vm433, %v4404, %v4406
        %v4412 = vsel %vm433, %v4406, %v4408
        %4413 = vrot.lane.b32.xlu0 %v4383, 126
        %v4414 = vpop.permute.xlu0 %4413
        %4415 = vrot.lane.b32.xlu0 %v4384, 126
        %v4416 = vpop.permute.xlu0 %4415
        %4417 = vrot.lane.b32.xlu0 %v4385, 126
        %v4418 = vpop.permute.xlu0 %4417
        %4419 = vrot.lane.b32.xlu0 %v4386, 126
        %v4420 = vpop.permute.xlu0 %4419
        %4421 = vrot.lane.b32.xlu0 %v4387, 126
        %v4422 = vpop.permute.xlu0 %4421
        %4423 = vrot.lane.b32.xlu0 %v4388, 126
        %v4424 = vpop.permute.xlu0 %4423
        %v4425 = vsel %vm445, %v4414, %v4416
        %v4426 = vsel %vm445, %v4416, %v4418
        %v4427 = vsel %vm445, %v4420, %v4422
        %v4428 = vsel %vm445, %v4422, %v4424
        %4431 = vrot.lane.b32.xlu0 %v4383, 106
        %v4432 = vpop.permute.xlu0 %4431
        %4433 = vrot.lane.b32.xlu0 %v4384, 106
        %v4434 = vpop.permute.xlu0 %4433
        %4435 = vrot.lane.b32.xlu0 %v4385, 106
        %v4436 = vpop.permute.xlu0 %4435
        %4437 = vrot.lane.b32.xlu0 %v4389, 106
        %v4438 = vpop.permute.xlu0 %4437
        %4439 = vrot.lane.b32.xlu0 %v4386, 106
        %v4440 = vpop.permute.xlu0 %4439
        %4441 = vrot.lane.b32.xlu0 %v4387, 106
        %v4442 = vpop.permute.xlu0 %4441
        %4443 = vrot.lane.b32.xlu0 %v4388, 106
        %v4444 = vpop.permute.xlu0 %4443
        %4445 = vrot.lane.b32.xlu0 %v4390, 106
        %v4446 = vpop.permute.xlu0 %4445
        %v4447 = vsel %vm505, %v4432, %v4434
        %v4448 = vsel %vm505, %v4434, %v4436
        %v4449 = vsel %vm505, %v4436, %v4438
        %v4450 = vsel %vm505, %v4440, %v4442
        %v4451 = vsel %vm505, %v4442, %v4444
        %v4452 = vsel %vm505, %v4444, %v4446
        %4453 = vrot.lane.b32.xlu0 %v4383, 105
        %v4454 = vpop.permute.xlu0 %4453
        %4455 = vrot.lane.b32.xlu0 %v4384, 105
        %v4456 = vpop.permute.xlu0 %4455
        %4457 = vrot.lane.b32.xlu0 %v4385, 105
        %v4458 = vpop.permute.xlu0 %4457
        %4459 = vrot.lane.b32.xlu0 %v4389, 105
        %v4460 = vpop.permute.xlu0 %4459
        %4461 = vrot.lane.b32.xlu0 %v4386, 105
        %v4462 = vpop.permute.xlu0 %4461
        %4463 = vrot.lane.b32.xlu0 %v4387, 105
        %v4464 = vpop.permute.xlu0 %4463
        %4465 = vrot.lane.b32.xlu0 %v4388, 105
        %v4466 = vpop.permute.xlu0 %4465
        %4467 = vrot.lane.b32.xlu0 %v4390, 105
        %v4468 = vpop.permute.xlu0 %4467
        %v4469 = vsel %vm517, %v4454, %v4456
        %v4470 = vsel %vm517, %v4456, %v4458
        %v4471 = vsel %vm517, %v4458, %v4460
        %v4472 = vsel %vm517, %v4462, %v4464
        %v4473 = vsel %vm517, %v4464, %v4466
        %v4474 = vsel %vm517, %v4466, %v4468
        %4475 = vrot.lane.b32.xlu0 %v4383, 104
        %v4476 = vpop.permute.xlu0 %4475
        %4477 = vrot.lane.b32.xlu0 %v4384, 104
        %v4478 = vpop.permute.xlu0 %4477
        %4479 = vrot.lane.b32.xlu0 %v4385, 104
        %v4480 = vpop.permute.xlu0 %4479
        %4481 = vrot.lane.b32.xlu0 %v4389, 104
        %v4482 = vpop.permute.xlu0 %4481
        %4483 = vrot.lane.b32.xlu0 %v4386, 104
        %v4484 = vpop.permute.xlu0 %4483
        %4485 = vrot.lane.b32.xlu0 %v4387, 104
        %v4486 = vpop.permute.xlu0 %4485
        %4487 = vrot.lane.b32.xlu0 %v4388, 104
        %v4488 = vpop.permute.xlu0 %4487
        %4489 = vrot.lane.b32.xlu0 %v4390, 104
        %v4490 = vpop.permute.xlu0 %4489
        %v4491 = vsel %vm529, %v4476, %v4478
        %v4492 = vsel %vm529, %v4478, %v4480
        %v4493 = vsel %vm529, %v4480, %v4482
        %v4494 = vsel %vm529, %v4484, %v4486
        %v4495 = vsel %vm529, %v4486, %v4488
        %v4496 = vsel %vm529, %v4488, %v4490
        %4497 = vrot.lane.b32.xlu0 %v4383, 84
        %v4498 = vpop.permute.xlu0 %4497
        %4499 = vrot.lane.b32.xlu0 %v4384, 84
        %v4500 = vpop.permute.xlu0 %4499
        %4501 = vrot.lane.b32.xlu0 %v4385, 84
        %v4502 = vpop.permute.xlu0 %4501
        %4503 = vrot.lane.b32.xlu0 %v4389, 84
        %v4504 = vpop.permute.xlu0 %4503
        %4505 = vrot.lane.b32.xlu0 %v4386, 84
        %v4506 = vpop.permute.xlu0 %4505
        %4507 = vrot.lane.b32.xlu0 %v4387, 84
        %v4508 = vpop.permute.xlu0 %4507
        %4509 = vrot.lane.b32.xlu0 %v4388, 84
        %v4510 = vpop.permute.xlu0 %4509
        %4511 = vrot.lane.b32.xlu0 %v4390, 84
        %v4512 = vpop.permute.xlu0 %4511
        %v4513 = vsel %vm608, %v4498, %v4500
        %v4514 = vsel %vm608, %v4500, %v4502
        %v4515 = vsel %vm608, %v4502, %v4504
        %v4516 = vsel %vm608, %v4506, %v4508
        %v4517 = vsel %vm608, %v4508, %v4510
        %v4518 = vsel %vm608, %v4510, %v4512
        %4519 = vrot.lane.b32.xlu0 %v4383, 83
        %v4520 = vpop.permute.xlu0 %4519
        %4521 = vrot.lane.b32.xlu0 %v4384, 83
        %v4522 = vpop.permute.xlu0 %4521
        %4523 = vrot.lane.b32.xlu0 %v4385, 83
        %v4524 = vpop.permute.xlu0 %4523
        %4525 = vrot.lane.b32.xlu0 %v4389, 83
        %v4526 = vpop.permute.xlu0 %4525
        %4527 = vrot.lane.b32.xlu0 %v4386, 83
        %v4528 = vpop.permute.xlu0 %4527
        %4529 = vrot.lane.b32.xlu0 %v4387, 83
        %v4530 = vpop.permute.xlu0 %4529
        %4531 = vrot.lane.b32.xlu0 %v4388, 83
        %v4532 = vpop.permute.xlu0 %4531
        %4533 = vrot.lane.b32.xlu0 %v4390, 83
        %v4534 = vpop.permute.xlu0 %4533
        %v4535 = vsel %vm623, %v4520, %v4522
        %v4536 = vsel %vm623, %v4522, %v4524
        %v4537 = vsel %vm623, %v4524, %v4526
        %v4538 = vsel %vm623, %v4528, %v4530
        %v4539 = vsel %vm623, %v4530, %v4532
        %v4540 = vsel %vm623, %v4532, %v4534
        %4541 = vrot.lane.b32.xlu0 %v4383, 82
        %v4542 = vpop.permute.xlu0 %4541
        %4543 = vrot.lane.b32.xlu0 %v4384, 82
        %v4544 = vpop.permute.xlu0 %4543
        %4545 = vrot.lane.b32.xlu0 %v4385, 82
        %v4546 = vpop.permute.xlu0 %4545
        %4547 = vrot.lane.b32.xlu0 %v4389, 82
        %v4548 = vpop.permute.xlu0 %4547
        %4549 = vrot.lane.b32.xlu0 %v4386, 82
        %v4550 = vpop.permute.xlu0 %4549
        %4551 = vrot.lane.b32.xlu0 %v4387, 82
        %v4552 = vpop.permute.xlu0 %4551
        %4553 = vrot.lane.b32.xlu0 %v4388, 82
        %v4554 = vpop.permute.xlu0 %4553
        %4555 = vrot.lane.b32.xlu0 %v4390, 82
        %v4556 = vpop.permute.xlu0 %4555
        %v4557 = vsel %vm1290, %v4542, %v4544
        %v4558 = vsel %vm1290, %v4544, %v4546
        %v4559 = vsel %vm1290, %v4546, %v4548
        %v4560 = vsel %vm1290, %v4550, %v4552
        %v4561 = vsel %vm1290, %v4552, %v4554
        %v4562 = vsel %vm1290, %v4554, %v4556
        %v4563 = vld [vmem:[%s326] sm:$0xff]
        %v4564 = vld [vmem:[%s326 + $0x8] sm:$0xff]
        %v4565 = vld [vmem:[%s326 + $0x10] sm:$0xff]
        %v4566 = vld [vmem:[%s326 + $0x18] sm:$0xff]
        %4567 = vrot.lane.b32.xlu0 %v4383, 107
        %v4568 = vpop.permute.xlu0 %4567
        %4569 = vrot.lane.b32.xlu0 %v4384, 107
        %v4570 = vpop.permute.xlu0 %4569
        %4571 = vrot.lane.b32.xlu0 %v4385, 107
        %v4572 = vpop.permute.xlu0 %4571
        %4573 = vrot.lane.b32.xlu0 %v4386, 107
        %v4574 = vpop.permute.xlu0 %4573
        %4575 = vrot.lane.b32.xlu0 %v4387, 107
        %v4576 = vpop.permute.xlu0 %4575
        %4577 = vrot.lane.b32.xlu0 %v4388, 107
        %v4578 = vpop.permute.xlu0 %4577
        %4579 = vrot.lane.b32.xlu0 %v4409, 107
        %v4580 = vpop.permute.xlu0 %4579
        %4581 = vrot.lane.b32.xlu0 %v4410, 107
        %v4582 = vpop.permute.xlu0 %4581
        %4583 = vrot.lane.b32.xlu0 %v4402, 107
        %v4584 = vpop.permute.xlu0 %4583
        %4585 = vrot.lane.b32.xlu0 %v4411, 107
        %v4586 = vpop.permute.xlu0 %4585
        %4587 = vrot.lane.b32.xlu0 %v4412, 107
        %v4588 = vpop.permute.xlu0 %4587
        %4589 = vrot.lane.b32.xlu0 %v4408, 107
        %v4590 = vpop.permute.xlu0 %4589
        %4591 = vrot.lane.b32.xlu0 %v4425, 107
        %v4592 = vpop.permute.xlu0 %4591
        %4593 = vrot.lane.b32.xlu0 %v4426, 107
        %v4594 = vpop.permute.xlu0 %4593
        %4595 = vrot.lane.b32.xlu0 %v4418, 107
        %v4596 = vpop.permute.xlu0 %4595
        %4597 = vrot.lane.b32.xlu0 %v4427, 107
        %v4598 = vpop.permute.xlu0 %4597
        %4599 = vrot.lane.b32.xlu0 %v4428, 107
        %v4600 = vpop.permute.xlu0 %4599
        %4601 = vrot.lane.b32.xlu0 %v4424, 107
        %v4602 = vpop.permute.xlu0 %4601
        %4603 = vrot.lane.b32.xlu0 %v4447, 107
        %v4604 = vpop.permute.xlu0 %4603
        %4605 = vrot.lane.b32.xlu0 %v4448, 107
        %v4606 = vpop.permute.xlu0 %4605
        %4607 = vrot.lane.b32.xlu0 %v4449, 107
        %v4608 = vpop.permute.xlu0 %4607
        %4609 = vrot.lane.b32.xlu0 %v4450, 107
        %v4610 = vpop.permute.xlu0 %4609
        %4611 = vrot.lane.b32.xlu0 %v4451, 107
        %v4612 = vpop.permute.xlu0 %4611
        %4613 = vrot.lane.b32.xlu0 %v4452, 107
        %v4614 = vpop.permute.xlu0 %4613
        %4615 = vrot.lane.b32.xlu0 %v4469, 107
        %v4616 = vpop.permute.xlu0 %4615
        %4617 = vrot.lane.b32.xlu0 %v4470, 107
        %v4618 = vpop.permute.xlu0 %4617
        %4619 = vrot.lane.b32.xlu0 %v4471, 107
        %v4620 = vpop.permute.xlu0 %4619
        %4621 = vrot.lane.b32.xlu0 %v4472, 107
        %v4622 = vpop.permute.xlu0 %4621
        %4623 = vrot.lane.b32.xlu0 %v4473, 107
        %v4624 = vpop.permute.xlu0 %4623
        %4625 = vrot.lane.b32.xlu0 %v4474, 107
        %v4626 = vpop.permute.xlu0 %4625
        %4627 = vrot.lane.b32.xlu0 %v4491, 107
        %v4628 = vpop.permute.xlu0 %4627
        %4629 = vrot.lane.b32.xlu0 %v4492, 107
        %v4630 = vpop.permute.xlu0 %4629
        %4631 = vrot.lane.b32.xlu0 %v4493, 107
        %v4632 = vpop.permute.xlu0 %4631
        %4633 = vrot.lane.b32.xlu0 %v4494, 107
        %v4634 = vpop.permute.xlu0 %4633
        %4635 = vrot.lane.b32.xlu0 %v4495, 107
        %v4636 = vpop.permute.xlu0 %4635
        %4637 = vrot.lane.b32.xlu0 %v4496, 107
        %v4638 = vpop.permute.xlu0 %4637
        %4639 = vrot.lane.b32.xlu0 %v4513, 107
        %v4640 = vpop.permute.xlu0 %4639
        %4641 = vrot.lane.b32.xlu0 %v4514, 107
        %v4642 = vpop.permute.xlu0 %4641
        %4643 = vrot.lane.b32.xlu0 %v4515, 107
        %v4644 = vpop.permute.xlu0 %4643
        %4645 = vrot.lane.b32.xlu0 %v4516, 107
        %v4646 = vpop.permute.xlu0 %4645
        %4647 = vrot.lane.b32.xlu0 %v4517, 107
        %v4648 = vpop.permute.xlu0 %4647
        %4649 = vrot.lane.b32.xlu0 %v4518, 107
        %v4650 = vpop.permute.xlu0 %4649
        %4651 = vrot.lane.b32.xlu0 %v4535, 107
        %v4652 = vpop.permute.xlu0 %4651
        %4653 = vrot.lane.b32.xlu0 %v4536, 107
        %v4654 = vpop.permute.xlu0 %4653
        %4655 = vrot.lane.b32.xlu0 %v4537, 107
        %v4656 = vpop.permute.xlu0 %4655
        %4657 = vrot.lane.b32.xlu0 %v4538, 107
        %v4658 = vpop.permute.xlu0 %4657
        %4659 = vrot.lane.b32.xlu0 %v4539, 107
        %v4660 = vpop.permute.xlu0 %4659
        %4661 = vrot.lane.b32.xlu0 %v4540, 107
        %v4662 = vpop.permute.xlu0 %4661
        %4663 = vrot.lane.b32.xlu0 %v4557, 107
        %v4664 = vpop.permute.xlu0 %4663
        %4665 = vrot.lane.b32.xlu0 %v4558, 107
        %v4666 = vpop.permute.xlu0 %4665
        %4667 = vrot.lane.b32.xlu0 %v4559, 107
        %v4668 = vpop.permute.xlu0 %4667
        %4669 = vrot.lane.b32.xlu0 %v4560, 107
        %v4670 = vpop.permute.xlu0 %4669
        %4671 = vrot.lane.b32.xlu0 %v4561, 107
        %v4672 = vpop.permute.xlu0 %4671
        %4673 = vrot.lane.b32.xlu0 %v4562, 107
        %v4674 = vpop.permute.xlu0 %4673
        %v4675 = vsel %vm767, %v4568, %v4570
        %v4676 = vsel %vm767, %v4570, %v4572
        %v4677 = vsel %vm767, %v4574, %v4576
        %v4678 = vsel %vm767, %v4576, %v4578
        %v4679 = vsel %vm767, %v4580, %v4582
        %v4680 = vsel %vm767, %v4582, %v4584
        %v4681 = vsel %vm767, %v4586, %v4588
        %v4682 = vsel %vm767, %v4588, %v4590
        %v4683 = vsel %vm767, %v4592, %v4594
        %v4684 = vsel %vm767, %v4594, %v4596
        %v4685 = vsel %vm767, %v4598, %v4600
        %v4686 = vsel %vm767, %v4600, %v4602
        %v4687 = vsel %vm767, %v4604, %v4606
        %v4688 = vsel %vm767, %v4606, %v4608
        %v4689 = vsel %vm767, %v4610, %v4612
        %v4690 = vsel %vm767, %v4612, %v4614
        %v4691 = vsel %vm767, %v4616, %v4618
        %v4692 = vsel %vm767, %v4618, %v4620
        %v4693 = vsel %vm767, %v4622, %v4624
        %v4694 = vsel %vm767, %v4624, %v4626
        %v4695 = vsel %vm767, %v4628, %v4630
        %v4696 = vsel %vm767, %v4630, %v4632
        %v4697 = vsel %vm767, %v4634, %v4636
        %v4698 = vsel %vm767, %v4636, %v4638
        %v4699 = vsel %vm767, %v4640, %v4642
        %v4700 = vsel %vm767, %v4642, %v4644
        %v4701 = vsel %vm767, %v4646, %v4648
        %v4702 = vsel %vm767, %v4648, %v4650
        %v4703 = vsel %vm767, %v4652, %v4654
        %v4704 = vsel %vm767, %v4654, %v4656
        %v4705 = vsel %vm767, %v4658, %v4660
        %v4706 = vsel %vm767, %v4660, %v4662
        %v4707 = vsel %vm767, %v4664, %v4666
        %v4708 = vsel %vm767, %v4666, %v4668
        %v4709 = vsel %vm767, %v4670, %v4672
        %v4710 = vsel %vm767, %v4672, %v4674
        %vm4765 = vcmask 130048
        %v4767 = vsel %vm4765, %v4564, 0
        %v4770 = vsel %vm4765, %v4566, 0
        %4772 = vmatprep.subr.mxu0 %v4706
        %4773 = vmatpush1.msra.mxu0 %v4705
        %4774 = vmatprep.subr.mxu0 %v4704
        %4775 = vmatpush1.msra.mxu0 %v4703
        %4776 = vmatprep.subr.mxu0 %v4702
        %4777 = vmatpush1.msra.mxu0 %v4701
        %4778 = vmatprep.subr.mxu0 %v4700
        %4779 = vmatpush1.msra.mxu0 %v4699
        %4780 = vmatprep.subr.mxu0 %v4698
        %4781 = vmatpush1.msra.mxu0 %v4697
        %4782 = vmatprep.subr.mxu0 %v4696
        %4783 = vmatpush1.msra.mxu0 %v4695
        %4784 = vmatprep.subr.mxu0 %v4694
        %4785 = vmatpush1.msra.mxu0 %v4693
        %4786 = vmatprep.subr.mxu0 %v4692
        %4787 = vmatpush1.msra.mxu0 %v4691
        %4788 = vmatprep.subr.mxu0 %v4690
        %4789 = vmatpush1.msra.mxu0 %v4689
        %4790 = vmatprep.subr.mxu0 %v4688
        %4791 = vmatpush1.msra.mxu0 %v4687
        %4792 = vmatprep.subr.mxu0 %v4686
        %4793 = vmatpush1.msra.mxu0 %v4685
        %4794 = vmatprep.subr.mxu0 %v4684
        %4795 = vmatpush1.msra.mxu0 %v4683
        %4796 = vmatprep.subr.mxu0 %v4682
        %4797 = vmatpush1.msra.mxu0 %v4681
        %4798 = vmatprep.subr.mxu0 %v4680
        %4799 = vmatpush1.msra.mxu0 %v4679
        %4800 = vmatprep.subr.mxu0 %v4678
        %4801 = vmatpush1.msra.mxu0 %v4677
        %4802 = vmatprep.subr.mxu0 %v4676
        %4803 = vmatpush1.msra.mxu0 %v4675
        %4804 = vmatprep.subr.mxu0 0.0
        %4805 = vmatpush2.msra.mxu0 0.0
        %4806 = vmatprep.subr.mxu0 0.0
        %4807 = vmatpush2.msra.mxu0 0.0
        %4808 = vmatprep.subr.mxu0 0.0
        %4809 = vmatpush2.msra.mxu0 0.0
        %4810 = vmatprep.subr.mxu0 0.0
        %4811 = vmatpush2.msra.mxu0 0.0
        %4812 = vmatprep.subr.mxu0 0.0
        %4813 = vmatpush2.msra.mxu0 0.0
        %4814 = vmatprep.subr.mxu0 0.0
        %4815 = vmatpush2.msra.mxu0 0.0
        %4816 = vmatprep.subr.mxu0 0.0
        %4817 = vmatpush2.msra.mxu0 0.0
        %4818 = vmatprep.subr.mxu0 0.0
        %4819 = vmatpush2.msra.mxu0 0.0
        %4820 = vmatprep.subr.mxu0 0.0
        %4821 = vmatpush2.msra.mxu0 0.0
        %4822 = vmatprep.subr.mxu0 0.0
        %4823 = vmatpush2.msra.mxu0 0.0
        %4824 = vmatprep.subr.mxu0 0.0
        %4825 = vmatpush2.msra.mxu0 0.0
        %4826 = vmatprep.subr.mxu0 0.0
        %4827 = vmatpush2.msra.mxu0 0.0
        %4828 = vmatprep.subr.mxu0 0.0
        %4829 = vmatpush2.msra.mxu0 0.0
        %4830 = vmatprep.subr.mxu0 0.0
        %4831 = vmatpush2.msra.mxu0 0.0
        %4832 = vmatprep.subr.mxu0 %v4710
        %4833 = vmatpush2.msra.mxu0 %v4709
        %4834 = vmatprep.subr.mxu0 %v4708
        %4835 = vmatpush2.msra.mxu0 %v4707
        %4836 = vmatprep.mubr.f32.mxu0 %v4767
        %4837 = vmatmul.mubr.f32.gmra.mxu0 %v4563
        %v4838 = vpop.f32.mrf.mxu0
        %v4839 = vadd.f32 0.0, %v4838
        %v4840 = vpop.f32.mrf.mxu0
        %v4841 = vadd.f32 0.0, %v4840
        %4842 = vmatprep.mubr.f32.mxu0 %v4770
        %4843 = vmatmul.mubr.f32.gmra.mxu0 %v4565
        %v4844 = vpop.f32.mrf.mxu0
        %v4845 = vadd.f32 0.0, %v4844
        %v4846 = vpop.f32.mrf.mxu0
        %v4847 = vadd.f32 0.0, %v4846
        %4848 = vdwg.mxu0
        %4849 = vmatprep.subr.mxu0 0.0
        %4850 = vmatpush1.msra.mxu0 %v4662
        %4851 = vmatprep.subr.mxu0 0.0
        %4852 = vmatpush1.msra.mxu0 %v4656
        %4853 = vmatprep.subr.mxu0 0.0
        %4854 = vmatpush1.msra.mxu0 %v4650
        %4855 = vmatprep.subr.mxu0 0.0
        %4856 = vmatpush1.msra.mxu0 %v4644
        %4857 = vmatprep.subr.mxu0 0.0
        %4858 = vmatpush1.msra.mxu0 %v4638
        %4859 = vmatprep.subr.mxu0 0.0
        %4860 = vmatpush1.msra.mxu0 %v4632
        %4861 = vmatprep.subr.mxu0 0.0
        %4862 = vmatpush1.msra.mxu0 %v4626
        %4863 = vmatprep.subr.mxu0 0.0
        %4864 = vmatpush1.msra.mxu0 %v4620
        %4865 = vmatprep.subr.mxu0 0.0
        %4866 = vmatpush1.msra.mxu0 %v4614
        %4867 = vmatprep.subr.mxu0 0.0
        %4868 = vmatpush1.msra.mxu0 %v4608
        %4869 = vmatprep.subr.mxu0 0.0
        %4870 = vmatpush1.msra.mxu0 %v4602
        %4871 = vmatprep.subr.mxu0 0.0
        %4872 = vmatpush1.msra.mxu0 %v4596
        %4873 = vmatprep.subr.mxu0 0.0
        %4874 = vmatpush1.msra.mxu0 %v4590
        %4875 = vmatprep.subr.mxu0 0.0
        %4876 = vmatpush1.msra.mxu0 %v4584
        %4877 = vmatprep.subr.mxu0 0.0
        %4878 = vmatpush1.msra.mxu0 %v4578
        %4879 = vmatprep.subr.mxu0 0.0
        %4880 = vmatpush1.msra.mxu0 %v4572
        %4881 = vmatprep.subr.mxu0 0.0
        %4882 = vmatpush2.msra.mxu0 0.0
        %4883 = vmatprep.subr.mxu0 0.0
        %4884 = vmatpush2.msra.mxu0 0.0
        %4885 = vmatprep.subr.mxu0 0.0
        %4886 = vmatpush2.msra.mxu0 0.0
        %4887 = vmatprep.subr.mxu0 0.0
        %4888 = vmatpush2.msra.mxu0 0.0
        %4889 = vmatprep.subr.mxu0 0.0
        %4890 = vmatpush2.msra.mxu0 0.0
        %4891 = vmatprep.subr.mxu0 0.0
        %4892 = vmatpush2.msra.mxu0 0.0
        %4893 = vmatprep.subr.mxu0 0.0
        %4894 = vmatpush2.msra.mxu0 0.0
        %4895 = vmatprep.subr.mxu0 0.0
        %4896 = vmatpush2.msra.mxu0 0.0
        %4897 = vmatprep.subr.mxu0 0.0
        %4898 = vmatpush2.msra.mxu0 0.0
        %4899 = vmatprep.subr.mxu0 0.0
        %4900 = vmatpush2.msra.mxu0 0.0
        %4901 = vmatprep.subr.mxu0 0.0
        %4902 = vmatpush2.msra.mxu0 0.0
        %4903 = vmatprep.subr.mxu0 0.0
        %4904 = vmatpush2.msra.mxu0 0.0
        %4905 = vmatprep.subr.mxu0 0.0
        %4906 = vmatpush2.msra.mxu0 0.0
        %4907 = vmatprep.subr.mxu0 0.0
        %4908 = vmatpush2.msra.mxu0 0.0
        %4909 = vmatprep.subr.mxu0 0.0
        %4910 = vmatpush2.msra.mxu0 %v4674
        %4911 = vmatprep.subr.mxu0 0.0
        %4912 = vmatpush2.msra.mxu0 %v4668
        %4913 = vmatprep.mubr.f32.mxu0 %v4767
        %4914 = vmatmul.mubr.f32.gmra.mxu0 %v4563
        %v4915 = vpop.f32.mrf.mxu0
        %v4916 = vadd.f32 0.0, %v4915
        %v4917 = vpop.f32.mrf.mxu0
        %4918 = vmatprep.mubr.f32.mxu0 %v4770
        %4919 = vmatmul.mubr.f32.gmra.mxu0 %v4565
        %v4920 = vpop.f32.mrf.mxu0
        %v4921 = vadd.f32 0.0, %v4920
        %v4922 = vpop.f32.mrf.mxu0
        %4923 = vdwg.mxu0
        %v4924 = vld [vmem:[%s392] sm:$0xff]
        %v4925 = vld [vmem:[%s392 + $0x8] sm:$0xff]
        %4927 = vset.pattern.permute.xlu0 0
        %4928 = vperm.xlu0 %4927, %v4924
        %v4929 = vpop.permute.xlu0 %4928
        %4932 = vset.pattern.permute.xlu0 0
        %4933 = vperm.xlu0 %4932, %v4925
        %v4934 = vpop.permute.xlu0 %4933
        %v4936 = vmul.f32 %v4839, %v4929
        %v4937 = vmul.f32 %v4841, %v4929
        %v4938 = vmul.f32 %v4916, %v4929
        %v4939 = vmul.f32 %v4845, %v4934
        %v4940 = vmul.f32 %v4847, %v4934
        %v4941 = vmul.f32 %v4921, %v4934
        %v4942 = vld [vmem:[%s397] sm:$0xff]
        %v4943 = vld [vmem:[%s397 + $0x8] sm:$0xff]
        %4945 = vset.pattern.permute.xlu0 0
        %4946 = vperm.xlu0 %4945, %v4942
        %v4947 = vpop.permute.xlu0 %4946
        %4950 = vset.pattern.permute.xlu0 0
        %4951 = vperm.xlu0 %4950, %v4943
        %v4952 = vpop.permute.xlu0 %4951
        %v4954 = vadd.f32 %v4936, %v4947
        %v4955 = vadd.f32 %v4937, %v4947
        %v4956 = vadd.f32 %v4938, %v4947
        %v4957 = vadd.f32 %v4939, %v4952
        %v4958 = vadd.f32 %v4940, %v4952
        %v4959 = vadd.f32 %v4941, %v4952
        %v4960 = vmax.f32 %v4954, 0.0
        %v4961 = vmax.f32 %v4955, 0.0
        %v4962 = vmax.f32 %v4956, 0.0
        %v4963 = vmax.f32 %v4957, 0.0
        %v4964 = vmax.f32 %v4958, 0.0
        %v4965 = vmax.f32 %v4959, 0.0
        %4966 = vst [vmem:[%s378] sm:$0xff] %v4960
        %4967 = vst [vmem:[%s378 + $0x8] sm:$0xff] %v4961
        %vm4968 = vcmask 785408
        %4969 = vst.msk [vmem:[%s378 + $0x10] sm:$0xff] %vm4968, %v4962
        %4970 = vst [vmem:[%s378 + $0x18] sm:$0xff] %v4963
        %4971 = vst [vmem:[%s378 + $0x20] sm:$0xff] %v4964
        %4972 = vst.msk [vmem:[%s378 + $0x28] sm:$0xff] %vm4968, %v4965
        %s4973 = sand.u32 %s201, 1
        %s4974 = scalar_lea.sflag [#allocation5], %s4973
        %s4975 = sand.u32 %s201, 1
        %s4976 = smul.addr %s4975, 48
        %s4977 = scalar_lea.vmem [#allocation8], %s4976
        // Predicated region
        $region53: #{tpu_custom_call.1} parent=43 // pred_check
          %p4978 = pneg %p211
        $region54: #{tpu_custom_call.1} parent=43 // pred_check_branch
          %4980 = sbr.rel (%p4978) target = $region56
        $region55: #{tpu_custom_call.1} parent=43 // pred_region
          %s4982 = ssub.s32 768, 768
          %4983 = vsyncadd %s4974, %s4982
          %s4984 = smul.addr %s30, 6
          %s4985 = smul.addr %s31, 12
          %s4986 = sadd.s32 %s4984, %s4985
          %s4987 = smul.addr %s4986, 128
          %s4988 = scalar_lea.hbm %s6, %s4987
          %s4989 = sshll.u32 %s4977, 4
          %s4990 = int_to_ptr.vmem [resolvable:$true] %s4989
          %4995 = dma.vmem_to_hbm [thread:$0]  %s4990, 768, %s4988, %s4974, 384, 384, 24
        $region56: #{tpu_custom_call.1} parent=43 // pred_fallthru
          _
      $region44: #{tpu_custom_call.1} parent=5 // pred_fallthru
        _
      %p4996 = scmp.le.s32.totalorder 2, %s21
      // Predicated region
      $region57: #{tpu_custom_call.1} parent=5 // pred_check
        %p4997 = pneg %p4996
      $region58: #{tpu_custom_call.1} parent=5 // pred_check_branch
        %4999 = sbr.rel (%p4997) target = $region60
      $region59: #{tpu_custom_call.1} parent=5 // pred_region
        %s5000 = ssub.s32 %s21, 2
        // Predicated region
        $region61: #{tpu_custom_call.1} parent=59 // pred_check
          %p5001 = pneg %p217
        $region62: #{tpu_custom_call.1} parent=59 // pred_check_branch
          %5003 = sbr.rel (%p5001) target = $region64
        $region63: #{tpu_custom_call.1} parent=59 // pred_region
          %s5004 = sand.u32 %s202, 1
          %s5005 = scalar_lea.sflag [#allocation5], %s5004
          %s5006 = sand.u32 %s202, 1
          %s5007 = smul.addr %s5006, 48
          %s5008 = scalar_lea.vmem [#allocation8], %s5007
          %5009 = dma.done %s5005, 768
        $region64: #{tpu_custom_call.1} parent=59 // pred_fallthru
          _
      $region60: #{tpu_custom_call.1} parent=5 // pred_fallthru
        _
    $region6: #{tpu_custom_call.1} parent=1 // loop_footer
      %s25 = sadd.s32 1, %s21
    $region7: #{tpu_custom_call.1} parent=1 // loop_footer_branch
      %20 = sbr.rel target = $region3
    $region8: #{tpu_custom_call.1} parent=1 // loop_exit
      _
    %5010 = vsyncpa [#allocation4], 1
    %s5011 = scalar_lea.sflag [#allocation4], 1
    %5012 = vsyncpa %s5011, 1
    %5013 = vsyncpa [#allocation7], 1
    %s5014 = scalar_lea.sflag [#allocation7], 1
    %5015 = vsyncpa %s5014, 1
    %5016 = vsyncpa [#allocation5], 1
    %s5017 = scalar_lea.sflag [#allocation5], 1
    %5018 = vsyncpa %s5017, 1

</llo_original>
